<compile_context>
chip_gen: v7x
topology: tpu7x:2x2x1
jax: 0.10.0
libtpu: 0.0.40
codegen_flags: <defaults>
</compile_context>

<pallas_src>
import jax
import jax.numpy as jnp
from jax.experimental import pallas as pl
from jax.experimental.pallas import tpu as pltpu

F32 = jnp.float32
BF16 = jnp.bfloat16


def rup(x, m):
    return (x + m - 1) // m * m


# ----------------------------------------------------------------------------
# Pallas kernels
# ----------------------------------------------------------------------------
def _conv_matmul_kernel(a_ref, b_ref, o_ref, acc_ref):
    """Tap-accumulating MXU matmul.  grid = (Mi, Nj, T, Kk); T,K are reductions."""
    t = pl.program_id(2)
    k = pl.program_id(3)

    @pl.when(jnp.logical_and(t == 0, k == 0))
    def _():
        acc_ref[...] = jnp.zeros_like(acc_ref)

    acc_ref[...] += jnp.dot(a_ref[0], b_ref[0],
                            preferred_element_type=jnp.float32)

    @pl.when(jnp.logical_and(t == pl.num_programs(2) - 1,
                             k == pl.num_programs(3) - 1))
    def _():
        o_ref[...] = acc_ref[...]


def conv_matmul_pallas(A, Bp, Cout):
    """A: (T, M, K) float taps; Bp: (T, Kp, Np) bf16 pre-padded weights -> (M, Cout) f32."""
    T, M, K = A.shape
    Tb, Kp, Np = Bp.shape
    assert Tb == T and Kp >= K and Kp % 128 == 0 and Np % 128 == 0

    TM = 256 if M >= 256 else rup(M, 16)      # bf16 sublane pack = 16
    Mp = rup(M, TM)
    TK = 128
    TN = 256 if Np % 256 == 0 else 128

    Ap = jnp.zeros((T, Mp, Kp), BF16).at[:, :M, :K].set(A.astype(BF16))

    out = pl.pallas_call(
        _conv_matmul_kernel,
        out_shape=jax.ShapeDtypeStruct((Mp, Np), F32),
        grid_spec=pltpu.PrefetchScalarGridSpec(
            num_scalar_prefetch=0,
            grid=(Mp // TM, Np // TN, T, Kp // TK),
            in_specs=[pl.BlockSpec((1, TM, TK), lambda i, j, t, k: (t, i, k)),
                      pl.BlockSpec((1, TK, TN), lambda i, j, t, k: (t, k, j))],
            out_specs=pl.BlockSpec((TM, TN), lambda i, j, t, k: (i, j)),
            scratch_shapes=[pltpu.VMEM((TM, TN), jnp.float32)]),
        compiler_params=pltpu.CompilerParams(
            dimension_semantics=("parallel", "parallel", "arbitrary", "arbitrary")),
    )(Ap, Bp)
    return out[:M, :Cout]


def _dw_mac_kernel(t_ref, w_ref, o_ref):
    """Depthwise conv: per-tap elementwise MAC on the VPU. t_ref:(T,TM,Cp), w_ref:(T,1,Cp)."""
    T = t_ref.shape[0]
    acc = t_ref[0] * w_ref[0]
    for i in range(1, T):
        acc = acc + t_ref[i] * w_ref[i]
    o_ref[...] = acc


def _make_tap_reduce_kernel(op):
    def kernel(t_ref, o_ref):
        T = t_ref.shape[0]
        acc = t_ref[0]
        for i in range(1, T):
            acc = jnp.maximum(acc, t_ref[i]) if op == "max" else acc + t_ref[i]
        o_ref[...] = acc
    return kernel


def _make_bn_kernel(fuse_relu):
    def kernel(x_ref, s_ref, b_ref, o_ref):
        y = x_ref[...] * s_ref[...] + b_ref[...]
        if fuse_relu:
            y = jnp.maximum(y, 0.0)
        o_ref[...] = y
    return kernel


def _rowwise_3d_call(kernel, stacked, n_extra_inputs=(), TM_cap=256):
    """Run a (T, Mp, Cp) -> (Mp, Cp) kernel with a grid over the row axis."""
    T, Mp_in, Cp = stacked.shape
    TM = TM_cap if Mp_in >= TM_cap else rup(Mp_in, 8)
    Mp = rup(Mp_in, TM)
    if Mp != Mp_in:
        stacked = jnp.zeros((T, Mp, Cp), stacked.dtype).at[:, :Mp_in, :].set(stacked)
    in_specs = [pl.BlockSpec((T, TM, Cp), lambda m: (0, m, 0))]
    args = [stacked]
    for extra in n_extra_inputs:
        in_specs.append(pl.BlockSpec(extra.shape, lambda m: (0,) * extra.ndim))
        args.append(extra)
    out = pl.pallas_call(
        kernel,
        out_shape=jax.ShapeDtypeStruct((Mp, Cp), F32),
        grid_spec=pltpu.PrefetchScalarGridSpec(
            num_scalar_prefetch=0,
            grid=(Mp // TM,),
            in_specs=in_specs,
            out_specs=pl.BlockSpec((TM, Cp), lambda m: (m, 0))),
        compiler_params=pltpu.CompilerParams(dimension_semantics=("parallel",)),
    )(*args)
    return out


def scale_shift_pallas(x, scale, shift, fuse_relu=False):
    """x: (N,H,W,C); y = x*scale + shift (+ optional fused ReLU), tiled over rows."""
    N, H, W, C = x.shape
    M = N * H * W
    Cp = rup(C, 128)
    TM = 512 if M >= 512 else rup(M, 8)
    Mp = rup(M, TM)
    x2 = jnp.zeros((Mp, Cp), F32).at[:M, :C].set(x.reshape(M, C).astype(F32))
    s2 = jnp.zeros((1, Cp), F32).at[:, :C].set(scale.reshape(1, C).astype(F32))
    b2 = jnp.zeros((1, Cp), F32).at[:, :C].set(shift.reshape(1, C).astype(F32))
    out = pl.pallas_call(
        _make_bn_kernel(fuse_relu),
        out_shape=jax.ShapeDtypeStruct((Mp, Cp), F32),
        grid_spec=pltpu.PrefetchScalarGridSpec(
            num_scalar_prefetch=0,
            grid=(Mp // TM,),
            in_specs=[pl.BlockSpec((TM, Cp), lambda m: (m, 0)),
                      pl.BlockSpec((1, Cp), lambda m: (0, 0)),
                      pl.BlockSpec((1, Cp), lambda m: (0, 0))],
            out_specs=pl.BlockSpec((TM, Cp), lambda m: (m, 0))),
        compiler_params=pltpu.CompilerParams(dimension_semantics=("parallel",)),
    )(x2, s2, b2)
    return out[:M, :C].reshape(N, H, W, C)


# ----------------------------------------------------------------------------
# Conv / pool / BN building blocks (glue + Pallas)
# ----------------------------------------------------------------------------
def _extract_patches(xp, KH, KW, stride, dilation, Ho, Wo):
    """xp: padded (N,Hp,Wp,C) -> list of (N,Ho,Wo,C) tap slices, tap-major order."""
    taps = []
    for kh in range(KH):
        for kw in range(KW):
            h0 = kh * dilation
            w0 = kw * dilation
            sl = xp[:, h0:h0 + (Ho - 1) * stride + 1:stride,
                       w0:w0 + (Wo - 1) * stride + 1:stride, :]
            taps.append(sl)
    return taps


def prep_conv_weight(w):
    """w: (KH,KW,Cin,Cout) -> pre-padded bf16 (T, Kp, Np) plus metadata."""
    KH, KW, Cin, Cout = w.shape
    T = KH * KW
    Kp, Np = rup(Cin, 128), rup(Cout, 128)
    wp = jnp.zeros((T, Kp, Np), BF16).at[:, :Cin, :Cout].set(
        w.reshape(T, Cin, Cout).astype(BF16))
    return (wp, KH, KW, Cin, Cout)


def prep_dw_weight(w_dw):
    """w_dw: (KH,KW,C) depthwise weights -> f32 (T, 1, Cp) plus metadata."""
    KH, KW, C = w_dw.shape
    T = KH * KW
    Cp = rup(C, 128)
    wp = jnp.zeros((T, 1, Cp), F32).at[:, 0, :C].set(w_dw.reshape(T, C).astype(F32))
    return (wp, KH, KW, C)


def conv2d_pallas(x, wprep, stride=1, padding=0, dilation=1):
    """Dense conv via tap-stacked im2col + tap-accumulating Pallas MXU matmul."""
    wp, KH, KW, Cin, Cout = wprep
    N, H, W, Cx = x.shape
    assert Cx == Cin
    Ho = (H + 2 * padding - dilation * (KH - 1) - 1) // stride + 1
    Wo = (W + 2 * padding - dilation * (KW - 1) - 1) // stride + 1
    xp = jnp.pad(x, ((0, 0), (padding, padding), (padding, padding), (0, 0)))
    taps = _extract_patches(xp, KH, KW, stride, dilation, Ho, Wo)
    M = N * Ho * Wo
    A = jnp.stack([t.reshape(M, Cin) for t in taps], axis=0)   # (T, M, Cin)
    out = conv_matmul_pallas(A, wp, Cout)
    return out.reshape(N, Ho, Wo, Cout)


def depthwise_conv_pallas(x, wprep, stride=1, padding=0, dilation=1):
    """Depthwise (groups=C) conv as a VPU tap multiply-accumulate Pallas kernel."""
    wp, KH, KW, C = wprep
    N, H, W, Cx = x.shape
    assert Cx == C
    Ho = (H + 2 * padding - dilation * (KH - 1) - 1) // stride + 1
    Wo = (W + 2 * padding - dilation * (KW - 1) - 1) // stride + 1
    xp = jnp.pad(x, ((0, 0), (padding, padding), (padding, padding), (0, 0)))
    taps = _extract_patches(xp, KH, KW, stride, dilation, Ho, Wo)
    M = N * Ho * Wo
    T = KH * KW
    Cp = wp.shape[2]
    stacked = jnp.zeros((T, rup(M, 8), Cp), F32).at[:, :M, :C].set(
        jnp.stack([t.reshape(M, C) for t in taps], axis=0).astype(F32))
    out = _rowwise_3d_call(_dw_mac_kernel, stacked, n_extra_inputs=(wp,), TM_cap=256)
    return out[:M, :C].reshape(N, Ho, Wo, C)


def tap_reduce_pallas(taps, op, M, C):
    """taps: list of (N,Ho,Wo,C) -> (M, C), reducing (max or sum) over taps."""
    T = len(taps)
    Cp = rup(C, 128)
    stacked = jnp.zeros((T, rup(M, 8), Cp), F32).at[:, :M, :C].set(
        jnp.stack([t.reshape(M, C) for t in taps], axis=0).astype(F32))
    out = _rowwise_3d_call(_make_tap_reduce_kernel(op), stacked, TM_cap=256)
    return out[:M, :C]


def max_pool_3x3(x, stride):
    N, H, W, C = x.shape
    Ho = (H + 2 - 3) // stride + 1
    Wo = (W + 2 - 3) // stride + 1
    xp = jnp.pad(x, ((0, 0), (1, 1), (1, 1), (0, 0)), constant_values=-jnp.inf)
    taps = _extract_patches(xp, 3, 3, stride, 1, Ho, Wo)
    out = tap_reduce_pallas(taps, "max", N * Ho * Wo, C)
    return out.reshape(N, Ho, Wo, C)


def avg_pool_3x3(x, stride):
    # matches nn.AvgPool2d(3, stride, padding=1, count_include_pad=False)
    N, H, W, C = x.shape
    Ho = (H + 2 - 3) // stride + 1
    Wo = (W + 2 - 3) // stride + 1
    xp = jnp.pad(x, ((0, 0), (1, 1), (1, 1), (0, 0)))
    taps = _extract_patches(xp, 3, 3, stride, 1, Ho, Wo)
    s = tap_reduce_pallas(taps, "sum", N * Ho * Wo, C).reshape(N, Ho, Wo, C)
    ones = jnp.pad(jnp.ones((1, H, W, 1), F32), ((0, 0), (1, 1), (1, 1), (0, 0)))
    cnt = sum(_extract_patches(ones, 3, 3, stride, 1, Ho, Wo))  # (1,Ho,Wo,1)
    return s / cnt


def batch_norm(x, gamma=None, beta=None, eps=1e-5, relu_after=False):
    # nn.BatchNorm2d in (default) training mode: batch statistics, biased variance.
    mean = jnp.mean(x, axis=(0, 1, 2))
    var = jnp.mean(jnp.square(x - mean), axis=(0, 1, 2))
    scale = 1.0 / jnp.sqrt(var + eps)
    shift = -mean * scale
    if gamma is not None:
        scale = scale * gamma
        shift = shift * gamma
    if beta is not None:
        shift = shift + beta
    return scale_shift_pallas(x, scale, shift, fuse_relu=relu_after)


def relu(x):
    return jnp.maximum(x, 0.0)


# ----------------------------------------------------------------------------
# Deterministic parameter generation
# ----------------------------------------------------------------------------
class PGen:
    def __init__(self, key):
        self.key = key

    def normal(self, shape, scale=0.1):
        self.key, sub = jax.random.split(self.key)
        return (scale * jax.random.normal(sub, shape)).astype(F32)


# ----------------------------------------------------------------------------
# DARTS OPS / MixedOp / Cell / Network (functional builders)
# ----------------------------------------------------------------------------
def make_relu_conv_bn(pg, C_in, C_out, k, stride, padding, affine):
    w = prep_conv_weight(pg.normal((k, k, C_in, C_out)))
    g = jnp.ones((C_out,), F32) if affine else None
    b = jnp.zeros((C_out,), F32) if affine else None

    def apply(x):
        x = relu(x)
        x = conv2d_pallas(x, w, stride=stride, padding=padding)
        return batch_norm(x, g, b)
    return apply


def make_factorized_reduce(pg, C_in, C_out, affine):
    w1 = prep_conv_weight(pg.normal((1, 1, C_in, C_out // 2)))
    w2 = prep_conv_weight(pg.normal((1, 1, C_in, C_out // 2)))
    g = jnp.ones((C_out,), F32) if affine else None
    b = jnp.zeros((C_out,), F32) if affine else None

    def apply(x):
        x = relu(x)
        y1 = conv2d_pallas(x, w1, stride=2, padding=0)
        y2 = conv2d_pallas(x[:, 1:, 1:, :], w2, stride=2, padding=0)
        y = jnp.concatenate([y1, y2], axis=-1)
        return batch_norm(y, g, b)
    return apply


def make_sep_conv(pg, C, k, stride, padding, affine):
    dw1 = prep_dw_weight(pg.normal((k, k, C)))
    pw1 = prep_conv_weight(pg.normal((1, 1, C, C)))
    dw2 = prep_dw_weight(pg.normal((k, k, C)))
    pw2 = prep_conv_weight(pg.normal((1, 1, C, C)))
    g1 = jnp.ones((C,), F32) if affine else None
    b1 = jnp.zeros((C,), F32) if affine else None
    g2 = jnp.ones((C,), F32) if affine else None
    b2 = jnp.zeros((C,), F32) if affine else None

    def apply(x):
        x = relu(x)
        x = depthwise_conv_pallas(x, dw1, stride=stride, padding=padding)
        x = conv2d_pallas(x, pw1, stride=1, padding=0)
        x = batch_norm(x, g1, b1, relu_after=True)      # BN + fused ReLU
        x = depthwise_conv_pallas(x, dw2, stride=1, padding=padding)
        x = conv2d_pallas(x, pw2, stride=1, padding=0)
        x = batch_norm(x, g2, b2)
        return x
    return apply


def make_dil_conv(pg, C, k, stride, padding, dilation, affine):
    dw = prep_dw_weight(pg.normal((k, k, C)))
    pw = prep_conv_weight(pg.normal((1, 1, C, C)))
    g = jnp.ones((C,), F32) if affine else None
    b = jnp.zeros((C,), F32) if affine else None

    def apply(x):
        x = relu(x)
        x = depthwise_conv_pallas(x, dw, stride=stride, padding=padding, dilation=dilation)
        x = conv2d_pallas(x, pw, stride=1, padding=0)
        return batch_norm(x, g, b)
    return apply


def make_zero(stride):
    def apply(x):
        if stride == 1:
            return x * 0.0
        return x[:, ::stride, ::stride, :] * 0.0
    return apply


def make_op(pg, primitive, C, stride):
    if primitive == "none":
        return make_zero(stride)
    if primitive == "skip_connect":
        if stride == 1:
            return lambda x: x
        return make_factorized_reduce(pg, C, C, affine=False)
    if primitive == "max_pool_3x3":
        return lambda x: max_pool_3x3(x, stride)
    if primitive == "avg_pool_3x3":
        return lambda x: avg_pool_3x3(x, stride)
    if primitive == "sep_conv_3x3":
        return make_sep_conv(pg, C, 3, stride, 1, affine=False)
    if primitive == "sep_conv_5x5":
        return make_sep_conv(pg, C, 5, stride, 2, affine=False)
    if primitive == "dil_conv_3x3":
        return make_dil_conv(pg, C, 3, stride, 2, 2, affine=False)
    if primitive == "dil_conv_5x5":
        return make_dil_conv(pg, C, 5, stride, 4, 2, affine=False)
    raise ValueError(f"unknown primitive {primitive}")


def make_mixed_op(pg, C, stride, primitives_edge):
    # 'none' contributes exactly 0 to the sum for finite inputs -> drop it to
    # cut kernel-launch count (keep it only if it is the sole primitive).
    prims = [p for p in primitives_edge if p != "none"]
    if not prims:
        return make_zero(stride)
    ops = [make_op(pg, p, C, stride) for p in prims]

    def apply(x):
        out = ops[0](x)
        for op in ops[1:]:
            out = out + op(x)
        return out
    return apply


def make_cell(pg, steps, multiplier, C_pp, C_p, C, reduce, reduce_prev, primitives_cell):
    if reduce_prev:
        pre0 = make_factorized_reduce(pg, C_pp, C, affine=False)
    else:
        pre0 = make_relu_conv_bn(pg, C_pp, C, 1, 1, 0, affine=False)
    pre1 = make_relu_conv_bn(pg, C_p, C, 1, 1, 0, affine=False)

    ops = []
    edge_index = 0
    for i in range(steps):
        for j in range(2 + i):
            stride = 2 if reduce and j < 2 else 1
            ops.append(make_mixed_op(pg, C, stride, primitives_cell[edge_index]))
            edge_index += 1

    def apply(s0, s1):
        s0 = pre0(s0)
        s1 = pre1(s1)
        states = [s0, s1]
        offset = 0
        for i in range(steps):
            s = None
            for j, h in enumerate(states):
                o = ops[offset + j](h)
                s = o if s is None else s + o
            offset += len(states)
            states.append(s)
        return jnp.concatenate(states[-multiplier:], axis=-1)
    return apply


def make_network(pg, C, num_classes, cells, primitives,
                 steps=4, multiplier=4, stem_multiplier=3):
    C_curr = stem_multiplier * C

    # stem0: Conv(3 -> C_curr//2, 3x3 s2 p1) + BN + ReLU + Conv(-> C_curr, 3x3 s2 p1) + BN
    w_s0a = prep_conv_weight(pg.normal((3, 3, 3, C_curr // 2)))
    g_s0a, b_s0a = jnp.ones((C_curr // 2,), F32), jnp.zeros((C_curr // 2,), F32)
    w_s0b = prep_conv_weight(pg.normal((3, 3, C_curr // 2, C_curr)))
    g_s0b, b_s0b = jnp.ones((C_curr,), F32), jnp.zeros((C_curr,), F32)
    # stem1: ReLU + Conv(C_curr -> C_curr, 3x3 s2 p1) + BN
    w_s1 = prep_conv_weight(pg.normal((3, 3, C_curr, C_curr)))
    g_s1, b_s1 = jnp.ones((C_curr,), F32), jnp.zeros((C_curr,), F32)

    C_pp, C_p, C_cur = C_curr, C_curr, C
    cell_fns = []
    reduce_prev = True
    for i in range(cells):
        if i in [cells // 3, 2 * cells // 3]:
            C_cur *= 2
            reduce = True
            prim = primitives["primitives_reduct"]
        else:
            reduce = False
            prim = primitives["primitives_normal"]
        cell_fns.append(
            make_cell(pg, steps, multiplier, C_pp, C_p, C_cur, reduce, reduce_prev, prim))
        reduce_prev = reduce
        C_pp, C_p = C_p, multiplier * C_cur

    w_cls = prep_conv_weight(pg.normal((1, 1, C_p, num_classes)))
    b_cls = jnp.zeros((num_classes,), F32)

    def forward(x_nchw):
        x = jnp.transpose(x_nchw, (0, 2, 3, 1)).astype(F32)  # NCHW -> NHWC
        # stem0  (BN + fused ReLU between the two convs)
        s0 = conv2d_pallas(x, w_s0a, stride=2, padding=1)
        s0 = batch_norm(s0, g_s0a, b_s0a, relu_after=True)
        s0 = conv2d_pallas(s0, w_s0b, stride=2, padding=1)
        s0 = batch_norm(s0, g_s0b, b_s0b)
        # stem1
        s1 = relu(s0)
        s1 = conv2d_pallas(s1, w_s1, stride=2, padding=1)
        s1 = batch_norm(s1, g_s1, b_s1)
        # cells
        for cell_fn in cell_fns:
            s0, s1 = s1, cell_fn(s0, s1)
        # AdaptiveAvgPool2d(1) + Linear
        out = jnp.mean(s1, axis=(1, 2))                 # (B, C_p)
        logits = conv_matmul_pallas(out[None], w_cls[0], w_cls[4]) + b_cls
        return logits

    return forward


# ----------------------------------------------------------------------------
if __name__ == "__main__":
    key = jax.random.PRNGKey(0)
    k_in, k_par = jax.random.split(key)

    # small, module-consistent config: batch=2, 3-channel 32x32 image,
    # C=8, cells=3 (cells 1 and 2 are reduction cells), steps=2, multiplier=2.
    x = jax.random.normal(k_in, (2, 3, 32, 32), dtype=jnp.float32)

    prims_edge = ["none", "skip_connect", "max_pool_3x3",
                  "avg_pool_3x3", "sep_conv_3x3", "dil_conv_3x3"]
    n_edges = sum(2 + i for i in range(2))  # steps=2 -> 5 edges per cell
    primitives = {
        "primitives_normal": [list(prims_edge) for _ in range(n_edges)],
        "primitives_reduct": [list(prims_edge) for _ in range(n_edges)],
    }

    pg = PGen(k_par)
    forward = make_network(pg, C=8, num_classes=10, cells=3, primitives=primitives,
                           steps=2, multiplier=2, stem_multiplier=3)

    fwd = jax.jit(forward)
    logits = fwd(x)
    jax.block_until_ready(logits)
    assert logits.shape == (2, 10), logits.shape
    assert bool(jnp.all(jnp.isfinite(logits)))
    print("KERNEL_OK")
</pallas_src>

<mosaic_0001>
module attributes {stable_mosaic.version = 11 : i64} {
  func.func @_conv_matmul_kernel(%arg0: i32, %arg1: i32, %arg2: i32, %arg3: i32, %arg4: memref<1x256x128xbf16, #tpu.memory_space<vmem>>, %arg5: memref<1x128x128xbf16, #tpu.memory_space<vmem>>, %arg6: memref<256x128xf32, #tpu.memory_space<vmem>>, %arg7: memref<256x128xf32, #tpu.memory_space<vmem>>) attributes {dimension_semantics = [#tpu.dimension_semantics<parallel>, #tpu.dimension_semantics<parallel>, #tpu.dimension_semantics<arbitrary>, #tpu.dimension_semantics<arbitrary>], iteration_bounds = array<i64: 2, 1, 9, 1>, scalar_prefetch = 0 : i64, scratch_operands = 1 : i64, tpu.core_type = #tpu.core_type<tc>, window_params = [{transform_indices = @transform_0, window_bounds = array<i64: 1, 256, 128>}, {transform_indices = @transform_1, window_bounds = array<i64: 1, 128, 128>}, {transform_indices = @transform_2, window_bounds = array<i64: 256, 128>}]} {
    %c0_i32 = arith.constant 0 : i32
    %0 = arith.cmpi eq, %arg2, %c0_i32 : i32
    %c0_i32_0 = arith.constant 0 : i32
    %1 = arith.cmpi eq, %arg3, %c0_i32_0 : i32
    %2 = arith.andi %0, %1 : i1
    %3 = arith.extui %2 : i1 to i32
    %c0_i32_1 = arith.constant 0 : i32
    %4 = arith.cmpi ne, %3, %c0_i32_1 : i32
    scf.if %4 {
      %cst_13 = arith.constant 0.000000e+00 : f32
      %18 = vector.broadcast %cst_13 : f32 to vector<256x128xf32>
      %c0_14 = arith.constant 0 : index
      %c0_15 = arith.constant 0 : index
      %19 = vector.load %arg7[%c0_14, %c0_15] : memref<256x128xf32, #tpu.memory_space<vmem>>, vector<256x128xf32>
      tpu.vector_store %arg7[%c0_14, %c0_15], %18 {strides = array<i32>} : memref<256x128xf32, #tpu.memory_space<vmem>>, vector<256x128xf32>,
    } else {
    }
    %c0 = arith.constant 0 : index
    %c0_2 = arith.constant 0 : index
    %5 = vector.load %arg7[%c0, %c0_2] : memref<256x128xf32, #tpu.memory_space<vmem>>, vector<256x128xf32>
    %c0_3 = arith.constant 0 : index
    %c0_4 = arith.constant 0 : index
    %c0_5 = arith.constant 0 : index
    %6 = vector.load %arg4[%c0_3, %c0_4, %c0_5] : memref<1x256x128xbf16, #tpu.memory_space<vmem>>, vector<1x256x128xbf16>
    %7 = vector.shape_cast %6 : vector<1x256x128xbf16> to vector<256x128xbf16>
    %c0_6 = arith.constant 0 : index
    %c0_7 = arith.constant 0 : index
    %c0_8 = arith.constant 0 : index
    %8 = vector.load %arg5[%c0_6, %c0_7, %c0_8] : memref<1x128x128xbf16, #tpu.memory_space<vmem>>, vector<1x128x128xbf16>
    %9 = vector.shape_cast %8 : vector<1x128x128xbf16> to vector<128x128xbf16>
    %cst = arith.constant dense<0.000000e+00> : vector<256x128xf32>
    %10 = tpu.matmul %7, %9, %cst {dimension_numbers = #tpu.dot_dimension_numbers<[1], [0], [0], [1], [0, 0, 1, 1], [], []>} : vector<256x128xbf16>, vector<128x128xbf16>, vector<256x128xf32> -> vector<256x128xf32>
    %11 = arith.addf %5, %10 : vector<256x128xf32>
    %c0_9 = arith.constant 0 : index
    %c0_10 = arith.constant 0 : index
    %12 = vector.load %arg7[%c0_9, %c0_10] : memref<256x128xf32, #tpu.memory_space<vmem>>, vector<256x128xf32>
    tpu.vector_store %arg7[%c0_9, %c0_10], %11 {strides = array<i32>} : memref<256x128xf32, #tpu.memory_space<vmem>>, vector<256x128xf32>,
    %c8_i32 = arith.constant 8 : i32
    %13 = arith.cmpi eq, %arg2, %c8_i32 : i32
    %c0_i32_11 = arith.constant 0 : i32
    %14 = arith.cmpi eq, %arg3, %c0_i32_11 : i32
    %15 = arith.andi %13, %14 : i1
    %16 = arith.extui %15 : i1 to i32
    %c0_i32_12 = arith.constant 0 : i32
    %17 = arith.cmpi ne, %16, %c0_i32_12 : i32
    scf.if %17 {
      %c0_13 = arith.constant 0 : index
      %c0_14 = arith.constant 0 : index
      %18 = vector.load %arg7[%c0_13, %c0_14] : memref<256x128xf32, #tpu.memory_space<vmem>>, vector<256x128xf32>
      %c0_15 = arith.constant 0 : index
      %c0_16 = arith.constant 0 : index
      %19 = vector.load %arg6[%c0_15, %c0_16] : memref<256x128xf32, #tpu.memory_space<vmem>>, vector<256x128xf32>
      tpu.vector_store %arg6[%c0_15, %c0_16], %18 {strides = array<i32>} : memref<256x128xf32, #tpu.memory_space<vmem>>, vector<256x128xf32>,
    } else {
    }
    return
  }
  func.func @transform_0(%arg0: i32, %arg1: i32, %arg2: i32, %arg3: i32) -> (i32, i32, i32) {
    %c0_i32 = arith.constant 0 : i32
    return %arg2, %arg0, %arg3 : i32, i32, i32
  }
  func.func @transform_1(%arg0: i32, %arg1: i32, %arg2: i32, %arg3: i32) -> (i32, i32, i32) {
    %c0_i32 = arith.constant 0 : i32
    return %arg2, %arg3, %arg1 : i32, i32, i32
  }
  func.func @transform_2(%arg0: i32, %arg1: i32, %arg2: i32, %arg3: i32) -> (i32, i32) {
    %c0_i32 = arith.constant 0 : i32
    return %arg0, %arg1 : i32, i32
  }
}

module attributes {stable_mosaic.version = 11 : i64} {
  func.func @kernel(%arg0: i32, %arg1: memref<512x128xf32, #tpu.memory_space<vmem>>, %arg2: memref<1x128xf32, #tpu.memory_space<vmem>>, %arg3: memref<1x128xf32, #tpu.memory_space<vmem>>, %arg4: memref<512x128xf32, #tpu.memory_space<vmem>>) attributes {dimension_semantics = [#tpu.dimension_semantics<parallel>], iteration_bounds = array<i64: 1>, scalar_prefetch = 0 : i64, scratch_operands = 0 : i64, tpu.core_type = #tpu.core_type<tc>, window_params = [{transform_indices = @transform_0, window_bounds = array<i64: 512, 128>}, {pipeline_mode = #tpu.pipeline_mode<synchronous>, transform_indices = @transform_1, window_bounds = array<i64: 1, 128>}, {pipeline_mode = #tpu.pipeline_mode<synchronous>, transform_indices = @transform_2, window_bounds = array<i64: 1, 128>}, {transform_indices = @transform_3, window_bounds = array<i64: 512, 128>}]} {
    %c0 = arith.constant 0 : index
    %c0_0 = arith.constant 0 : index
    %0 = vector.load %arg1[%c0, %c0_0] : memref<512x128xf32, #tpu.memory_space<vmem>>, vector<512x128xf32>
    %c0_1 = arith.constant 0 : index
    %c0_2 = arith.constant 0 : index
    %1 = vector.load %arg2[%c0_1, %c0_2] : memref<1x128xf32, #tpu.memory_space<vmem>>, vector<1x128xf32>
    %2 = vector.broadcast %1 : vector<1x128xf32> to vector<512x128xf32>
    %3 = arith.mulf %0, %2 : vector<512x128xf32>
    %c0_3 = arith.constant 0 : index
    %c0_4 = arith.constant 0 : index
    %4 = vector.load %arg3[%c0_3, %c0_4] : memref<1x128xf32, #tpu.memory_space<vmem>>, vector<1x128xf32>
    %5 = vector.broadcast %4 : vector<1x128xf32> to vector<512x128xf32>
    %6 = arith.addf %3, %5 : vector<512x128xf32>
    %cst = arith.constant 0.000000e+00 : f32
    %7 = vector.broadcast %cst : f32 to vector<512x128xf32>
    %8 = arith.maximumf %6, %7 : vector<512x128xf32>
    %c0_5 = arith.constant 0 : index
    %c0_6 = arith.constant 0 : index
    %9 = vector.load %arg4[%c0_5, %c0_6] : memref<512x128xf32, #tpu.memory_space<vmem>>, vector<512x128xf32>
    tpu.vector_store %arg4[%c0_5, %c0_6], %8 {strides = array<i32>} : memref<512x128xf32, #tpu.memory_space<vmem>>, vector<512x128xf32>,
    return
  }
  func.func @transform_0(%arg0: i32) -> (i32, i32) {
    %c0_i32 = arith.constant 0 : i32
    %c0_i32_0 = arith.constant 0 : i32
    return %arg0, %c0_i32 : i32, i32
  }
  func.func @transform_1(%arg0: i32) -> (i32, i32) {
    %c0_i32 = arith.constant 0 : i32
    %c0_i32_0 = arith.constant 0 : i32
    %c0_i32_1 = arith.constant 0 : i32
    return %c0_i32, %c0_i32_0 : i32, i32
  }
  func.func @transform_2(%arg0: i32) -> (i32, i32) {
    %c0_i32 = arith.constant 0 : i32
    %c0_i32_0 = arith.constant 0 : i32
    %c0_i32_1 = arith.constant 0 : i32
    return %c0_i32, %c0_i32_0 : i32, i32
  }
  func.func @transform_3(%arg0: i32) -> (i32, i32) {
    %c0_i32 = arith.constant 0 : i32
    %c0_i32_0 = arith.constant 0 : i32
    return %arg0, %c0_i32 : i32, i32
  }
}

module attributes {stable_mosaic.version = 11 : i64} {
  func.func @_conv_matmul_kernel(%arg0: i32, %arg1: i32, %arg2: i32, %arg3: i32, %arg4: memref<1x128x128xbf16, #tpu.memory_space<vmem>>, %arg5: memref<1x128x128xbf16, #tpu.memory_space<vmem>>, %arg6: memref<128x128xf32, #tpu.memory_space<vmem>>, %arg7: memref<128x128xf32, #tpu.memory_space<vmem>>) attributes {dimension_semantics = [#tpu.dimension_semantics<parallel>, #tpu.dimension_semantics<parallel>, #tpu.dimension_semantics<arbitrary>, #tpu.dimension_semantics<arbitrary>], iteration_bounds = array<i64: 1, 1, 9, 1>, scalar_prefetch = 0 : i64, scratch_operands = 1 : i64, tpu.core_type = #tpu.core_type<tc>, window_params = [{transform_indices = @transform_0, window_bounds = array<i64: 1, 128, 128>}, {transform_indices = @transform_1, window_bounds = array<i64: 1, 128, 128>}, {transform_indices = @transform_2, window_bounds = array<i64: 128, 128>}]} {
    %c0_i32 = arith.constant 0 : i32
    %0 = arith.cmpi eq, %arg2, %c0_i32 : i32
    %c0_i32_0 = arith.constant 0 : i32
    %1 = arith.cmpi eq, %arg3, %c0_i32_0 : i32
    %2 = arith.andi %0, %1 : i1
    %3 = arith.extui %2 : i1 to i32
    %c0_i32_1 = arith.constant 0 : i32
    %4 = arith.cmpi ne, %3, %c0_i32_1 : i32
    scf.if %4 {
      %cst_13 = arith.constant 0.000000e+00 : f32
      %18 = vector.broadcast %cst_13 : f32 to vector<128x128xf32>
      %c0_14 = arith.constant 0 : index
      %c0_15 = arith.constant 0 : index
      %19 = vector.load %arg7[%c0_14, %c0_15] : memref<128x128xf32, #tpu.memory_space<vmem>>, vector<128x128xf32>
      tpu.vector_store %arg7[%c0_14, %c0_15], %18 {strides = array<i32>} : memref<128x128xf32, #tpu.memory_space<vmem>>, vector<128x128xf32>,
    } else {
    }
    %c0 = arith.constant 0 : index
    %c0_2 = arith.constant 0 : index
    %5 = vector.load %arg7[%c0, %c0_2] : memref<128x128xf32, #tpu.memory_space<vmem>>, vector<128x128xf32>
    %c0_3 = arith.constant 0 : index
    %c0_4 = arith.constant 0 : index
    %c0_5 = arith.constant 0 : index
    %6 = vector.load %arg4[%c0_3, %c0_4, %c0_5] : memref<1x128x128xbf16, #tpu.memory_space<vmem>>, vector<1x128x128xbf16>
    %7 = vector.shape_cast %6 : vector<1x128x128xbf16> to vector<128x128xbf16>
    %c0_6 = arith.constant 0 : index
    %c0_7 = arith.constant 0 : index
    %c0_8 = arith.constant 0 : index
    %8 = vector.load %arg5[%c0_6, %c0_7, %c0_8] : memref<1x128x128xbf16, #tpu.memory_space<vmem>>, vector<1x128x128xbf16>
    %9 = vector.shape_cast %8 : vector<1x128x128xbf16> to vector<128x128xbf16>
    %cst = arith.constant dense<0.000000e+00> : vector<128x128xf32>
    %10 = tpu.matmul %7, %9, %cst {dimension_numbers = #tpu.dot_dimension_numbers<[1], [0], [0], [1], [0, 0, 1, 1], [], []>} : vector<128x128xbf16>, vector<128x128xbf16>, vector<128x128xf32> -> vector<128x128xf32>
    %11 = arith.addf %5, %10 : vector<128x128xf32>
    %c0_9 = arith.constant 0 : index
    %c0_10 = arith.constant 0 : index
    %12 = vector.load %arg7[%c0_9, %c0_10] : memref<128x128xf32, #tpu.memory_space<vmem>>, vector<128x128xf32>
    tpu.vector_store %arg7[%c0_9, %c0_10], %11 {strides = array<i32>} : memref<128x128xf32, #tpu.memory_space<vmem>>, vector<128x128xf32>,
    %c8_i32 = arith.constant 8 : i32
    %13 = arith.cmpi eq, %arg2, %c8_i32 : i32
    %c0_i32_11 = arith.constant 0 : i32
    %14 = arith.cmpi eq, %arg3, %c0_i32_11 : i32
    %15 = arith.andi %13, %14 : i1
    %16 = arith.extui %15 : i1 to i32
    %c0_i32_12 = arith.constant 0 : i32
    %17 = arith.cmpi ne, %16, %c0_i32_12 : i32
    scf.if %17 {
      %c0_13 = arith.constant 0 : index
      %c0_14 = arith.constant 0 : index
      %18 = vector.load %arg7[%c0_13, %c0_14] : memref<128x128xf32, #tpu.memory_space<vmem>>, vector<128x128xf32>
      %c0_15 = arith.constant 0 : index
      %c0_16 = arith.constant 0 : index
      %19 = vector.load %arg6[%c0_15, %c0_16] : memref<128x128xf32, #tpu.memory_space<vmem>>, vector<128x128xf32>
      tpu.vector_store %arg6[%c0_15, %c0_16], %18 {strides = array<i32>} : memref<128x128xf32, #tpu.memory_space<vmem>>, vector<128x128xf32>,
    } else {
    }
    return
  }
  func.func @transform_0(%arg0: i32, %arg1: i32, %arg2: i32, %arg3: i32) -> (i32, i32, i32) {
    %c0_i32 = arith.constant 0 : i32
    return %arg2, %arg0, %arg3 : i32, i32, i32
  }
  func.func @transform_1(%arg0: i32, %arg1: i32, %arg2: i32, %arg3: i32) -> (i32, i32, i32) {
    %c0_i32 = arith.constant 0 : i32
    return %arg2, %arg3, %arg1 : i32, i32, i32
  }
  func.func @transform_2(%arg0: i32, %arg1: i32, %arg2: i32, %arg3: i32) -> (i32, i32) {
    %c0_i32 = arith.constant 0 : i32
    return %arg0, %arg1 : i32, i32
  }
}

module attributes {stable_mosaic.version = 11 : i64} {
  func.func @kernel(%arg0: i32, %arg1: memref<128x128xf32, #tpu.memory_space<vmem>>, %arg2: memref<1x128xf32, #tpu.memory_space<vmem>>, %arg3: memref<1x128xf32, #tpu.memory_space<vmem>>, %arg4: memref<128x128xf32, #tpu.memory_space<vmem>>) attributes {dimension_semantics = [#tpu.dimension_semantics<parallel>], iteration_bounds = array<i64: 1>, scalar_prefetch = 0 : i64, scratch_operands = 0 : i64, tpu.core_type = #tpu.core_type<tc>, window_params = [{transform_indices = @transform_0, window_bounds = array<i64: 128, 128>}, {pipeline_mode = #tpu.pipeline_mode<synchronous>, transform_indices = @transform_1, window_bounds = array<i64: 1, 128>}, {pipeline_mode = #tpu.pipeline_mode<synchronous>, transform_indices = @transform_2, window_bounds = array<i64: 1, 128>}, {transform_indices = @transform_3, window_bounds = array<i64: 128, 128>}]} {
    %c0 = arith.constant 0 : index
    %c0_0 = arith.constant 0 : index
    %0 = vector.load %arg1[%c0, %c0_0] : memref<128x128xf32, #tpu.memory_space<vmem>>, vector<128x128xf32>
    %c0_1 = arith.constant 0 : index
    %c0_2 = arith.constant 0 : index
    %1 = vector.load %arg2[%c0_1, %c0_2] : memref<1x128xf32, #tpu.memory_space<vmem>>, vector<1x128xf32>
    %2 = vector.broadcast %1 : vector<1x128xf32> to vector<128x128xf32>
    %3 = arith.mulf %0, %2 : vector<128x128xf32>
    %c0_3 = arith.constant 0 : index
    %c0_4 = arith.constant 0 : index
    %4 = vector.load %arg3[%c0_3, %c0_4] : memref<1x128xf32, #tpu.memory_space<vmem>>, vector<1x128xf32>
    %5 = vector.broadcast %4 : vector<1x128xf32> to vector<128x128xf32>
    %6 = arith.addf %3, %5 : vector<128x128xf32>
    %c0_5 = arith.constant 0 : index
    %c0_6 = arith.constant 0 : index
    %7 = vector.load %arg4[%c0_5, %c0_6] : memref<128x128xf32, #tpu.memory_space<vmem>>, vector<128x128xf32>
    tpu.vector_store %arg4[%c0_5, %c0_6], %6 {strides = array<i32>} : memref<128x128xf32, #tpu.memory_space<vmem>>, vector<128x128xf32>,
    return
  }
  func.func @transform_0(%arg0: i32) -> (i32, i32) {
    %c0_i32 = arith.constant 0 : i32
    %c0_i32_0 = arith.constant 0 : i32
    return %arg0, %c0_i32 : i32, i32
  }
  func.func @transform_1(%arg0: i32) -> (i32, i32) {
    %c0_i32 = arith.constant 0 : i32
    %c0_i32_0 = arith.constant 0 : i32
    %c0_i32_1 = arith.constant 0 : i32
    return %c0_i32, %c0_i32_0 : i32, i32
  }
  func.func @transform_2(%arg0: i32) -> (i32, i32) {
    %c0_i32 = arith.constant 0 : i32
    %c0_i32_0 = arith.constant 0 : i32
    %c0_i32_1 = arith.constant 0 : i32
    return %c0_i32, %c0_i32_0 : i32, i32
  }
  func.func @transform_3(%arg0: i32) -> (i32, i32) {
    %c0_i32 = arith.constant 0 : i32
    %c0_i32_0 = arith.constant 0 : i32
    return %arg0, %c0_i32 : i32, i32
  }
}

module attributes {stable_mosaic.version = 11 : i64} {
  func.func @_conv_matmul_kernel(%arg0: i32, %arg1: i32, %arg2: i32, %arg3: i32, %arg4: memref<1x32x128xbf16, #tpu.memory_space<vmem>>, %arg5: memref<1x128x128xbf16, #tpu.memory_space<vmem>>, %arg6: memref<32x128xf32, #tpu.memory_space<vmem>>, %arg7: memref<32x128xf32, #tpu.memory_space<vmem>>) attributes {dimension_semantics = [#tpu.dimension_semantics<parallel>, #tpu.dimension_semantics<parallel>, #tpu.dimension_semantics<arbitrary>, #tpu.dimension_semantics<arbitrary>], iteration_bounds = array<i64: 1, 1, 1, 1>, scalar_prefetch = 0 : i64, scratch_operands = 1 : i64, tpu.core_type = #tpu.core_type<tc>, window_params = [{transform_indices = @transform_0, window_bounds = array<i64: 1, 32, 128>}, {transform_indices = @transform_1, window_bounds = array<i64: 1, 128, 128>}, {transform_indices = @transform_2, window_bounds = array<i64: 32, 128>}]} {
    %c0_i32 = arith.constant 0 : i32
    %0 = arith.cmpi eq, %arg2, %c0_i32 : i32
    %c0_i32_0 = arith.constant 0 : i32
    %1 = arith.cmpi eq, %arg3, %c0_i32_0 : i32
    %2 = arith.andi %0, %1 : i1
    %3 = arith.extui %2 : i1 to i32
    %c0_i32_1 = arith.constant 0 : i32
    %4 = arith.cmpi ne, %3, %c0_i32_1 : i32
    scf.if %4 {
      %cst_14 = arith.constant 0.000000e+00 : f32
      %18 = vector.broadcast %cst_14 : f32 to vector<32x128xf32>
      %c0_15 = arith.constant 0 : index
      %c0_16 = arith.constant 0 : index
      %19 = vector.load %arg7[%c0_15, %c0_16] : memref<32x128xf32, #tpu.memory_space<vmem>>, vector<32x128xf32>
      tpu.vector_store %arg7[%c0_15, %c0_16], %18 {strides = array<i32>} : memref<32x128xf32, #tpu.memory_space<vmem>>, vector<32x128xf32>,
    } else {
    }
    %c0 = arith.constant 0 : index
    %c0_2 = arith.constant 0 : index
    %5 = vector.load %arg7[%c0, %c0_2] : memref<32x128xf32, #tpu.memory_space<vmem>>, vector<32x128xf32>
    %c0_3 = arith.constant 0 : index
    %c0_4 = arith.constant 0 : index
    %c0_5 = arith.constant 0 : index
    %6 = vector.load %arg4[%c0_3, %c0_4, %c0_5] : memref<1x32x128xbf16, #tpu.memory_space<vmem>>, vector<1x32x128xbf16>
    %7 = vector.shape_cast %6 : vector<1x32x128xbf16> to vector<32x128xbf16>
    %c0_6 = arith.constant 0 : index
    %c0_7 = arith.constant 0 : index
    %c0_8 = arith.constant 0 : index
    %8 = vector.load %arg5[%c0_6, %c0_7, %c0_8] : memref<1x128x128xbf16, #tpu.memory_space<vmem>>, vector<1x128x128xbf16>
    %9 = vector.shape_cast %8 : vector<1x128x128xbf16> to vector<128x128xbf16>
    %cst = arith.constant dense<0.000000e+00> : vector<32x128xf32>
    %10 = tpu.matmul %7, %9, %cst {dimension_numbers = #tpu.dot_dimension_numbers<[1], [0], [0], [1], [0, 0, 1, 1], [], []>} : vector<32x128xbf16>, vector<128x128xbf16>, vector<32x128xf32> -> vector<32x128xf32>
    %11 = arith.addf %5, %10 : vector<32x128xf32>
    %c0_9 = arith.constant 0 : index
    %c0_10 = arith.constant 0 : index
    %12 = vector.load %arg7[%c0_9, %c0_10] : memref<32x128xf32, #tpu.memory_space<vmem>>, vector<32x128xf32>
    tpu.vector_store %arg7[%c0_9, %c0_10], %11 {strides = array<i32>} : memref<32x128xf32, #tpu.memory_space<vmem>>, vector<32x128xf32>,
    %c0_i32_11 = arith.constant 0 : i32
    %13 = arith.cmpi eq, %arg2, %c0_i32_11 : i32
    %c0_i32_12 = arith.constant 0 : i32
    %14 = arith.cmpi eq, %arg3, %c0_i32_12 : i32
    %15 = arith.andi %13, %14 : i1
    %16 = arith.extui %15 : i1 to i32
    %c0_i32_13 = arith.constant 0 : i32
    %17 = arith.cmpi ne, %16, %c0_i32_13 : i32
    scf.if %17 {
      %c0_14 = arith.constant 0 : index
      %c0_15 = arith.constant 0 : index
      %18 = vector.load %arg7[%c0_14, %c0_15] : memref<32x128xf32, #tpu.memory_space<vmem>>, vector<32x128xf32>
      %c0_16 = arith.constant 0 : index
      %c0_17 = arith.constant 0 : index
      %19 = vector.load %arg6[%c0_16, %c0_17] : memref<32x128xf32, #tpu.memory_space<vmem>>, vector<32x128xf32>
      tpu.vector_store %arg6[%c0_16, %c0_17], %18 {strides = array<i32>} : memref<32x128xf32, #tpu.memory_space<vmem>>, vector<32x128xf32>,
    } else {
    }
    return
  }
  func.func @transform_0(%arg0: i32, %arg1: i32, %arg2: i32, %arg3: i32) -> (i32, i32, i32) {
    %c0_i32 = arith.constant 0 : i32
    return %arg2, %arg0, %arg3 : i32, i32, i32
  }
  func.func @transform_1(%arg0: i32, %arg1: i32, %arg2: i32, %arg3: i32) -> (i32, i32, i32) {
    %c0_i32 = arith.constant 0 : i32
    return %arg2, %arg3, %arg1 : i32, i32, i32
  }
  func.func @transform_2(%arg0: i32, %arg1: i32, %arg2: i32, %arg3: i32) -> (i32, i32) {
    %c0_i32 = arith.constant 0 : i32
    return %arg0, %arg1 : i32, i32
  }
}

module attributes {stable_mosaic.version = 11 : i64} {
  func.func @kernel(%arg0: i32, %arg1: memref<32x128xf32, #tpu.memory_space<vmem>>, %arg2: memref<1x128xf32, #tpu.memory_space<vmem>>, %arg3: memref<1x128xf32, #tpu.memory_space<vmem>>, %arg4: memref<32x128xf32, #tpu.memory_space<vmem>>) attributes {dimension_semantics = [#tpu.dimension_semantics<parallel>], iteration_bounds = array<i64: 1>, scalar_prefetch = 0 : i64, scratch_operands = 0 : i64, tpu.core_type = #tpu.core_type<tc>, window_params = [{transform_indices = @transform_0, window_bounds = array<i64: 32, 128>}, {pipeline_mode = #tpu.pipeline_mode<synchronous>, transform_indices = @transform_1, window_bounds = array<i64: 1, 128>}, {pipeline_mode = #tpu.pipeline_mode<synchronous>, transform_indices = @transform_2, window_bounds = array<i64: 1, 128>}, {transform_indices = @transform_3, window_bounds = array<i64: 32, 128>}]} {
    %c0 = arith.constant 0 : index
    %c0_0 = arith.constant 0 : index
    %0 = vector.load %arg1[%c0, %c0_0] : memref<32x128xf32, #tpu.memory_space<vmem>>, vector<32x128xf32>
    %c0_1 = arith.constant 0 : index
    %c0_2 = arith.constant 0 : index
    %1 = vector.load %arg2[%c0_1, %c0_2] : memref<1x128xf32, #tpu.memory_space<vmem>>, vector<1x128xf32>
    %2 = vector.broadcast %1 : vector<1x128xf32> to vector<32x128xf32>
    %3 = arith.mulf %0, %2 : vector<32x128xf32>
    %c0_3 = arith.constant 0 : index
    %c0_4 = arith.constant 0 : index
    %4 = vector.load %arg3[%c0_3, %c0_4] : memref<1x128xf32, #tpu.memory_space<vmem>>, vector<1x128xf32>
    %5 = vector.broadcast %4 : vector<1x128xf32> to vector<32x128xf32>
    %6 = arith.addf %3, %5 : vector<32x128xf32>
    %c0_5 = arith.constant 0 : index
    %c0_6 = arith.constant 0 : index
    %7 = vector.load %arg4[%c0_5, %c0_6] : memref<32x128xf32, #tpu.memory_space<vmem>>, vector<32x128xf32>
    tpu.vector_store %arg4[%c0_5, %c0_6], %6 {strides = array<i32>} : memref<32x128xf32, #tpu.memory_space<vmem>>, vector<32x128xf32>,
    return
  }
  func.func @transform_0(%arg0: i32) -> (i32, i32) {
    %c0_i32 = arith.constant 0 : i32
    %c0_i32_0 = arith.constant 0 : i32
    return %arg0, %c0_i32 : i32, i32
  }
  func.func @transform_1(%arg0: i32) -> (i32, i32) {
    %c0_i32 = arith.constant 0 : i32
    %c0_i32_0 = arith.constant 0 : i32
    %c0_i32_1 = arith.constant 0 : i32
    return %c0_i32, %c0_i32_0 : i32, i32
  }
  func.func @transform_2(%arg0: i32) -> (i32, i32) {
    %c0_i32 = arith.constant 0 : i32
    %c0_i32_0 = arith.constant 0 : i32
    %c0_i32_1 = arith.constant 0 : i32
    return %c0_i32, %c0_i32_0 : i32, i32
  }
  func.func @transform_3(%arg0: i32) -> (i32, i32) {
    %c0_i32 = arith.constant 0 : i32
    %c0_i32_0 = arith.constant 0 : i32
    return %arg0, %c0_i32 : i32, i32
  }
}

module attributes {stable_mosaic.version = 11 : i64} {
  func.func @_dw_mac_kernel(%arg0: i32, %arg1: memref<9x32x128xf32, #tpu.memory_space<vmem>>, %arg2: memref<9x1x128xf32, #tpu.memory_space<vmem>>, %arg3: memref<32x128xf32, #tpu.memory_space<vmem>>) attributes {dimension_semantics = [#tpu.dimension_semantics<parallel>], iteration_bounds = array<i64: 1>, scalar_prefetch = 0 : i64, scratch_operands = 0 : i64, tpu.core_type = #tpu.core_type<tc>, window_params = [{transform_indices = @transform_0, window_bounds = array<i64: 9, 32, 128>}, {pipeline_mode = #tpu.pipeline_mode<synchronous>, transform_indices = @transform_1, window_bounds = array<i64: 9, 1, 128>}, {transform_indices = @transform_2, window_bounds = array<i64: 32, 128>}]} {
    %c0 = arith.constant 0 : index
    %c0_0 = arith.constant 0 : index
    %c0_1 = arith.constant 0 : index
    %0 = vector.load %arg1[%c0, %c0_0, %c0_1] : memref<9x32x128xf32, #tpu.memory_space<vmem>>, vector<1x32x128xf32>
    %1 = vector.shape_cast %0 : vector<1x32x128xf32> to vector<32x128xf32>
    %c0_2 = arith.constant 0 : index
    %c0_3 = arith.constant 0 : index
    %c0_4 = arith.constant 0 : index
    %2 = vector.load %arg2[%c0_2, %c0_3, %c0_4] : memref<9x1x128xf32, #tpu.memory_space<vmem>>, vector<1x1x128xf32>
    %3 = vector.shape_cast %2 : vector<1x1x128xf32> to vector<1x128xf32>
    %4 = vector.broadcast %3 : vector<1x128xf32> to vector<32x128xf32>
    %5 = arith.mulf %1, %4 : vector<32x128xf32>
    %c1 = arith.constant 1 : index
    %c0_5 = arith.constant 0 : index
    %c0_6 = arith.constant 0 : index
    %6 = vector.load %arg1[%c1, %c0_5, %c0_6] : memref<9x32x128xf32, #tpu.memory_space<vmem>>, vector<1x32x128xf32>
    %7 = vector.shape_cast %6 : vector<1x32x128xf32> to vector<32x128xf32>
    %c1_7 = arith.constant 1 : index
    %c0_8 = arith.constant 0 : index
    %c0_9 = arith.constant 0 : index
    %8 = vector.load %arg2[%c1_7, %c0_8, %c0_9] : memref<9x1x128xf32, #tpu.memory_space<vmem>>, vector<1x1x128xf32>
    %9 = vector.shape_cast %8 : vector<1x1x128xf32> to vector<1x128xf32>
    %10 = vector.broadcast %9 : vector<1x128xf32> to vector<32x128xf32>
    %11 = arith.mulf %7, %10 : vector<32x128xf32>
    %12 = arith.addf %5, %11 : vector<32x128xf32>
    %c2 = arith.constant 2 : index
    %c0_10 = arith.constant 0 : index
    %c0_11 = arith.constant 0 : index
    %13 = vector.load %arg1[%c2, %c0_10, %c0_11] : memref<9x32x128xf32, #tpu.memory_space<vmem>>, vector<1x32x128xf32>
    %14 = vector.shape_cast %13 : vector<1x32x128xf32> to vector<32x128xf32>
    %c2_12 = arith.constant 2 : index
    %c0_13 = arith.constant 0 : index
    %c0_14 = arith.constant 0 : index
    %15 = vector.load %arg2[%c2_12, %c0_13, %c0_14] : memref<9x1x128xf32, #tpu.memory_space<vmem>>, vector<1x1x128xf32>
    %16 = vector.shape_cast %15 : vector<1x1x128xf32> to vector<1x128xf32>
    %17 = vector.broadcast %16 : vector<1x128xf32> to vector<32x128xf32>
    %18 = arith.mulf %14, %17 : vector<32x128xf32>
    %19 = arith.addf %12, %18 : vector<32x128xf32>
    %c3 = arith.constant 3 : index
    %c0_15 = arith.constant 0 : index
    %c0_16 = arith.constant 0 : index
    %20 = vector.load %arg1[%c3, %c0_15, %c0_16] : memref<9x32x128xf32, #tpu.memory_space<vmem>>, vector<1x32x128xf32>
    %21 = vector.shape_cast %20 : vector<1x32x128xf32> to vector<32x128xf32>
    %c3_17 = arith.constant 3 : index
    %c0_18 = arith.constant 0 : index
    %c0_19 = arith.constant 0 : index
    %22 = vector.load %arg2[%c3_17, %c0_18, %c0_19] : memref<9x1x128xf32, #tpu.memory_space<vmem>>, vector<1x1x128xf32>
    %23 = vector.shape_cast %22 : vector<1x1x128xf32> to vector<1x128xf32>
    %24 = vector.broadcast %23 : vector<1x128xf32> to vector<32x128xf32>
    %25 = arith.mulf %21, %24 : vector<32x128xf32>
    %26 = arith.addf %19, %25 : vector<32x128xf32>
    %c4 = arith.constant 4 : index
    %c0_20 = arith.constant 0 : index
    %c0_21 = arith.constant 0 : index
    %27 = vector.load %arg1[%c4, %c0_20, %c0_21] : memref<9x32x128xf32, #tpu.memory_space<vmem>>, vector<1x32x128xf32>
    %28 = vector.shape_cast %27 : vector<1x32x128xf32> to vector<32x128xf32>
    %c4_22 = arith.constant 4 : index
    %c0_23 = arith.constant 0 : index
    %c0_24 = arith.constant 0 : index
    %29 = vector.load %arg2[%c4_22, %c0_23, %c0_24] : memref<9x1x128xf32, #tpu.memory_space<vmem>>, vector<1x1x128xf32>
    %30 = vector.shape_cast %29 : vector<1x1x128xf32> to vector<1x128xf32>
    %31 = vector.broadcast %30 : vector<1x128xf32> to vector<32x128xf32>
    %32 = arith.mulf %28, %31 : vector<32x128xf32>
    %33 = arith.addf %26, %32 : vector<32x128xf32>
    %c5 = arith.constant 5 : index
    %c0_25 = arith.constant 0 : index
    %c0_26 = arith.constant 0 : index
    %34 = vector.load %arg1[%c5, %c0_25, %c0_26] : memref<9x32x128xf32, #tpu.memory_space<vmem>>, vector<1x32x128xf32>
    %35 = vector.shape_cast %34 : vector<1x32x128xf32> to vector<32x128xf32>
    %c5_27 = arith.constant 5 : index
    %c0_28 = arith.constant 0 : index
    %c0_29 = arith.constant 0 : index
    %36 = vector.load %arg2[%c5_27, %c0_28, %c0_29] : memref<9x1x128xf32, #tpu.memory_space<vmem>>, vector<1x1x128xf32>
    %37 = vector.shape_cast %36 : vector<1x1x128xf32> to vector<1x128xf32>
    %38 = vector.broadcast %37 : vector<1x128xf32> to vector<32x128xf32>
    %39 = arith.mulf %35, %38 : vector<32x128xf32>
    %40 = arith.addf %33, %39 : vector<32x128xf32>
    %c6 = arith.constant 6 : index
    %c0_30 = arith.constant 0 : index
    %c0_31 = arith.constant 0 : index
    %41 = vector.load %arg1[%c6, %c0_30, %c0_31] : memref<9x32x128xf32, #tpu.memory_space<vmem>>, vector<1x32x128xf32>
    %42 = vector.shape_cast %41 : vector<1x32x128xf32> to vector<32x128xf32>
    %c6_32 = arith.constant 6 : index
    %c0_33 = arith.constant 0 : index
    %c0_34 = arith.constant 0 : index
    %43 = vector.load %arg2[%c6_32, %c0_33, %c0_34] : memref<9x1x128xf32, #tpu.memory_space<vmem>>, vector<1x1x128xf32>
    %44 = vector.shape_cast %43 : vector<1x1x128xf32> to vector<1x128xf32>
    %45 = vector.broadcast %44 : vector<1x128xf32> to vector<32x128xf32>
    %46 = arith.mulf %42, %45 : vector<32x128xf32>
    %47 = arith.addf %40, %46 : vector<32x128xf32>
    %c7 = arith.constant 7 : index
    %c0_35 = arith.constant 0 : index
    %c0_36 = arith.constant 0 : index
    %48 = vector.load %arg1[%c7, %c0_35, %c0_36] : memref<9x32x128xf32, #tpu.memory_space<vmem>>, vector<1x32x128xf32>
    %49 = vector.shape_cast %48 : vector<1x32x128xf32> to vector<32x128xf32>
    %c7_37 = arith.constant 7 : index
    %c0_38 = arith.constant 0 : index
    %c0_39 = arith.constant 0 : index
    %50 = vector.load %arg2[%c7_37, %c0_38, %c0_39] : memref<9x1x128xf32, #tpu.memory_space<vmem>>, vector<1x1x128xf32>
    %51 = vector.shape_cast %50 : vector<1x1x128xf32> to vector<1x128xf32>
    %52 = vector.broadcast %51 : vector<1x128xf32> to vector<32x128xf32>
    %53 = arith.mulf %49, %52 : vector<32x128xf32>
    %54 = arith.addf %47, %53 : vector<32x128xf32>
    %c8 = arith.constant 8 : index
    %c0_40 = arith.constant 0 : index
    %c0_41 = arith.constant 0 : index
    %55 = vector.load %arg1[%c8, %c0_40, %c0_41] : memref<9x32x128xf32, #tpu.memory_space<vmem>>, vector<1x32x128xf32>
    %56 = vector.shape_cast %55 : vector<1x32x128xf32> to vector<32x128xf32>
    %c8_42 = arith.constant 8 : index
    %c0_43 = arith.constant 0 : index
    %c0_44 = arith.constant 0 : index
    %57 = vector.load %arg2[%c8_42, %c0_43, %c0_44] : memref<9x1x128xf32, #tpu.memory_space<vmem>>, vector<1x1x128xf32>
    %58 = vector.shape_cast %57 : vector<1x1x128xf32> to vector<1x128xf32>
    %59 = vector.broadcast %58 : vector<1x128xf32> to vector<32x128xf32>
    %60 = arith.mulf %56, %59 : vector<32x128xf32>
    %61 = arith.addf %54, %60 : vector<32x128xf32>
    %c0_45 = arith.constant 0 : index
    %c0_46 = arith.constant 0 : index
    %62 = vector.load %arg3[%c0_45, %c0_46] : memref<32x128xf32, #tpu.memory_space<vmem>>, vector<32x128xf32>
    tpu.vector_store %arg3[%c0_45, %c0_46], %61 {strides = array<i32>} : memref<32x128xf32, #tpu.memory_space<vmem>>, vector<32x128xf32>,
    return
  }
  func.func @transform_0(%arg0: i32) -> (i32, i32, i32) {
    %c0_i32 = arith.constant 0 : i32
    %c0_i32_0 = arith.constant 0 : i32
    %c0_i32_1 = arith.constant 0 : i32
    return %c0_i32, %arg0, %c0_i32_0 : i32, i32, i32
  }
  func.func @transform_1(%arg0: i32) -> (i32, i32, i32) {
    %c0_i32 = arith.constant 0 : i32
    %c0_i32_0 = arith.constant 0 : i32
    %c0_i32_1 = arith.constant 0 : i32
    %c0_i32_2 = arith.constant 0 : i32
    return %c0_i32, %c0_i32_0, %c0_i32_1 : i32, i32, i32
  }
  func.func @transform_2(%arg0: i32) -> (i32, i32) {
    %c0_i32 = arith.constant 0 : i32
    %c0_i32_0 = arith.constant 0 : i32
    return %arg0, %c0_i32 : i32, i32
  }
}

module attributes {stable_mosaic.version = 11 : i64} {
  func.func @kernel(%arg0: i32, %arg1: memref<32x128xf32, #tpu.memory_space<vmem>>, %arg2: memref<1x128xf32, #tpu.memory_space<vmem>>, %arg3: memref<1x128xf32, #tpu.memory_space<vmem>>, %arg4: memref<32x128xf32, #tpu.memory_space<vmem>>) attributes {dimension_semantics = [#tpu.dimension_semantics<parallel>], iteration_bounds = array<i64: 1>, scalar_prefetch = 0 : i64, scratch_operands = 0 : i64, tpu.core_type = #tpu.core_type<tc>, window_params = [{transform_indices = @transform_0, window_bounds = array<i64: 32, 128>}, {pipeline_mode = #tpu.pipeline_mode<synchronous>, transform_indices = @transform_1, window_bounds = array<i64: 1, 128>}, {pipeline_mode = #tpu.pipeline_mode<synchronous>, transform_indices = @transform_2, window_bounds = array<i64: 1, 128>}, {transform_indices = @transform_3, window_bounds = array<i64: 32, 128>}]} {
    %c0 = arith.constant 0 : index
    %c0_0 = arith.constant 0 : index
    %0 = vector.load %arg1[%c0, %c0_0] : memref<32x128xf32, #tpu.memory_space<vmem>>, vector<32x128xf32>
    %c0_1 = arith.constant 0 : index
    %c0_2 = arith.constant 0 : index
    %1 = vector.load %arg2[%c0_1, %c0_2] : memref<1x128xf32, #tpu.memory_space<vmem>>, vector<1x128xf32>
    %2 = vector.broadcast %1 : vector<1x128xf32> to vector<32x128xf32>
    %3 = arith.mulf %0, %2 : vector<32x128xf32>
    %c0_3 = arith.constant 0 : index
    %c0_4 = arith.constant 0 : index
    %4 = vector.load %arg3[%c0_3, %c0_4] : memref<1x128xf32, #tpu.memory_space<vmem>>, vector<1x128xf32>
    %5 = vector.broadcast %4 : vector<1x128xf32> to vector<32x128xf32>
    %6 = arith.addf %3, %5 : vector<32x128xf32>
    %cst = arith.constant 0.000000e+00 : f32
    %7 = vector.broadcast %cst : f32 to vector<32x128xf32>
    %8 = arith.maximumf %6, %7 : vector<32x128xf32>
    %c0_5 = arith.constant 0 : index
    %c0_6 = arith.constant 0 : index
    %9 = vector.load %arg4[%c0_5, %c0_6] : memref<32x128xf32, #tpu.memory_space<vmem>>, vector<32x128xf32>
    tpu.vector_store %arg4[%c0_5, %c0_6], %8 {strides = array<i32>} : memref<32x128xf32, #tpu.memory_space<vmem>>, vector<32x128xf32>,
    return
  }
  func.func @transform_0(%arg0: i32) -> (i32, i32) {
    %c0_i32 = arith.constant 0 : i32
    %c0_i32_0 = arith.constant 0 : i32
    return %arg0, %c0_i32 : i32, i32
  }
  func.func @transform_1(%arg0: i32) -> (i32, i32) {
    %c0_i32 = arith.constant 0 : i32
    %c0_i32_0 = arith.constant 0 : i32
    %c0_i32_1 = arith.constant 0 : i32
    return %c0_i32, %c0_i32_0 : i32, i32
  }
  func.func @transform_2(%arg0: i32) -> (i32, i32) {
    %c0_i32 = arith.constant 0 : i32
    %c0_i32_0 = arith.constant 0 : i32
    %c0_i32_1 = arith.constant 0 : i32
    return %c0_i32, %c0_i32_0 : i32, i32
  }
  func.func @transform_3(%arg0: i32) -> (i32, i32) {
    %c0_i32 = arith.constant 0 : i32
    %c0_i32_0 = arith.constant 0 : i32
    return %arg0, %c0_i32 : i32, i32
  }
}

module attributes {stable_mosaic.version = 11 : i64} {
  func.func @kernel(%arg0: i32, %arg1: memref<9x32x128xf32, #tpu.memory_space<vmem>>, %arg2: memref<32x128xf32, #tpu.memory_space<vmem>>) attributes {dimension_semantics = [#tpu.dimension_semantics<parallel>], iteration_bounds = array<i64: 1>, scalar_prefetch = 0 : i64, scratch_operands = 0 : i64, tpu.core_type = #tpu.core_type<tc>, window_params = [{transform_indices = @transform_0, window_bounds = array<i64: 9, 32, 128>}, {transform_indices = @transform_1, window_bounds = array<i64: 32, 128>}]} {
    %c0 = arith.constant 0 : index
    %c0_0 = arith.constant 0 : index
    %c0_1 = arith.constant 0 : index
    %0 = vector.load %arg1[%c0, %c0_0, %c0_1] : memref<9x32x128xf32, #tpu.memory_space<vmem>>, vector<1x32x128xf32>
    %1 = vector.shape_cast %0 : vector<1x32x128xf32> to vector<32x128xf32>
    %c1 = arith.constant 1 : index
    %c0_2 = arith.constant 0 : index
    %c0_3 = arith.constant 0 : index
    %2 = vector.load %arg1[%c1, %c0_2, %c0_3] : memref<9x32x128xf32, #tpu.memory_space<vmem>>, vector<1x32x128xf32>
    %3 = vector.shape_cast %2 : vector<1x32x128xf32> to vector<32x128xf32>
    %4 = arith.addf %1, %3 : vector<32x128xf32>
    %c2 = arith.constant 2 : index
    %c0_4 = arith.constant 0 : index
    %c0_5 = arith.constant 0 : index
    %5 = vector.load %arg1[%c2, %c0_4, %c0_5] : memref<9x32x128xf32, #tpu.memory_space<vmem>>, vector<1x32x128xf32>
    %6 = vector.shape_cast %5 : vector<1x32x128xf32> to vector<32x128xf32>
    %7 = arith.addf %4, %6 : vector<32x128xf32>
    %c3 = arith.constant 3 : index
    %c0_6 = arith.constant 0 : index
    %c0_7 = arith.constant 0 : index
    %8 = vector.load %arg1[%c3, %c0_6, %c0_7] : memref<9x32x128xf32, #tpu.memory_space<vmem>>, vector<1x32x128xf32>
    %9 = vector.shape_cast %8 : vector<1x32x128xf32> to vector<32x128xf32>
    %10 = arith.addf %7, %9 : vector<32x128xf32>
    %c4 = arith.constant 4 : index
    %c0_8 = arith.constant 0 : index
    %c0_9 = arith.constant 0 : index
    %11 = vector.load %arg1[%c4, %c0_8, %c0_9] : memref<9x32x128xf32, #tpu.memory_space<vmem>>, vector<1x32x128xf32>
    %12 = vector.shape_cast %11 : vector<1x32x128xf32> to vector<32x128xf32>
    %13 = arith.addf %10, %12 : vector<32x128xf32>
    %c5 = arith.constant 5 : index
    %c0_10 = arith.constant 0 : index
    %c0_11 = arith.constant 0 : index
    %14 = vector.load %arg1[%c5, %c0_10, %c0_11] : memref<9x32x128xf32, #tpu.memory_space<vmem>>, vector<1x32x128xf32>
    %15 = vector.shape_cast %14 : vector<1x32x128xf32> to vector<32x128xf32>
    %16 = arith.addf %13, %15 : vector<32x128xf32>
    %c6 = arith.constant 6 : index
    %c0_12 = arith.constant 0 : index
    %c0_13 = arith.constant 0 : index
    %17 = vector.load %arg1[%c6, %c0_12, %c0_13] : memref<9x32x128xf32, #tpu.memory_space<vmem>>, vector<1x32x128xf32>
    %18 = vector.shape_cast %17 : vector<1x32x128xf32> to vector<32x128xf32>
    %19 = arith.addf %16, %18 : vector<32x128xf32>
    %c7 = arith.constant 7 : index
    %c0_14 = arith.constant 0 : index
    %c0_15 = arith.constant 0 : index
    %20 = vector.load %arg1[%c7, %c0_14, %c0_15] : memref<9x32x128xf32, #tpu.memory_space<vmem>>, vector<1x32x128xf32>
    %21 = vector.shape_cast %20 : vector<1x32x128xf32> to vector<32x128xf32>
    %22 = arith.addf %19, %21 : vector<32x128xf32>
    %c8 = arith.constant 8 : index
    %c0_16 = arith.constant 0 : index
    %c0_17 = arith.constant 0 : index
    %23 = vector.load %arg1[%c8, %c0_16, %c0_17] : memref<9x32x128xf32, #tpu.memory_space<vmem>>, vector<1x32x128xf32>
    %24 = vector.shape_cast %23 : vector<1x32x128xf32> to vector<32x128xf32>
    %25 = arith.addf %22, %24 : vector<32x128xf32>
    %c0_18 = arith.constant 0 : index
    %c0_19 = arith.constant 0 : index
    %26 = vector.load %arg2[%c0_18, %c0_19] : memref<32x128xf32, #tpu.memory_space<vmem>>, vector<32x128xf32>
    tpu.vector_store %arg2[%c0_18, %c0_19], %25 {strides = array<i32>} : memref<32x128xf32, #tpu.memory_space<vmem>>, vector<32x128xf32>,
    return
  }
  func.func @transform_0(%arg0: i32) -> (i32, i32, i32) {
    %c0_i32 = arith.constant 0 : i32
    %c0_i32_0 = arith.constant 0 : i32
    %c0_i32_1 = arith.constant 0 : i32
    return %c0_i32, %arg0, %c0_i32_0 : i32, i32, i32
  }
  func.func @transform_1(%arg0: i32) -> (i32, i32) {
    %c0_i32 = arith.constant 0 : i32
    %c0_i32_0 = arith.constant 0 : i32
    return %arg0, %c0_i32 : i32, i32
  }
}

module attributes {stable_mosaic.version = 11 : i64} {
  func.func @_conv_matmul_kernel(%arg0: i32, %arg1: i32, %arg2: i32, %arg3: i32, %arg4: memref<1x32x128xbf16, #tpu.memory_space<vmem>>, %arg5: memref<1x128x128xbf16, #tpu.memory_space<vmem>>, %arg6: memref<32x128xf32, #tpu.memory_space<vmem>>, %arg7: memref<32x128xf32, #tpu.memory_space<vmem>>) attributes {dimension_semantics = [#tpu.dimension_semantics<parallel>, #tpu.dimension_semantics<parallel>, #tpu.dimension_semantics<arbitrary>, #tpu.dimension_semantics<arbitrary>], iteration_bounds = array<i64: 1, 1, 9, 1>, scalar_prefetch = 0 : i64, scratch_operands = 1 : i64, tpu.core_type = #tpu.core_type<tc>, window_params = [{transform_indices = @transform_0, window_bounds = array<i64: 1, 32, 128>}, {transform_indices = @transform_1, window_bounds = array<i64: 1, 128, 128>}, {transform_indices = @transform_2, window_bounds = array<i64: 32, 128>}]} {
    %c0_i32 = arith.constant 0 : i32
    %0 = arith.cmpi eq, %arg2, %c0_i32 : i32
    %c0_i32_0 = arith.constant 0 : i32
    %1 = arith.cmpi eq, %arg3, %c0_i32_0 : i32
    %2 = arith.andi %0, %1 : i1
    %3 = arith.extui %2 : i1 to i32
    %c0_i32_1 = arith.constant 0 : i32
    %4 = arith.cmpi ne, %3, %c0_i32_1 : i32
    scf.if %4 {
      %cst_13 = arith.constant 0.000000e+00 : f32
      %18 = vector.broadcast %cst_13 : f32 to vector<32x128xf32>
      %c0_14 = arith.constant 0 : index
      %c0_15 = arith.constant 0 : index
      %19 = vector.load %arg7[%c0_14, %c0_15] : memref<32x128xf32, #tpu.memory_space<vmem>>, vector<32x128xf32>
      tpu.vector_store %arg7[%c0_14, %c0_15], %18 {strides = array<i32>} : memref<32x128xf32, #tpu.memory_space<vmem>>, vector<32x128xf32>,
    } else {
    }
    %c0 = arith.constant 0 : index
    %c0_2 = arith.constant 0 : index
    %5 = vector.load %arg7[%c0, %c0_2] : memref<32x128xf32, #tpu.memory_space<vmem>>, vector<32x128xf32>
    %c0_3 = arith.constant 0 : index
    %c0_4 = arith.constant 0 : index
    %c0_5 = arith.constant 0 : index
    %6 = vector.load %arg4[%c0_3, %c0_4, %c0_5] : memref<1x32x128xbf16, #tpu.memory_space<vmem>>, vector<1x32x128xbf16>
    %7 = vector.shape_cast %6 : vector<1x32x128xbf16> to vector<32x128xbf16>
    %c0_6 = arith.constant 0 : index
    %c0_7 = arith.constant 0 : index
    %c0_8 = arith.constant 0 : index
    %8 = vector.load %arg5[%c0_6, %c0_7, %c0_8] : memref<1x128x128xbf16, #tpu.memory_space<vmem>>, vector<1x128x128xbf16>
    %9 = vector.shape_cast %8 : vector<1x128x128xbf16> to vector<128x128xbf16>
    %cst = arith.constant dense<0.000000e+00> : vector<32x128xf32>
    %10 = tpu.matmul %7, %9, %cst {dimension_numbers = #tpu.dot_dimension_numbers<[1], [0], [0], [1], [0, 0, 1, 1], [], []>} : vector<32x128xbf16>, vector<128x128xbf16>, vector<32x128xf32> -> vector<32x128xf32>
    %11 = arith.addf %5, %10 : vector<32x128xf32>
    %c0_9 = arith.constant 0 : index
    %c0_10 = arith.constant 0 : index
    %12 = vector.load %arg7[%c0_9, %c0_10] : memref<32x128xf32, #tpu.memory_space<vmem>>, vector<32x128xf32>
    tpu.vector_store %arg7[%c0_9, %c0_10], %11 {strides = array<i32>} : memref<32x128xf32, #tpu.memory_space<vmem>>, vector<32x128xf32>,
    %c8_i32 = arith.constant 8 : i32
    %13 = arith.cmpi eq, %arg2, %c8_i32 : i32
    %c0_i32_11 = arith.constant 0 : i32
    %14 = arith.cmpi eq, %arg3, %c0_i32_11 : i32
    %15 = arith.andi %13, %14 : i1
    %16 = arith.extui %15 : i1 to i32
    %c0_i32_12 = arith.constant 0 : i32
    %17 = arith.cmpi ne, %16, %c0_i32_12 : i32
    scf.if %17 {
      %c0_13 = arith.constant 0 : index
      %c0_14 = arith.constant 0 : index
      %18 = vector.load %arg7[%c0_13, %c0_14] : memref<32x128xf32, #tpu.memory_space<vmem>>, vector<32x128xf32>
      %c0_15 = arith.constant 0 : index
      %c0_16 = arith.constant 0 : index
      %19 = vector.load %arg6[%c0_15, %c0_16] : memref<32x128xf32, #tpu.memory_space<vmem>>, vector<32x128xf32>
      tpu.vector_store %arg6[%c0_15, %c0_16], %18 {strides = array<i32>} : memref<32x128xf32, #tpu.memory_space<vmem>>, vector<32x128xf32>,
    } else {
    }
    return
  }
  func.func @transform_0(%arg0: i32, %arg1: i32, %arg2: i32, %arg3: i32) -> (i32, i32, i32) {
    %c0_i32 = arith.constant 0 : i32
    return %arg2, %arg0, %arg3 : i32, i32, i32
  }
  func.func @transform_1(%arg0: i32, %arg1: i32, %arg2: i32, %arg3: i32) -> (i32, i32, i32) {
    %c0_i32 = arith.constant 0 : i32
    return %arg2, %arg3, %arg1 : i32, i32, i32
  }
  func.func @transform_2(%arg0: i32, %arg1: i32, %arg2: i32, %arg3: i32) -> (i32, i32) {
    %c0_i32 = arith.constant 0 : i32
    return %arg0, %arg1 : i32, i32
  }
}

module attributes {stable_mosaic.version = 11 : i64} {
  func.func @kernel(%arg0: i32, %arg1: memref<9x32x128xf32, #tpu.memory_space<vmem>>, %arg2: memref<32x128xf32, #tpu.memory_space<vmem>>) attributes {dimension_semantics = [#tpu.dimension_semantics<parallel>], iteration_bounds = array<i64: 1>, scalar_prefetch = 0 : i64, scratch_operands = 0 : i64, tpu.core_type = #tpu.core_type<tc>, window_params = [{transform_indices = @transform_0, window_bounds = array<i64: 9, 32, 128>}, {transform_indices = @transform_1, window_bounds = array<i64: 32, 128>}]} {
    %c0 = arith.constant 0 : index
    %c0_0 = arith.constant 0 : index
    %c0_1 = arith.constant 0 : index
    %0 = vector.load %arg1[%c0, %c0_0, %c0_1] : memref<9x32x128xf32, #tpu.memory_space<vmem>>, vector<1x32x128xf32>
    %1 = vector.shape_cast %0 : vector<1x32x128xf32> to vector<32x128xf32>
    %c1 = arith.constant 1 : index
    %c0_2 = arith.constant 0 : index
    %c0_3 = arith.constant 0 : index
    %2 = vector.load %arg1[%c1, %c0_2, %c0_3] : memref<9x32x128xf32, #tpu.memory_space<vmem>>, vector<1x32x128xf32>
    %3 = vector.shape_cast %2 : vector<1x32x128xf32> to vector<32x128xf32>
    %4 = arith.maximumf %1, %3 : vector<32x128xf32>
    %c2 = arith.constant 2 : index
    %c0_4 = arith.constant 0 : index
    %c0_5 = arith.constant 0 : index
    %5 = vector.load %arg1[%c2, %c0_4, %c0_5] : memref<9x32x128xf32, #tpu.memory_space<vmem>>, vector<1x32x128xf32>
    %6 = vector.shape_cast %5 : vector<1x32x128xf32> to vector<32x128xf32>
    %7 = arith.maximumf %4, %6 : vector<32x128xf32>
    %c3 = arith.constant 3 : index
    %c0_6 = arith.constant 0 : index
    %c0_7 = arith.constant 0 : index
    %8 = vector.load %arg1[%c3, %c0_6, %c0_7] : memref<9x32x128xf32, #tpu.memory_space<vmem>>, vector<1x32x128xf32>
    %9 = vector.shape_cast %8 : vector<1x32x128xf32> to vector<32x128xf32>
    %10 = arith.maximumf %7, %9 : vector<32x128xf32>
    %c4 = arith.constant 4 : index
    %c0_8 = arith.constant 0 : index
    %c0_9 = arith.constant 0 : index
    %11 = vector.load %arg1[%c4, %c0_8, %c0_9] : memref<9x32x128xf32, #tpu.memory_space<vmem>>, vector<1x32x128xf32>
    %12 = vector.shape_cast %11 : vector<1x32x128xf32> to vector<32x128xf32>
    %13 = arith.maximumf %10, %12 : vector<32x128xf32>
    %c5 = arith.constant 5 : index
    %c0_10 = arith.constant 0 : index
    %c0_11 = arith.constant 0 : index
    %14 = vector.load %arg1[%c5, %c0_10, %c0_11] : memref<9x32x128xf32, #tpu.memory_space<vmem>>, vector<1x32x128xf32>
    %15 = vector.shape_cast %14 : vector<1x32x128xf32> to vector<32x128xf32>
    %16 = arith.maximumf %13, %15 : vector<32x128xf32>
    %c6 = arith.constant 6 : index
    %c0_12 = arith.constant 0 : index
    %c0_13 = arith.constant 0 : index
    %17 = vector.load %arg1[%c6, %c0_12, %c0_13] : memref<9x32x128xf32, #tpu.memory_space<vmem>>, vector<1x32x128xf32>
    %18 = vector.shape_cast %17 : vector<1x32x128xf32> to vector<32x128xf32>
    %19 = arith.maximumf %16, %18 : vector<32x128xf32>
    %c7 = arith.constant 7 : index
    %c0_14 = arith.constant 0 : index
    %c0_15 = arith.constant 0 : index
    %20 = vector.load %arg1[%c7, %c0_14, %c0_15] : memref<9x32x128xf32, #tpu.memory_space<vmem>>, vector<1x32x128xf32>
    %21 = vector.shape_cast %20 : vector<1x32x128xf32> to vector<32x128xf32>
    %22 = arith.maximumf %19, %21 : vector<32x128xf32>
    %c8 = arith.constant 8 : index
    %c0_16 = arith.constant 0 : index
    %c0_17 = arith.constant 0 : index
    %23 = vector.load %arg1[%c8, %c0_16, %c0_17] : memref<9x32x128xf32, #tpu.memory_space<vmem>>, vector<1x32x128xf32>
    %24 = vector.shape_cast %23 : vector<1x32x128xf32> to vector<32x128xf32>
    %25 = arith.maximumf %22, %24 : vector<32x128xf32>
    %c0_18 = arith.constant 0 : index
    %c0_19 = arith.constant 0 : index
    %26 = vector.load %arg2[%c0_18, %c0_19] : memref<32x128xf32, #tpu.memory_space<vmem>>, vector<32x128xf32>
    tpu.vector_store %arg2[%c0_18, %c0_19], %25 {strides = array<i32>} : memref<32x128xf32, #tpu.memory_space<vmem>>, vector<32x128xf32>,
    return
  }
  func.func @transform_0(%arg0: i32) -> (i32, i32, i32) {
    %c0_i32 = arith.constant 0 : i32
    %c0_i32_0 = arith.constant 0 : i32
    %c0_i32_1 = arith.constant 0 : i32
    return %c0_i32, %arg0, %c0_i32_0 : i32, i32, i32
  }
  func.func @transform_1(%arg0: i32) -> (i32, i32) {
    %c0_i32 = arith.constant 0 : i32
    %c0_i32_0 = arith.constant 0 : i32
    return %arg0, %c0_i32 : i32, i32
  }
}

module attributes {stable_mosaic.version = 11 : i64} {
  func.func @_conv_matmul_kernel(%arg0: i32, %arg1: i32, %arg2: i32, %arg3: i32, %arg4: memref<1x16x128xbf16, #tpu.memory_space<vmem>>, %arg5: memref<1x128x128xbf16, #tpu.memory_space<vmem>>, %arg6: memref<16x128xf32, #tpu.memory_space<vmem>>, %arg7: memref<16x128xf32, #tpu.memory_space<vmem>>) attributes {dimension_semantics = [#tpu.dimension_semantics<parallel>, #tpu.dimension_semantics<parallel>, #tpu.dimension_semantics<arbitrary>, #tpu.dimension_semantics<arbitrary>], iteration_bounds = array<i64: 1, 1, 1, 1>, scalar_prefetch = 0 : i64, scratch_operands = 1 : i64, tpu.core_type = #tpu.core_type<tc>, window_params = [{transform_indices = @transform_0, window_bounds = array<i64: 1, 16, 128>}, {transform_indices = @transform_1, window_bounds = array<i64: 1, 128, 128>}, {transform_indices = @transform_2, window_bounds = array<i64: 16, 128>}]} {
    %c0_i32 = arith.constant 0 : i32
    %0 = arith.cmpi eq, %arg2, %c0_i32 : i32
    %c0_i32_0 = arith.constant 0 : i32
    %1 = arith.cmpi eq, %arg3, %c0_i32_0 : i32
    %2 = arith.andi %0, %1 : i1
    %3 = arith.extui %2 : i1 to i32
    %c0_i32_1 = arith.constant 0 : i32
    %4 = arith.cmpi ne, %3, %c0_i32_1 : i32
    scf.if %4 {
      %cst_14 = arith.constant 0.000000e+00 : f32
      %18 = vector.broadcast %cst_14 : f32 to vector<16x128xf32>
      %c0_15 = arith.constant 0 : index
      %c0_16 = arith.constant 0 : index
      %19 = vector.load %arg7[%c0_15, %c0_16] : memref<16x128xf32, #tpu.memory_space<vmem>>, vector<16x128xf32>
      tpu.vector_store %arg7[%c0_15, %c0_16], %18 {strides = array<i32>} : memref<16x128xf32, #tpu.memory_space<vmem>>, vector<16x128xf32>,
    } else {
    }
    %c0 = arith.constant 0 : index
    %c0_2 = arith.constant 0 : index
    %5 = vector.load %arg7[%c0, %c0_2] : memref<16x128xf32, #tpu.memory_space<vmem>>, vector<16x128xf32>
    %c0_3 = arith.constant 0 : index
    %c0_4 = arith.constant 0 : index
    %c0_5 = arith.constant 0 : index
    %6 = vector.load %arg4[%c0_3, %c0_4, %c0_5] : memref<1x16x128xbf16, #tpu.memory_space<vmem>>, vector<1x16x128xbf16>
    %7 = vector.shape_cast %6 : vector<1x16x128xbf16> to vector<16x128xbf16>
    %c0_6 = arith.constant 0 : index
    %c0_7 = arith.constant 0 : index
    %c0_8 = arith.constant 0 : index
    %8 = vector.load %arg5[%c0_6, %c0_7, %c0_8] : memref<1x128x128xbf16, #tpu.memory_space<vmem>>, vector<1x128x128xbf16>
    %9 = vector.shape_cast %8 : vector<1x128x128xbf16> to vector<128x128xbf16>
    %cst = arith.constant dense<0.000000e+00> : vector<16x128xf32>
    %10 = tpu.matmul %7, %9, %cst {dimension_numbers = #tpu.dot_dimension_numbers<[1], [0], [0], [1], [0, 0, 1, 1], [], []>} : vector<16x128xbf16>, vector<128x128xbf16>, vector<16x128xf32> -> vector<16x128xf32>
    %11 = arith.addf %5, %10 : vector<16x128xf32>
    %c0_9 = arith.constant 0 : index
    %c0_10 = arith.constant 0 : index
    %12 = vector.load %arg7[%c0_9, %c0_10] : memref<16x128xf32, #tpu.memory_space<vmem>>, vector<16x128xf32>
    tpu.vector_store %arg7[%c0_9, %c0_10], %11 {strides = array<i32>} : memref<16x128xf32, #tpu.memory_space<vmem>>, vector<16x128xf32>,
    %c0_i32_11 = arith.constant 0 : i32
    %13 = arith.cmpi eq, %arg2, %c0_i32_11 : i32
    %c0_i32_12 = arith.constant 0 : i32
    %14 = arith.cmpi eq, %arg3, %c0_i32_12 : i32
    %15 = arith.andi %13, %14 : i1
    %16 = arith.extui %15 : i1 to i32
    %c0_i32_13 = arith.constant 0 : i32
    %17 = arith.cmpi ne, %16, %c0_i32_13 : i32
    scf.if %17 {
      %c0_14 = arith.constant 0 : index
      %c0_15 = arith.constant 0 : index
      %18 = vector.load %arg7[%c0_14, %c0_15] : memref<16x128xf32, #tpu.memory_space<vmem>>, vector<16x128xf32>
      %c0_16 = arith.constant 0 : index
      %c0_17 = arith.constant 0 : index
      %19 = vector.load %arg6[%c0_16, %c0_17] : memref<16x128xf32, #tpu.memory_space<vmem>>, vector<16x128xf32>
      tpu.vector_store %arg6[%c0_16, %c0_17], %18 {strides = array<i32>} : memref<16x128xf32, #tpu.memory_space<vmem>>, vector<16x128xf32>,
    } else {
    }
    return
  }
  func.func @transform_0(%arg0: i32, %arg1: i32, %arg2: i32, %arg3: i32) -> (i32, i32, i32) {
    %c0_i32 = arith.constant 0 : i32
    return %arg2, %arg0, %arg3 : i32, i32, i32
  }
  func.func @transform_1(%arg0: i32, %arg1: i32, %arg2: i32, %arg3: i32) -> (i32, i32, i32) {
    %c0_i32 = arith.constant 0 : i32
    return %arg2, %arg3, %arg1 : i32, i32, i32
  }
  func.func @transform_2(%arg0: i32, %arg1: i32, %arg2: i32, %arg3: i32) -> (i32, i32) {
    %c0_i32 = arith.constant 0 : i32
    return %arg0, %arg1 : i32, i32
  }
}

module attributes {stable_mosaic.version = 11 : i64} {
  func.func @kernel(%arg0: i32, %arg1: memref<8x128xf32, #tpu.memory_space<vmem>>, %arg2: memref<1x128xf32, #tpu.memory_space<vmem>>, %arg3: memref<1x128xf32, #tpu.memory_space<vmem>>, %arg4: memref<8x128xf32, #tpu.memory_space<vmem>>) attributes {dimension_semantics = [#tpu.dimension_semantics<parallel>], iteration_bounds = array<i64: 1>, scalar_prefetch = 0 : i64, scratch_operands = 0 : i64, tpu.core_type = #tpu.core_type<tc>, window_params = [{transform_indices = @transform_0, window_bounds = array<i64: 8, 128>}, {pipeline_mode = #tpu.pipeline_mode<synchronous>, transform_indices = @transform_1, window_bounds = array<i64: 1, 128>}, {pipeline_mode = #tpu.pipeline_mode<synchronous>, transform_indices = @transform_2, window_bounds = array<i64: 1, 128>}, {transform_indices = @transform_3, window_bounds = array<i64: 8, 128>}]} {
    %c0 = arith.constant 0 : index
    %c0_0 = arith.constant 0 : index
    %0 = vector.load %arg1[%c0, %c0_0] : memref<8x128xf32, #tpu.memory_space<vmem>>, vector<8x128xf32>
    %c0_1 = arith.constant 0 : index
    %c0_2 = arith.constant 0 : index
    %1 = vector.load %arg2[%c0_1, %c0_2] : memref<1x128xf32, #tpu.memory_space<vmem>>, vector<1x128xf32>
    %2 = vector.broadcast %1 : vector<1x128xf32> to vector<8x128xf32>
    %3 = arith.mulf %0, %2 : vector<8x128xf32>
    %c0_3 = arith.constant 0 : index
    %c0_4 = arith.constant 0 : index
    %4 = vector.load %arg3[%c0_3, %c0_4] : memref<1x128xf32, #tpu.memory_space<vmem>>, vector<1x128xf32>
    %5 = vector.broadcast %4 : vector<1x128xf32> to vector<8x128xf32>
    %6 = arith.addf %3, %5 : vector<8x128xf32>
    %c0_5 = arith.constant 0 : index
    %c0_6 = arith.constant 0 : index
    %7 = vector.load %arg4[%c0_5, %c0_6] : memref<8x128xf32, #tpu.memory_space<vmem>>, vector<8x128xf32>
    tpu.vector_store %arg4[%c0_5, %c0_6], %6 {strides = array<i32>} : memref<8x128xf32, #tpu.memory_space<vmem>>, vector<8x128xf32>,
    return
  }
  func.func @transform_0(%arg0: i32) -> (i32, i32) {
    %c0_i32 = arith.constant 0 : i32
    %c0_i32_0 = arith.constant 0 : i32
    return %arg0, %c0_i32 : i32, i32
  }
  func.func @transform_1(%arg0: i32) -> (i32, i32) {
    %c0_i32 = arith.constant 0 : i32
    %c0_i32_0 = arith.constant 0 : i32
    %c0_i32_1 = arith.constant 0 : i32
    return %c0_i32, %c0_i32_0 : i32, i32
  }
  func.func @transform_2(%arg0: i32) -> (i32, i32) {
    %c0_i32 = arith.constant 0 : i32
    %c0_i32_0 = arith.constant 0 : i32
    %c0_i32_1 = arith.constant 0 : i32
    return %c0_i32, %c0_i32_0 : i32, i32
  }
  func.func @transform_3(%arg0: i32) -> (i32, i32) {
    %c0_i32 = arith.constant 0 : i32
    %c0_i32_0 = arith.constant 0 : i32
    return %arg0, %c0_i32 : i32, i32
  }
}

module attributes {stable_mosaic.version = 11 : i64} {
  func.func @_dw_mac_kernel(%arg0: i32, %arg1: memref<9x8x128xf32, #tpu.memory_space<vmem>>, %arg2: memref<9x1x128xf32, #tpu.memory_space<vmem>>, %arg3: memref<8x128xf32, #tpu.memory_space<vmem>>) attributes {dimension_semantics = [#tpu.dimension_semantics<parallel>], iteration_bounds = array<i64: 1>, scalar_prefetch = 0 : i64, scratch_operands = 0 : i64, tpu.core_type = #tpu.core_type<tc>, window_params = [{transform_indices = @transform_0, window_bounds = array<i64: 9, 8, 128>}, {pipeline_mode = #tpu.pipeline_mode<synchronous>, transform_indices = @transform_1, window_bounds = array<i64: 9, 1, 128>}, {transform_indices = @transform_2, window_bounds = array<i64: 8, 128>}]} {
    %c0 = arith.constant 0 : index
    %c0_0 = arith.constant 0 : index
    %c0_1 = arith.constant 0 : index
    %0 = vector.load %arg1[%c0, %c0_0, %c0_1] : memref<9x8x128xf32, #tpu.memory_space<vmem>>, vector<1x8x128xf32>
    %1 = vector.shape_cast %0 : vector<1x8x128xf32> to vector<8x128xf32>
    %c0_2 = arith.constant 0 : index
    %c0_3 = arith.constant 0 : index
    %c0_4 = arith.constant 0 : index
    %2 = vector.load %arg2[%c0_2, %c0_3, %c0_4] : memref<9x1x128xf32, #tpu.memory_space<vmem>>, vector<1x1x128xf32>
    %3 = vector.shape_cast %2 : vector<1x1x128xf32> to vector<1x128xf32>
    %4 = vector.broadcast %3 : vector<1x128xf32> to vector<8x128xf32>
    %5 = arith.mulf %1, %4 : vector<8x128xf32>
    %c1 = arith.constant 1 : index
    %c0_5 = arith.constant 0 : index
    %c0_6 = arith.constant 0 : index
    %6 = vector.load %arg1[%c1, %c0_5, %c0_6] : memref<9x8x128xf32, #tpu.memory_space<vmem>>, vector<1x8x128xf32>
    %7 = vector.shape_cast %6 : vector<1x8x128xf32> to vector<8x128xf32>
    %c1_7 = arith.constant 1 : index
    %c0_8 = arith.constant 0 : index
    %c0_9 = arith.constant 0 : index
    %8 = vector.load %arg2[%c1_7, %c0_8, %c0_9] : memref<9x1x128xf32, #tpu.memory_space<vmem>>, vector<1x1x128xf32>
    %9 = vector.shape_cast %8 : vector<1x1x128xf32> to vector<1x128xf32>
    %10 = vector.broadcast %9 : vector<1x128xf32> to vector<8x128xf32>
    %11 = arith.mulf %7, %10 : vector<8x128xf32>
    %12 = arith.addf %5, %11 : vector<8x128xf32>
    %c2 = arith.constant 2 : index
    %c0_10 = arith.constant 0 : index
    %c0_11 = arith.constant 0 : index
    %13 = vector.load %arg1[%c2, %c0_10, %c0_11] : memref<9x8x128xf32, #tpu.memory_space<vmem>>, vector<1x8x128xf32>
    %14 = vector.shape_cast %13 : vector<1x8x128xf32> to vector<8x128xf32>
    %c2_12 = arith.constant 2 : index
    %c0_13 = arith.constant 0 : index
    %c0_14 = arith.constant 0 : index
    %15 = vector.load %arg2[%c2_12, %c0_13, %c0_14] : memref<9x1x128xf32, #tpu.memory_space<vmem>>, vector<1x1x128xf32>
    %16 = vector.shape_cast %15 : vector<1x1x128xf32> to vector<1x128xf32>
    %17 = vector.broadcast %16 : vector<1x128xf32> to vector<8x128xf32>
    %18 = arith.mulf %14, %17 : vector<8x128xf32>
    %19 = arith.addf %12, %18 : vector<8x128xf32>
    %c3 = arith.constant 3 : index
    %c0_15 = arith.constant 0 : index
    %c0_16 = arith.constant 0 : index
    %20 = vector.load %arg1[%c3, %c0_15, %c0_16] : memref<9x8x128xf32, #tpu.memory_space<vmem>>, vector<1x8x128xf32>
    %21 = vector.shape_cast %20 : vector<1x8x128xf32> to vector<8x128xf32>
    %c3_17 = arith.constant 3 : index
    %c0_18 = arith.constant 0 : index
    %c0_19 = arith.constant 0 : index
    %22 = vector.load %arg2[%c3_17, %c0_18, %c0_19] : memref<9x1x128xf32, #tpu.memory_space<vmem>>, vector<1x1x128xf32>
    %23 = vector.shape_cast %22 : vector<1x1x128xf32> to vector<1x128xf32>
    %24 = vector.broadcast %23 : vector<1x128xf32> to vector<8x128xf32>
    %25 = arith.mulf %21, %24 : vector<8x128xf32>
    %26 = arith.addf %19, %25 : vector<8x128xf32>
    %c4 = arith.constant 4 : index
    %c0_20 = arith.constant 0 : index
    %c0_21 = arith.constant 0 : index
    %27 = vector.load %arg1[%c4, %c0_20, %c0_21] : memref<9x8x128xf32, #tpu.memory_space<vmem>>, vector<1x8x128xf32>
    %28 = vector.shape_cast %27 : vector<1x8x128xf32> to vector<8x128xf32>
    %c4_22 = arith.constant 4 : index
    %c0_23 = arith.constant 0 : index
    %c0_24 = arith.constant 0 : index
    %29 = vector.load %arg2[%c4_22, %c0_23, %c0_24] : memref<9x1x128xf32, #tpu.memory_space<vmem>>, vector<1x1x128xf32>
    %30 = vector.shape_cast %29 : vector<1x1x128xf32> to vector<1x128xf32>
    %31 = vector.broadcast %30 : vector<1x128xf32> to vector<8x128xf32>
    %32 = arith.mulf %28, %31 : vector<8x128xf32>
    %33 = arith.addf %26, %32 : vector<8x128xf32>
    %c5 = arith.constant 5 : index
    %c0_25 = arith.constant 0 : index
    %c0_26 = arith.constant 0 : index
    %34 = vector.load %arg1[%c5, %c0_25, %c0_26] : memref<9x8x128xf32, #tpu.memory_space<vmem>>, vector<1x8x128xf32>
    %35 = vector.shape_cast %34 : vector<1x8x128xf32> to vector<8x128xf32>
    %c5_27 = arith.constant 5 : index
    %c0_28 = arith.constant 0 : index
    %c0_29 = arith.constant 0 : index
    %36 = vector.load %arg2[%c5_27, %c0_28, %c0_29] : memref<9x1x128xf32, #tpu.memory_space<vmem>>, vector<1x1x128xf32>
    %37 = vector.shape_cast %36 : vector<1x1x128xf32> to vector<1x128xf32>
    %38 = vector.broadcast %37 : vector<1x128xf32> to vector<8x128xf32>
    %39 = arith.mulf %35, %38 : vector<8x128xf32>
    %40 = arith.addf %33, %39 : vector<8x128xf32>
    %c6 = arith.constant 6 : index
    %c0_30 = arith.constant 0 : index
    %c0_31 = arith.constant 0 : index
    %41 = vector.load %arg1[%c6, %c0_30, %c0_31] : memref<9x8x128xf32, #tpu.memory_space<vmem>>, vector<1x8x128xf32>
    %42 = vector.shape_cast %41 : vector<1x8x128xf32> to vector<8x128xf32>
    %c6_32 = arith.constant 6 : index
    %c0_33 = arith.constant 0 : index
    %c0_34 = arith.constant 0 : index
    %43 = vector.load %arg2[%c6_32, %c0_33, %c0_34] : memref<9x1x128xf32, #tpu.memory_space<vmem>>, vector<1x1x128xf32>
    %44 = vector.shape_cast %43 : vector<1x1x128xf32> to vector<1x128xf32>
    %45 = vector.broadcast %44 : vector<1x128xf32> to vector<8x128xf32>
    %46 = arith.mulf %42, %45 : vector<8x128xf32>
    %47 = arith.addf %40, %46 : vector<8x128xf32>
    %c7 = arith.constant 7 : index
    %c0_35 = arith.constant 0 : index
    %c0_36 = arith.constant 0 : index
    %48 = vector.load %arg1[%c7, %c0_35, %c0_36] : memref<9x8x128xf32, #tpu.memory_space<vmem>>, vector<1x8x128xf32>
    %49 = vector.shape_cast %48 : vector<1x8x128xf32> to vector<8x128xf32>
    %c7_37 = arith.constant 7 : index
    %c0_38 = arith.constant 0 : index
    %c0_39 = arith.constant 0 : index
    %50 = vector.load %arg2[%c7_37, %c0_38, %c0_39] : memref<9x1x128xf32, #tpu.memory_space<vmem>>, vector<1x1x128xf32>
    %51 = vector.shape_cast %50 : vector<1x1x128xf32> to vector<1x128xf32>
    %52 = vector.broadcast %51 : vector<1x128xf32> to vector<8x128xf32>
    %53 = arith.mulf %49, %52 : vector<8x128xf32>
    %54 = arith.addf %47, %53 : vector<8x128xf32>
    %c8 = arith.constant 8 : index
    %c0_40 = arith.constant 0 : index
    %c0_41 = arith.constant 0 : index
    %55 = vector.load %arg1[%c8, %c0_40, %c0_41] : memref<9x8x128xf32, #tpu.memory_space<vmem>>, vector<1x8x128xf32>
    %56 = vector.shape_cast %55 : vector<1x8x128xf32> to vector<8x128xf32>
    %c8_42 = arith.constant 8 : index
    %c0_43 = arith.constant 0 : index
    %c0_44 = arith.constant 0 : index
    %57 = vector.load %arg2[%c8_42, %c0_43, %c0_44] : memref<9x1x128xf32, #tpu.memory_space<vmem>>, vector<1x1x128xf32>
    %58 = vector.shape_cast %57 : vector<1x1x128xf32> to vector<1x128xf32>
    %59 = vector.broadcast %58 : vector<1x128xf32> to vector<8x128xf32>
    %60 = arith.mulf %56, %59 : vector<8x128xf32>
    %61 = arith.addf %54, %60 : vector<8x128xf32>
    %c0_45 = arith.constant 0 : index
    %c0_46 = arith.constant 0 : index
    %62 = vector.load %arg3[%c0_45, %c0_46] : memref<8x128xf32, #tpu.memory_space<vmem>>, vector<8x128xf32>
    tpu.vector_store %arg3[%c0_45, %c0_46], %61 {strides = array<i32>} : memref<8x128xf32, #tpu.memory_space<vmem>>, vector<8x128xf32>,
    return
  }
  func.func @transform_0(%arg0: i32) -> (i32, i32, i32) {
    %c0_i32 = arith.constant 0 : i32
    %c0_i32_0 = arith.constant 0 : i32
    %c0_i32_1 = arith.constant 0 : i32
    return %c0_i32, %arg0, %c0_i32_0 : i32, i32, i32
  }
  func.func @transform_1(%arg0: i32) -> (i32, i32, i32) {
    %c0_i32 = arith.constant 0 : i32
    %c0_i32_0 = arith.constant 0 : i32
    %c0_i32_1 = arith.constant 0 : i32
    %c0_i32_2 = arith.constant 0 : i32
    return %c0_i32, %c0_i32_0, %c0_i32_1 : i32, i32, i32
  }
  func.func @transform_2(%arg0: i32) -> (i32, i32) {
    %c0_i32 = arith.constant 0 : i32
    %c0_i32_0 = arith.constant 0 : i32
    return %arg0, %c0_i32 : i32, i32
  }
}

module attributes {stable_mosaic.version = 11 : i64} {
  func.func @kernel(%arg0: i32, %arg1: memref<8x128xf32, #tpu.memory_space<vmem>>, %arg2: memref<1x128xf32, #tpu.memory_space<vmem>>, %arg3: memref<1x128xf32, #tpu.memory_space<vmem>>, %arg4: memref<8x128xf32, #tpu.memory_space<vmem>>) attributes {dimension_semantics = [#tpu.dimension_semantics<parallel>], iteration_bounds = array<i64: 1>, scalar_prefetch = 0 : i64, scratch_operands = 0 : i64, tpu.core_type = #tpu.core_type<tc>, window_params = [{transform_indices = @transform_0, window_bounds = array<i64: 8, 128>}, {pipeline_mode = #tpu.pipeline_mode<synchronous>, transform_indices = @transform_1, window_bounds = array<i64: 1, 128>}, {pipeline_mode = #tpu.pipeline_mode<synchronous>, transform_indices = @transform_2, window_bounds = array<i64: 1, 128>}, {transform_indices = @transform_3, window_bounds = array<i64: 8, 128>}]} {
    %c0 = arith.constant 0 : index
    %c0_0 = arith.constant 0 : index
    %0 = vector.load %arg1[%c0, %c0_0] : memref<8x128xf32, #tpu.memory_space<vmem>>, vector<8x128xf32>
    %c0_1 = arith.constant 0 : index
    %c0_2 = arith.constant 0 : index
    %1 = vector.load %arg2[%c0_1, %c0_2] : memref<1x128xf32, #tpu.memory_space<vmem>>, vector<1x128xf32>
    %2 = vector.broadcast %1 : vector<1x128xf32> to vector<8x128xf32>
    %3 = arith.mulf %0, %2 : vector<8x128xf32>
    %c0_3 = arith.constant 0 : index
    %c0_4 = arith.constant 0 : index
    %4 = vector.load %arg3[%c0_3, %c0_4] : memref<1x128xf32, #tpu.memory_space<vmem>>, vector<1x128xf32>
    %5 = vector.broadcast %4 : vector<1x128xf32> to vector<8x128xf32>
    %6 = arith.addf %3, %5 : vector<8x128xf32>
    %cst = arith.constant 0.000000e+00 : f32
    %7 = vector.broadcast %cst : f32 to vector<8x128xf32>
    %8 = arith.maximumf %6, %7 : vector<8x128xf32>
    %c0_5 = arith.constant 0 : index
    %c0_6 = arith.constant 0 : index
    %9 = vector.load %arg4[%c0_5, %c0_6] : memref<8x128xf32, #tpu.memory_space<vmem>>, vector<8x128xf32>
    tpu.vector_store %arg4[%c0_5, %c0_6], %8 {strides = array<i32>} : memref<8x128xf32, #tpu.memory_space<vmem>>, vector<8x128xf32>,
    return
  }
  func.func @transform_0(%arg0: i32) -> (i32, i32) {
    %c0_i32 = arith.constant 0 : i32
    %c0_i32_0 = arith.constant 0 : i32
    return %arg0, %c0_i32 : i32, i32
  }
  func.func @transform_1(%arg0: i32) -> (i32, i32) {
    %c0_i32 = arith.constant 0 : i32
    %c0_i32_0 = arith.constant 0 : i32
    %c0_i32_1 = arith.constant 0 : i32
    return %c0_i32, %c0_i32_0 : i32, i32
  }
  func.func @transform_2(%arg0: i32) -> (i32, i32) {
    %c0_i32 = arith.constant 0 : i32
    %c0_i32_0 = arith.constant 0 : i32
    %c0_i32_1 = arith.constant 0 : i32
    return %c0_i32, %c0_i32_0 : i32, i32
  }
  func.func @transform_3(%arg0: i32) -> (i32, i32) {
    %c0_i32 = arith.constant 0 : i32
    %c0_i32_0 = arith.constant 0 : i32
    return %arg0, %c0_i32 : i32, i32
  }
}

module attributes {stable_mosaic.version = 11 : i64} {
  func.func @kernel(%arg0: i32, %arg1: memref<9x8x128xf32, #tpu.memory_space<vmem>>, %arg2: memref<8x128xf32, #tpu.memory_space<vmem>>) attributes {dimension_semantics = [#tpu.dimension_semantics<parallel>], iteration_bounds = array<i64: 1>, scalar_prefetch = 0 : i64, scratch_operands = 0 : i64, tpu.core_type = #tpu.core_type<tc>, window_params = [{transform_indices = @transform_0, window_bounds = array<i64: 9, 8, 128>}, {transform_indices = @transform_1, window_bounds = array<i64: 8, 128>}]} {
    %c0 = arith.constant 0 : index
    %c0_0 = arith.constant 0 : index
    %c0_1 = arith.constant 0 : index
    %0 = vector.load %arg1[%c0, %c0_0, %c0_1] : memref<9x8x128xf32, #tpu.memory_space<vmem>>, vector<1x8x128xf32>
    %1 = vector.shape_cast %0 : vector<1x8x128xf32> to vector<8x128xf32>
    %c1 = arith.constant 1 : index
    %c0_2 = arith.constant 0 : index
    %c0_3 = arith.constant 0 : index
    %2 = vector.load %arg1[%c1, %c0_2, %c0_3] : memref<9x8x128xf32, #tpu.memory_space<vmem>>, vector<1x8x128xf32>
    %3 = vector.shape_cast %2 : vector<1x8x128xf32> to vector<8x128xf32>
    %4 = arith.addf %1, %3 : vector<8x128xf32>
    %c2 = arith.constant 2 : index
    %c0_4 = arith.constant 0 : index
    %c0_5 = arith.constant 0 : index
    %5 = vector.load %arg1[%c2, %c0_4, %c0_5] : memref<9x8x128xf32, #tpu.memory_space<vmem>>, vector<1x8x128xf32>
    %6 = vector.shape_cast %5 : vector<1x8x128xf32> to vector<8x128xf32>
    %7 = arith.addf %4, %6 : vector<8x128xf32>
    %c3 = arith.constant 3 : index
    %c0_6 = arith.constant 0 : index
    %c0_7 = arith.constant 0 : index
    %8 = vector.load %arg1[%c3, %c0_6, %c0_7] : memref<9x8x128xf32, #tpu.memory_space<vmem>>, vector<1x8x128xf32>
    %9 = vector.shape_cast %8 : vector<1x8x128xf32> to vector<8x128xf32>
    %10 = arith.addf %7, %9 : vector<8x128xf32>
    %c4 = arith.constant 4 : index
    %c0_8 = arith.constant 0 : index
    %c0_9 = arith.constant 0 : index
    %11 = vector.load %arg1[%c4, %c0_8, %c0_9] : memref<9x8x128xf32, #tpu.memory_space<vmem>>, vector<1x8x128xf32>
    %12 = vector.shape_cast %11 : vector<1x8x128xf32> to vector<8x128xf32>
    %13 = arith.addf %10, %12 : vector<8x128xf32>
    %c5 = arith.constant 5 : index
    %c0_10 = arith.constant 0 : index
    %c0_11 = arith.constant 0 : index
    %14 = vector.load %arg1[%c5, %c0_10, %c0_11] : memref<9x8x128xf32, #tpu.memory_space<vmem>>, vector<1x8x128xf32>
    %15 = vector.shape_cast %14 : vector<1x8x128xf32> to vector<8x128xf32>
    %16 = arith.addf %13, %15 : vector<8x128xf32>
    %c6 = arith.constant 6 : index
    %c0_12 = arith.constant 0 : index
    %c0_13 = arith.constant 0 : index
    %17 = vector.load %arg1[%c6, %c0_12, %c0_13] : memref<9x8x128xf32, #tpu.memory_space<vmem>>, vector<1x8x128xf32>
    %18 = vector.shape_cast %17 : vector<1x8x128xf32> to vector<8x128xf32>
    %19 = arith.addf %16, %18 : vector<8x128xf32>
    %c7 = arith.constant 7 : index
    %c0_14 = arith.constant 0 : index
    %c0_15 = arith.constant 0 : index
    %20 = vector.load %arg1[%c7, %c0_14, %c0_15] : memref<9x8x128xf32, #tpu.memory_space<vmem>>, vector<1x8x128xf32>
    %21 = vector.shape_cast %20 : vector<1x8x128xf32> to vector<8x128xf32>
    %22 = arith.addf %19, %21 : vector<8x128xf32>
    %c8 = arith.constant 8 : index
    %c0_16 = arith.constant 0 : index
    %c0_17 = arith.constant 0 : index
    %23 = vector.load %arg1[%c8, %c0_16, %c0_17] : memref<9x8x128xf32, #tpu.memory_space<vmem>>, vector<1x8x128xf32>
    %24 = vector.shape_cast %23 : vector<1x8x128xf32> to vector<8x128xf32>
    %25 = arith.addf %22, %24 : vector<8x128xf32>
    %c0_18 = arith.constant 0 : index
    %c0_19 = arith.constant 0 : index
    %26 = vector.load %arg2[%c0_18, %c0_19] : memref<8x128xf32, #tpu.memory_space<vmem>>, vector<8x128xf32>
    tpu.vector_store %arg2[%c0_18, %c0_19], %25 {strides = array<i32>} : memref<8x128xf32, #tpu.memory_space<vmem>>, vector<8x128xf32>,
    return
  }
  func.func @transform_0(%arg0: i32) -> (i32, i32, i32) {
    %c0_i32 = arith.constant 0 : i32
    %c0_i32_0 = arith.constant 0 : i32
    %c0_i32_1 = arith.constant 0 : i32
    return %c0_i32, %arg0, %c0_i32_0 : i32, i32, i32
  }
  func.func @transform_1(%arg0: i32) -> (i32, i32) {
    %c0_i32 = arith.constant 0 : i32
    %c0_i32_0 = arith.constant 0 : i32
    return %arg0, %c0_i32 : i32, i32
  }
}

module attributes {stable_mosaic.version = 11 : i64} {
  func.func @kernel(%arg0: i32, %arg1: memref<9x8x128xf32, #tpu.memory_space<vmem>>, %arg2: memref<8x128xf32, #tpu.memory_space<vmem>>) attributes {dimension_semantics = [#tpu.dimension_semantics<parallel>], iteration_bounds = array<i64: 1>, scalar_prefetch = 0 : i64, scratch_operands = 0 : i64, tpu.core_type = #tpu.core_type<tc>, window_params = [{transform_indices = @transform_0, window_bounds = array<i64: 9, 8, 128>}, {transform_indices = @transform_1, window_bounds = array<i64: 8, 128>}]} {
    %c0 = arith.constant 0 : index
    %c0_0 = arith.constant 0 : index
    %c0_1 = arith.constant 0 : index
    %0 = vector.load %arg1[%c0, %c0_0, %c0_1] : memref<9x8x128xf32, #tpu.memory_space<vmem>>, vector<1x8x128xf32>
    %1 = vector.shape_cast %0 : vector<1x8x128xf32> to vector<8x128xf32>
    %c1 = arith.constant 1 : index
    %c0_2 = arith.constant 0 : index
    %c0_3 = arith.constant 0 : index
    %2 = vector.load %arg1[%c1, %c0_2, %c0_3] : memref<9x8x128xf32, #tpu.memory_space<vmem>>, vector<1x8x128xf32>
    %3 = vector.shape_cast %2 : vector<1x8x128xf32> to vector<8x128xf32>
    %4 = arith.maximumf %1, %3 : vector<8x128xf32>
    %c2 = arith.constant 2 : index
    %c0_4 = arith.constant 0 : index
    %c0_5 = arith.constant 0 : index
    %5 = vector.load %arg1[%c2, %c0_4, %c0_5] : memref<9x8x128xf32, #tpu.memory_space<vmem>>, vector<1x8x128xf32>
    %6 = vector.shape_cast %5 : vector<1x8x128xf32> to vector<8x128xf32>
    %7 = arith.maximumf %4, %6 : vector<8x128xf32>
    %c3 = arith.constant 3 : index
    %c0_6 = arith.constant 0 : index
    %c0_7 = arith.constant 0 : index
    %8 = vector.load %arg1[%c3, %c0_6, %c0_7] : memref<9x8x128xf32, #tpu.memory_space<vmem>>, vector<1x8x128xf32>
    %9 = vector.shape_cast %8 : vector<1x8x128xf32> to vector<8x128xf32>
    %10 = arith.maximumf %7, %9 : vector<8x128xf32>
    %c4 = arith.constant 4 : index
    %c0_8 = arith.constant 0 : index
    %c0_9 = arith.constant 0 : index
    %11 = vector.load %arg1[%c4, %c0_8, %c0_9] : memref<9x8x128xf32, #tpu.memory_space<vmem>>, vector<1x8x128xf32>
    %12 = vector.shape_cast %11 : vector<1x8x128xf32> to vector<8x128xf32>
    %13 = arith.maximumf %10, %12 : vector<8x128xf32>
    %c5 = arith.constant 5 : index
    %c0_10 = arith.constant 0 : index
    %c0_11 = arith.constant 0 : index
    %14 = vector.load %arg1[%c5, %c0_10, %c0_11] : memref<9x8x128xf32, #tpu.memory_space<vmem>>, vector<1x8x128xf32>
    %15 = vector.shape_cast %14 : vector<1x8x128xf32> to vector<8x128xf32>
    %16 = arith.maximumf %13, %15 : vector<8x128xf32>
    %c6 = arith.constant 6 : index
    %c0_12 = arith.constant 0 : index
    %c0_13 = arith.constant 0 : index
    %17 = vector.load %arg1[%c6, %c0_12, %c0_13] : memref<9x8x128xf32, #tpu.memory_space<vmem>>, vector<1x8x128xf32>
    %18 = vector.shape_cast %17 : vector<1x8x128xf32> to vector<8x128xf32>
    %19 = arith.maximumf %16, %18 : vector<8x128xf32>
    %c7 = arith.constant 7 : index
    %c0_14 = arith.constant 0 : index
    %c0_15 = arith.constant 0 : index
    %20 = vector.load %arg1[%c7, %c0_14, %c0_15] : memref<9x8x128xf32, #tpu.memory_space<vmem>>, vector<1x8x128xf32>
    %21 = vector.shape_cast %20 : vector<1x8x128xf32> to vector<8x128xf32>
    %22 = arith.maximumf %19, %21 : vector<8x128xf32>
    %c8 = arith.constant 8 : index
    %c0_16 = arith.constant 0 : index
    %c0_17 = arith.constant 0 : index
    %23 = vector.load %arg1[%c8, %c0_16, %c0_17] : memref<9x8x128xf32, #tpu.memory_space<vmem>>, vector<1x8x128xf32>
    %24 = vector.shape_cast %23 : vector<1x8x128xf32> to vector<8x128xf32>
    %25 = arith.maximumf %22, %24 : vector<8x128xf32>
    %c0_18 = arith.constant 0 : index
    %c0_19 = arith.constant 0 : index
    %26 = vector.load %arg2[%c0_18, %c0_19] : memref<8x128xf32, #tpu.memory_space<vmem>>, vector<8x128xf32>
    tpu.vector_store %arg2[%c0_18, %c0_19], %25 {strides = array<i32>} : memref<8x128xf32, #tpu.memory_space<vmem>>, vector<8x128xf32>,
    return
  }
  func.func @transform_0(%arg0: i32) -> (i32, i32, i32) {
    %c0_i32 = arith.constant 0 : i32
    %c0_i32_0 = arith.constant 0 : i32
    %c0_i32_1 = arith.constant 0 : i32
    return %c0_i32, %arg0, %c0_i32_0 : i32, i32, i32
  }
  func.func @transform_1(%arg0: i32) -> (i32, i32) {
    %c0_i32 = arith.constant 0 : i32
    %c0_i32_0 = arith.constant 0 : i32
    return %arg0, %c0_i32 : i32, i32
  }
}

</mosaic_0001>

<llo_original>
// kernel: forward.210
$region0: #{forward.210}
  #allocation0 [shape = 'u32[]', space=smem, size = 0x4, offset = 0x4, fixed_abs, tag = 'smem constant byte address 0x4 - core index']
  #allocation1 [shape = 'u32[144,128]{1,0:T(1,128)}', space=vmem, size = 0x12000, scoped, tag = 'internal scratch']
  #allocation2 [shape = 'f32[256,128]{1,0:T(8,128)}', space=vmem, size = 0x20000, scoped, tag = 'scratch operand']
  %s0 = inlined_call_operand.vmem [shape: bf16[9,512,128], index: 0, kind: input, shape index: {}]
  %s1 = inlined_call_operand.vmem [shape: bf16[9,128,128], index: 1, kind: input, shape index: {}]
  %s2 = inlined_call_operand.vmem [shape: f32[512,128], index: 2, kind: output, shape index: {}]
  %s3 = sld [smem:[#allocation0]]
  $region49: #{forward.210} parent=0
    _
  %s5 = ssub.s32 1, %s3
  %s6 = scalar_select 0, %s5, %s3
  loop: start=0, step=1, limit=20
  $region2: #{forward.210} parent=0 // loop_pre_header
    _
  $region3: #{forward.210} parent=0 // loop_header
    %s8 = sphi 0, %s12
    %p9 = scmp.ge.s32.totalorder %s8, 20
    %s15 = sphi 0, %s41
    %s16 = sphi 0, %s37
    %s17 = sphi 0, %s33
    %s18 = sphi 0, %s29
    %s19 = sphi 0, %s15
    %s20 = sphi 0, %s16
    %s21 = sphi 0, %s17
    %s22 = sphi 0, %s18
    %s23 = sphi 0, %s19
    %s24 = sphi 0, %s20
    %s25 = sphi 0, %s21
    %s26 = sphi 0, %s22
    %s48 = sphi 0, %s50
    %s51 = sphi 0, %s48
    %s52 = sphi 0, %s51
    %s68 = sphi 0, %s52
    %s78 = sphi 0, %s80
    %s81 = sphi 0, %s78
    %s82 = sphi 0, %s81
    %s98 = sphi 0, %s82
    %s106 = sphi 0, %s108
    %s109 = sphi 0, %s106
    %s110 = sphi 0, %s109
    %s126 = sphi 0, %s110
  $region4: #{forward.210} parent=0 // loop_header_branch
    %11 = sbr.rel (%p9) target = $region8
  $region5: #{forward.210} parent=0 // loop_body
    %s13 = ssub.s32 %s8, 1
    %s14 = ssub.s32 %s8, 2
    %s27 = sadd.s32 1, %s18
    %p28 = scmp.ge.s32.totalorder %s27, 1
    %s29 = scalar_select %p28, 0, %s27
    %s30 = sadd.s32 1, %s17
    %s31 = scalar_select %p28, %s30, %s17
    %p32 = scmp.ge.s32.totalorder %s31, 9
    %s33 = scalar_select %p32, 0, %s31
    %s34 = sadd.s32 1, %s16
    %s35 = scalar_select %p32, %s34, %s16
    %p36 = scmp.ge.s32.totalorder %s35, 1
    %s37 = scalar_select %p36, 0, %s35
    %s38 = sadd.s32 1, %s15
    %s39 = scalar_select %p36, %s38, %s15
    %p40 = scmp.ge.s32.totalorder %s39, 2
    %s41 = scalar_select %p40, 0, %s39
    %s42 = ssub.s32 %s17, %s33
    %s43 = ssub.s32 %s15, %s41
    %s44 = sor.u32 %s42, %s43
    %s45 = ssub.s32 %s18, %s29
    %s46 = sor.u32 %s44, %s45
    %p47 = scmp.eq.s32.totalorder %s46, 0
    %s49 = sadd.s32 %s48, 1
    %s50 = scalar_select %p47, %s48, %s49
    %p53 = pneg %p47
    %p54 = scmp.eq.s32.totalorder %s8, 17
    %p55 = por %p53, %p54
    %p56 = scmp.ne.s32.totalorder %s48, %s51
    %p57 = scmp.eq.s32.totalorder %s8, 0
    %p58 = por %p56, %p57
    %p59 = scmp.ne.s32.totalorder %s48, %s51
    %p60 = scmp.eq.s32.totalorder %s13, 17
    %p61 = por %p59, %p60
    %p62 = scmp.ne.s32.totalorder %s51, %s52
    %p63 = scmp.eq.s32.totalorder %s13, 0
    %p64 = por %p62, %p63
    %p65 = scmp.ne.s32.totalorder %s51, %s52
    %p66 = scmp.eq.s32.totalorder %s14, 17
    %p67 = por %p65, %p66
    %p69 = scmp.ne.s32.totalorder %s52, %s68
    %p70 = scmp.eq.s32.totalorder %s14, 0
    %p71 = por %p69, %p70
    %s72 = ssub.s32 %s17, %s33
    %s73 = ssub.s32 %s18, %s29
    %s74 = sor.u32 %s72, %s73
    %s75 = ssub.s32 %s16, %s37
    %s76 = sor.u32 %s74, %s75
    %p77 = scmp.eq.s32.totalorder %s76, 0
    %s79 = sadd.s32 %s78, 1
    %s80 = scalar_select %p77, %s78, %s79
    %p83 = pneg %p77
    %p84 = scmp.eq.s32.totalorder %s8, 17
    %p85 = por %p83, %p84
    %p86 = scmp.ne.s32.totalorder %s78, %s81
    %p87 = scmp.eq.s32.totalorder %s8, 0
    %p88 = por %p86, %p87
    %p89 = scmp.ne.s32.totalorder %s78, %s81
    %p90 = scmp.eq.s32.totalorder %s13, 17
    %p91 = por %p89, %p90
    %p92 = scmp.ne.s32.totalorder %s81, %s82
    %p93 = scmp.eq.s32.totalorder %s13, 0
    %p94 = por %p92, %p93
    %p95 = scmp.ne.s32.totalorder %s81, %s82
    %p96 = scmp.eq.s32.totalorder %s14, 17
    %p97 = por %p95, %p96
    %p99 = scmp.ne.s32.totalorder %s82, %s98
    %p100 = scmp.eq.s32.totalorder %s14, 0
    %p101 = por %p99, %p100
    %s102 = ssub.s32 %s15, %s41
    %s103 = ssub.s32 %s16, %s37
    %s104 = sor.u32 %s102, %s103
    %p105 = scmp.eq.s32.totalorder %s104, 0
    %s107 = sadd.s32 %s106, 1
    %s108 = scalar_select %p105, %s106, %s107
    %p111 = pneg %p105
    %p112 = scmp.eq.s32.totalorder %s8, 17
    %p113 = por %p111, %p112
    %p114 = scmp.ne.s32.totalorder %s106, %s109
    %p115 = scmp.eq.s32.totalorder %s8, 0
    %p116 = por %p114, %p115
    %p117 = scmp.ne.s32.totalorder %s106, %s109
    %p118 = scmp.eq.s32.totalorder %s13, 17
    %p119 = por %p117, %p118
    %p120 = scmp.ne.s32.totalorder %s109, %s110
    %p121 = scmp.eq.s32.totalorder %s13, 0
    %p122 = por %p120, %p121
    %p123 = scmp.ne.s32.totalorder %s109, %s110
    %p124 = scmp.eq.s32.totalorder %s14, 17
    %p125 = por %p123, %p124
    %p127 = scmp.ne.s32.totalorder %s110, %s126
    %p128 = scmp.eq.s32.totalorder %s14, 0
    %p129 = por %p127, %p128
    %p130 = scmp.le.s32.totalorder 1, %s8
    %p131 = scmp.lt.s32.totalorder %s8, 19
    %p132 = pnand %p130, %p131
    %p133 = pneg %p132
    // Predicated region
    $region9: #{forward.210} parent=5 // pred_check
      _
    $region10: #{forward.210} parent=5 // pred_check_branch
      %135 = sbr.rel (%p132) target = $region12
    $region11: #{forward.210} parent=5 // pred_region
      %s136 = ssub.s32 %s8, 1
    $region12: #{forward.210} parent=5 // pred_fallthru
      _
    %p137 = scmp.lt.s32.totalorder %s8, 18
    // Predicated region
    $region13: #{forward.210} parent=5 // pred_check
      %p138 = pneg %p137
    $region14: #{forward.210} parent=5 // pred_check_branch
      %140 = sbr.rel (%p138) target = $region16
    $region15: #{forward.210} parent=5 // pred_region
      // Predicated region
      $region17: #{forward.210} parent=15 // pred_check
        %p141 = pneg %p58
      $region18: #{forward.210} parent=15 // pred_check_branch
        %143 = sbr.rel (%p141) target = $region20
      $region19: #{forward.210} parent=15 // pred_region
        %s144 = smul.u32 32, %s15
        %p145 = scmp.lt.s32.totalorder %s17, 8
        %s146 = scalar_select %p145, %s17, 8
        %p147 = scmp.lt.s32.totalorder %s144, 63
        %s148 = scalar_select %p147, %s144, 63
        %p149 = scmp.lt.s32.totalorder %s18, 0
        %s150 = scalar_select %p149, %s18, 0
        %s151 = sadd.s32 %s150, %s148
        %s152 = smul.addr %s146, 64
        %s153 = sadd.s32 %s151, %s152
        %s154 = smul.addr %s153, 4
        %s155 = scalar_lea.vmem %s0, %s154
        %s156 = smul.u32 32, %s15
      $region20: #{forward.210} parent=15 // pred_fallthru
        _
      // Predicated region
      $region21: #{forward.210} parent=15 // pred_check
        %p157 = pneg %p88
      $region22: #{forward.210} parent=15 // pred_check_branch
        %159 = sbr.rel (%p157) target = $region24
      $region23: #{forward.210} parent=15 // pred_region
        %s160 = smul.u32 16, %s18
        %p161 = scmp.lt.s32.totalorder %s17, 8
        %s162 = scalar_select %p161, %s17, 8
        %p163 = scmp.lt.s32.totalorder %s160, 15
        %s164 = scalar_select %p163, %s160, 15
        %p165 = scmp.lt.s32.totalorder %s16, 0
        %s166 = scalar_select %p165, %s16, 0
        %s167 = sadd.s32 %s166, %s164
        %s168 = smul.addr %s162, 16
        %s169 = sadd.s32 %s167, %s168
        %s170 = smul.addr %s169, 4
        %s171 = scalar_lea.vmem %s1, %s170
        %s172 = smul.u32 16, %s18
      $region24: #{forward.210} parent=15 // pred_fallthru
        _
    $region16: #{forward.210} parent=5 // pred_fallthru
      _
    %p173 = scmp.le.s32.totalorder 1, %s8
    %p174 = scmp.lt.s32.totalorder %s8, 19
    %p175 = pnand %p173, %p174
    %p176 = pneg %p175
    // Predicated region
    $region25: #{forward.210} parent=5 // pred_check
      _
    $region26: #{forward.210} parent=5 // pred_check_branch
      %178 = sbr.rel (%p175) target = $region28
    $region27: #{forward.210} parent=5 // pred_region
      %s179 = ssub.s32 %s8, 1
      %s180 = smul.u32 32, %s19
      %p181 = scmp.lt.s32.totalorder %s21, 8
      %s182 = scalar_select %p181, %s21, 8
      %p183 = scmp.lt.s32.totalorder %s180, 63
      %s184 = scalar_select %p183, %s180, 63
      %p185 = scmp.lt.s32.totalorder %s22, 0
      %s186 = scalar_select %p185, %s22, 0
      %s187 = sadd.s32 %s186, %s184
      %s188 = smul.addr %s182, 64
      %s189 = sadd.s32 %s187, %s188
      %s190 = smul.addr %s189, 4
      %s191 = scalar_lea.vmem %s0, %s190
      %p192 = pneg %p64
      %p193 = pneg %p61
      %s194 = smul.u32 16, %s22
      %p195 = scmp.lt.s32.totalorder %s21, 8
      %s196 = scalar_select %p195, %s21, 8
      %p197 = scmp.lt.s32.totalorder %s194, 15
      %s198 = scalar_select %p197, %s194, 15
      %p199 = scmp.lt.s32.totalorder %s20, 0
      %s200 = scalar_select %p199, %s20, 0
      %s201 = sadd.s32 %s200, %s198
      %s202 = smul.addr %s196, 16
      %s203 = sadd.s32 %s201, %s202
      %s204 = smul.addr %s203, 4
      %s205 = scalar_lea.vmem %s1, %s204
      %p206 = pneg %p94
      %p207 = pneg %p91
      %p208 = pneg %p122
      %p209 = pneg %p119
      %s210 = smul.u32 32, %s19
      %p211 = scmp.lt.s32.totalorder %s210, 63
      %s212 = scalar_select %p211, %s210, 63
      %p213 = scmp.lt.s32.totalorder %s20, 0
      %s214 = scalar_select %p213, %s20, 0
      %s215 = sadd.s32 %s214, %s212
      %s216 = smul.addr %s215, 8
      %s217 = scalar_lea.vmem %s2, %s216
      %s218 = smul.u32 32, %s19
      %p219 = scmp.lt.s32.totalorder %s21, 8
      %s220 = scalar_select %p219, %s21, 8
      %p221 = scmp.lt.s32.totalorder %s218, 63
      %s222 = scalar_select %p221, %s218, 63
      %p223 = scmp.lt.s32.totalorder %s22, 0
      %s224 = scalar_select %p223, %s22, 0
      %s225 = sadd.s32 %s224, %s222
      %s226 = smul.addr %s220, 64
      %s227 = sadd.s32 %s225, %s226
      %s228 = smul.addr %s227, 4
      %s229 = scalar_lea.vmem %s0, %s228
      %s230 = smul.u32 32, %s19
      %s231 = smul.u32 16, %s22
      %p232 = scmp.lt.s32.totalorder %s21, 8
      %s233 = scalar_select %p232, %s21, 8
      %p234 = scmp.lt.s32.totalorder %s231, 15
      %s235 = scalar_select %p234, %s231, 15
      %p236 = scmp.lt.s32.totalorder %s20, 0
      %s237 = scalar_select %p236, %s20, 0
      %s238 = sadd.s32 %s237, %s235
      %s239 = smul.addr %s233, 16
      %s240 = sadd.s32 %s238, %s239
      %s241 = smul.addr %s240, 4
      %s242 = scalar_lea.vmem %s1, %s241
      %s243 = smul.u32 16, %s22
      %s244 = smul.u32 32, %s19
      %p245 = scmp.lt.s32.totalorder %s244, 63
      %s246 = scalar_select %p245, %s244, 63
      %p247 = scmp.lt.s32.totalorder %s20, 0
      %s248 = scalar_select %p247, %s20, 0
      %s249 = sadd.s32 %s248, %s246
      %s250 = smul.addr %s249, 8
      %s251 = scalar_lea.vmem %s2, %s250
      %s252 = smul.u32 32, %s19
      %p254 = scmp.eq.s32.totalorder %s21, 0
      %p255 = scmp.eq.s32.totalorder %s22, 0
      %p256 = pnand %p254, %p255
      %p257 = pneg %p256
      // Predicated region
      $region29: #{forward.210} parent=27 // pred_check
        _
      $region30: #{forward.210} parent=27 // pred_check_branch
        %259 = sbr.rel (%p256) target = $region32
      $region31: #{forward.210} parent=27 // pred_region
        %260 = vst [vmem:[#allocation2] sm:$0xff] 0.0
        %261 = vst [vmem:[#allocation2 + $0x8] sm:$0xff] 0.0
        %262 = vst [vmem:[#allocation2 + $0x10] sm:$0xff] 0.0
        %263 = vst [vmem:[#allocation2 + $0x18] sm:$0xff] 0.0
        %264 = vst [vmem:[#allocation2 + $0x20] sm:$0xff] 0.0
        %265 = vst [vmem:[#allocation2 + $0x28] sm:$0xff] 0.0
        %266 = vst [vmem:[#allocation2 + $0x30] sm:$0xff] 0.0
        %267 = vst [vmem:[#allocation2 + $0x38] sm:$0xff] 0.0
        %268 = vst [vmem:[#allocation2 + $0x40] sm:$0xff] 0.0
        %269 = vst [vmem:[#allocation2 + $0x48] sm:$0xff] 0.0
        %270 = vst [vmem:[#allocation2 + $0x50] sm:$0xff] 0.0
        %271 = vst [vmem:[#allocation2 + $0x58] sm:$0xff] 0.0
        %272 = vst [vmem:[#allocation2 + $0x60] sm:$0xff] 0.0
        %273 = vst [vmem:[#allocation2 + $0x68] sm:$0xff] 0.0
        %274 = vst [vmem:[#allocation2 + $0x70] sm:$0xff] 0.0
        %275 = vst [vmem:[#allocation2 + $0x78] sm:$0xff] 0.0
        %276 = vst [vmem:[#allocation2 + $0x80] sm:$0xff] 0.0
        %277 = vst [vmem:[#allocation2 + $0x88] sm:$0xff] 0.0
        %278 = vst [vmem:[#allocation2 + $0x90] sm:$0xff] 0.0
        %279 = vst [vmem:[#allocation2 + $0x98] sm:$0xff] 0.0
        %280 = vst [vmem:[#allocation2 + $0xa0] sm:$0xff] 0.0
        %281 = vst [vmem:[#allocation2 + $0xa8] sm:$0xff] 0.0
        %282 = vst [vmem:[#allocation2 + $0xb0] sm:$0xff] 0.0
        %283 = vst [vmem:[#allocation2 + $0xb8] sm:$0xff] 0.0
        %284 = vst [vmem:[#allocation2 + $0xc0] sm:$0xff] 0.0
        %285 = vst [vmem:[#allocation2 + $0xc8] sm:$0xff] 0.0
        %286 = vst [vmem:[#allocation2 + $0xd0] sm:$0xff] 0.0
        %287 = vst [vmem:[#allocation2 + $0xd8] sm:$0xff] 0.0
        %288 = vst [vmem:[#allocation2 + $0xe0] sm:$0xff] 0.0
        %289 = vst [vmem:[#allocation2 + $0xe8] sm:$0xff] 0.0
        %290 = vst [vmem:[#allocation2 + $0xf0] sm:$0xff] 0.0
        %291 = vst [vmem:[#allocation2 + $0xf8] sm:$0xff] 0.0
      $region32: #{forward.210} parent=27 // pred_fallthru
        _
      %v292 = vld [vmem:[#allocation2] sm:$0xff]
      %v293 = vld [vmem:[#allocation2 + $0x8] sm:$0xff]
      %v294 = vld [vmem:[#allocation2 + $0x10] sm:$0xff]
      %v295 = vld [vmem:[#allocation2 + $0x18] sm:$0xff]
      %v296 = vld [vmem:[#allocation2 + $0x20] sm:$0xff]
      %v297 = vld [vmem:[#allocation2 + $0x28] sm:$0xff]
      %v298 = vld [vmem:[#allocation2 + $0x30] sm:$0xff]
      %v299 = vld [vmem:[#allocation2 + $0x38] sm:$0xff]
      %v300 = vld [vmem:[#allocation2 + $0x40] sm:$0xff]
      %v301 = vld [vmem:[#allocation2 + $0x48] sm:$0xff]
      %v302 = vld [vmem:[#allocation2 + $0x50] sm:$0xff]
      %v303 = vld [vmem:[#allocation2 + $0x58] sm:$0xff]
      %v304 = vld [vmem:[#allocation2 + $0x60] sm:$0xff]
      %v305 = vld [vmem:[#allocation2 + $0x68] sm:$0xff]
      %v306 = vld [vmem:[#allocation2 + $0x70] sm:$0xff]
      %v307 = vld [vmem:[#allocation2 + $0x78] sm:$0xff]
      %v308 = vld [vmem:[#allocation2 + $0x80] sm:$0xff]
      %v309 = vld [vmem:[#allocation2 + $0x88] sm:$0xff]
      %v310 = vld [vmem:[#allocation2 + $0x90] sm:$0xff]
      %v311 = vld [vmem:[#allocation2 + $0x98] sm:$0xff]
      %v312 = vld [vmem:[#allocation2 + $0xa0] sm:$0xff]
      %v313 = vld [vmem:[#allocation2 + $0xa8] sm:$0xff]
      %v314 = vld [vmem:[#allocation2 + $0xb0] sm:$0xff]
      %v315 = vld [vmem:[#allocation2 + $0xb8] sm:$0xff]
      %v316 = vld [vmem:[#allocation2 + $0xc0] sm:$0xff]
      %v317 = vld [vmem:[#allocation2 + $0xc8] sm:$0xff]
      %v318 = vld [vmem:[#allocation2 + $0xd0] sm:$0xff]
      %v319 = vld [vmem:[#allocation2 + $0xd8] sm:$0xff]
      %v320 = vld [vmem:[#allocation2 + $0xe0] sm:$0xff]
      %v321 = vld [vmem:[#allocation2 + $0xe8] sm:$0xff]
      %v322 = vld [vmem:[#allocation2 + $0xf0] sm:$0xff]
      %v323 = vld [vmem:[#allocation2 + $0xf8] sm:$0xff]
      %v324 = vld [vmem:[%s229] sm:$0xf]
      %v325 = vld [vmem:[%s229 + $0x4] sm:$0xf]
      %v326 = vld [vmem:[%s229 + $0x8] sm:$0xf]
      %v327 = vld [vmem:[%s229 + $0xc] sm:$0xf]
      %v328 = vld [vmem:[%s229 + $0x10] sm:$0xf]
      %v329 = vld [vmem:[%s229 + $0x14] sm:$0xf]
      %v330 = vld [vmem:[%s229 + $0x18] sm:$0xf]
      %v331 = vld [vmem:[%s229 + $0x1c] sm:$0xf]
      %v332 = vld [vmem:[%s229 + $0x20] sm:$0xf]
      %v333 = vld [vmem:[%s229 + $0x24] sm:$0xf]
      %v334 = vld [vmem:[%s229 + $0x28] sm:$0xf]
      %v335 = vld [vmem:[%s229 + $0x2c] sm:$0xf]
      %v336 = vld [vmem:[%s229 + $0x30] sm:$0xf]
      %v337 = vld [vmem:[%s229 + $0x34] sm:$0xf]
      %v338 = vld [vmem:[%s229 + $0x38] sm:$0xf]
      %v339 = vld [vmem:[%s229 + $0x3c] sm:$0xf]
      %v340 = vld [vmem:[%s229 + $0x40] sm:$0xf]
      %v341 = vld [vmem:[%s229 + $0x44] sm:$0xf]
      %v342 = vld [vmem:[%s229 + $0x48] sm:$0xf]
      %v343 = vld [vmem:[%s229 + $0x4c] sm:$0xf]
      %v344 = vld [vmem:[%s229 + $0x50] sm:$0xf]
      %v345 = vld [vmem:[%s229 + $0x54] sm:$0xf]
      %v346 = vld [vmem:[%s229 + $0x58] sm:$0xf]
      %v347 = vld [vmem:[%s229 + $0x5c] sm:$0xf]
      %v348 = vld [vmem:[%s229 + $0x60] sm:$0xf]
      %v349 = vld [vmem:[%s229 + $0x64] sm:$0xf]
      %v350 = vld [vmem:[%s229 + $0x68] sm:$0xf]
      %v351 = vld [vmem:[%s229 + $0x6c] sm:$0xf]
      %v352 = vld [vmem:[%s229 + $0x70] sm:$0xf]
      %v353 = vld [vmem:[%s229 + $0x74] sm:$0xf]
      %v354 = vld [vmem:[%s229 + $0x78] sm:$0xf]
      %v355 = vld [vmem:[%s229 + $0x7c] sm:$0xf]
      %v356 = vld [vmem:[%s242] sm:$0xf]
      %v357 = vld [vmem:[%s242 + $0x4] sm:$0xf]
      %v358 = vld [vmem:[%s242 + $0x8] sm:$0xf]
      %v359 = vld [vmem:[%s242 + $0xc] sm:$0xf]
      %v360 = vld [vmem:[%s242 + $0x10] sm:$0xf]
      %v361 = vld [vmem:[%s242 + $0x14] sm:$0xf]
      %v362 = vld [vmem:[%s242 + $0x18] sm:$0xf]
      %v363 = vld [vmem:[%s242 + $0x1c] sm:$0xf]
      %v364 = vld [vmem:[%s242 + $0x20] sm:$0xf]
      %v365 = vld [vmem:[%s242 + $0x24] sm:$0xf]
      %v366 = vld [vmem:[%s242 + $0x28] sm:$0xf]
      %v367 = vld [vmem:[%s242 + $0x2c] sm:$0xf]
      %v368 = vld [vmem:[%s242 + $0x30] sm:$0xf]
      %v369 = vld [vmem:[%s242 + $0x34] sm:$0xf]
      %v370 = vld [vmem:[%s242 + $0x38] sm:$0xf]
      %v371 = vld [vmem:[%s242 + $0x3c] sm:$0xf]
      %v404 = vunpack.c.l.b16 %v324
      %v405 = vunpack.c.l.b16 %v325
      %v406 = vunpack.c.l.b16 %v326
      %v407 = vunpack.c.l.b16 %v327
      %v408 = vunpack.c.l.b16 %v328
      %v409 = vunpack.c.l.b16 %v329
      %v410 = vunpack.c.l.b16 %v330
      %v411 = vunpack.c.l.b16 %v331
      %v412 = vunpack.c.l.b16 %v332
      %v413 = vunpack.c.l.b16 %v333
      %v414 = vunpack.c.l.b16 %v334
      %v415 = vunpack.c.l.b16 %v335
      %v416 = vunpack.c.l.b16 %v336
      %v417 = vunpack.c.l.b16 %v337
      %v418 = vunpack.c.l.b16 %v338
      %v419 = vunpack.c.l.b16 %v339
      %v420 = vunpack.c.l.b16 %v340
      %v421 = vunpack.c.l.b16 %v341
      %v422 = vunpack.c.l.b16 %v342
      %v423 = vunpack.c.l.b16 %v343
      %v424 = vunpack.c.l.b16 %v344
      %v425 = vunpack.c.l.b16 %v345
      %v426 = vunpack.c.l.b16 %v346
      %v427 = vunpack.c.l.b16 %v347
      %v428 = vunpack.c.l.b16 %v348
      %v429 = vunpack.c.l.b16 %v349
      %v430 = vunpack.c.l.b16 %v350
      %v431 = vunpack.c.l.b16 %v351
      %v432 = vunpack.c.l.b16 %v352
      %v433 = vunpack.c.l.b16 %v353
      %v434 = vunpack.c.l.b16 %v354
      %v435 = vunpack.c.l.b16 %v355
      %v436 = vpack.c.b16 %v405, %v404
      %v437 = vpack.c.b16 %v407, %v406
      %v438 = vpack.c.b16 %v409, %v408
      %v439 = vpack.c.b16 %v411, %v410
      %v440 = vpack.c.b16 %v413, %v412
      %v441 = vpack.c.b16 %v415, %v414
      %v442 = vpack.c.b16 %v417, %v416
      %v443 = vpack.c.b16 %v419, %v418
      %v444 = vpack.c.b16 %v421, %v420
      %v445 = vpack.c.b16 %v423, %v422
      %v446 = vpack.c.b16 %v425, %v424
      %v447 = vpack.c.b16 %v427, %v426
      %v448 = vpack.c.b16 %v429, %v428
      %v449 = vpack.c.b16 %v431, %v430
      %v450 = vpack.c.b16 %v433, %v432
      %v451 = vpack.c.b16 %v435, %v434
      %v484 = vunpack.c.l.b16 %v356
      %v485 = vunpack.c.l.b16 %v357
      %v486 = vunpack.c.l.b16 %v358
      %v487 = vunpack.c.l.b16 %v359
      %v488 = vunpack.c.l.b16 %v360
      %v489 = vunpack.c.l.b16 %v361
      %v490 = vunpack.c.l.b16 %v362
      %v491 = vunpack.c.l.b16 %v363
      %v492 = vunpack.c.l.b16 %v364
      %v493 = vunpack.c.l.b16 %v365
      %v494 = vunpack.c.l.b16 %v366
      %v495 = vunpack.c.l.b16 %v367
      %v496 = vunpack.c.l.b16 %v368
      %v497 = vunpack.c.l.b16 %v369
      %v498 = vunpack.c.l.b16 %v370
      %v499 = vunpack.c.l.b16 %v371
      %v500 = vpack.c.b16 %v485, %v484
      %v501 = vpack.c.b16 %v487, %v486
      %v502 = vpack.c.b16 %v489, %v488
      %v503 = vpack.c.b16 %v491, %v490
      %v504 = vpack.c.b16 %v493, %v492
      %v505 = vpack.c.b16 %v495, %v494
      %v506 = vpack.c.b16 %v497, %v496
      %v507 = vpack.c.b16 %v499, %v498
      %516 = vmatprep.subr.bf16.mxu0 0
      %517 = vmatpush1.bf16.msra.mxu0 %v500
      %518 = vmatprep.subr.bf16.mxu0 0
      %519 = vmatpush1.bf16.msra.mxu0 %v501
      %520 = vmatprep.subr.bf16.mxu0 0
      %521 = vmatpush1.bf16.msra.mxu0 %v502
      %522 = vmatprep.subr.bf16.mxu0 0
      %523 = vmatpush1.bf16.msra.mxu0 %v503
      %524 = vmatprep.subr.bf16.mxu0 0
      %525 = vmatpush1.bf16.msra.mxu0 %v504
      %526 = vmatprep.subr.bf16.mxu0 0
      %527 = vmatpush1.bf16.msra.mxu0 %v505
      %528 = vmatprep.subr.bf16.mxu0 0
      %529 = vmatpush1.bf16.msra.mxu0 %v506
      %530 = vmatprep.subr.bf16.mxu0 0
      %531 = vmatpush1.bf16.msra.mxu0 %v507
      %532 = vmatprep.subr.bf16.mxu0 0
      %533 = vmatpush1.bf16.msra.mxu0 0
      %534 = vmatprep.subr.bf16.mxu0 0
      %535 = vmatpush1.bf16.msra.mxu0 0
      %536 = vmatprep.subr.bf16.mxu0 0
      %537 = vmatpush1.bf16.msra.mxu0 0
      %538 = vmatprep.subr.bf16.mxu0 0
      %539 = vmatpush1.bf16.msra.mxu0 0
      %540 = vmatprep.subr.bf16.mxu0 0
      %541 = vmatpush1.bf16.msra.mxu0 0
      %542 = vmatprep.subr.bf16.mxu0 0
      %543 = vmatpush1.bf16.msra.mxu0 0
      %544 = vmatprep.subr.bf16.mxu0 0
      %545 = vmatpush1.bf16.msra.mxu0 0
      %546 = vmatprep.subr.bf16.mxu0 0
      %547 = vmatpush1.bf16.msra.mxu0 0
      %548 = vmatprep.mubr.bf16.mxu0 0
      %549 = vmatmul.mubr.bf16.gmra.mrb[0].mxu0 %v436
      %v550 = vpop.f32.mrb[0].mxu0
      %v551 = vadd.f32 0.0, %v550
      %v552 = vpop.f32.mrb[0].mxu0
      %v553 = vpop.f32.mrb[0].mxu0
      %v554 = vadd.f32 0.0, %v553
      %v555 = vpop.f32.mrb[0].mxu0
      %556 = vmatprep.mubr.bf16.mxu0 0
      %557 = vmatmul.mubr.bf16.gmra.mrb[0].mxu0 %v437
      %v558 = vpop.f32.mrb[0].mxu0
      %v559 = vadd.f32 0.0, %v558
      %v560 = vpop.f32.mrb[0].mxu0
      %v561 = vpop.f32.mrb[0].mxu0
      %v562 = vadd.f32 0.0, %v561
      %v563 = vpop.f32.mrb[0].mxu0
      %564 = vmatprep.mubr.bf16.mxu0 0
      %565 = vmatmul.mubr.bf16.gmra.mrb[0].mxu0 %v438
      %v566 = vpop.f32.mrb[0].mxu0
      %v567 = vadd.f32 0.0, %v566
      %v568 = vpop.f32.mrb[0].mxu0
      %v569 = vpop.f32.mrb[0].mxu0
      %v570 = vadd.f32 0.0, %v569
      %v571 = vpop.f32.mrb[0].mxu0
      %572 = vmatprep.mubr.bf16.mxu0 0
      %573 = vmatmul.mubr.bf16.gmra.mrb[0].mxu0 %v439
      %v574 = vpop.f32.mrb[0].mxu0
      %v575 = vadd.f32 0.0, %v574
      %v576 = vpop.f32.mrb[0].mxu0
      %v577 = vpop.f32.mrb[0].mxu0
      %v578 = vadd.f32 0.0, %v577
      %v579 = vpop.f32.mrb[0].mxu0
      %580 = vmatprep.mubr.bf16.mxu0 0
      %581 = vmatmul.mubr.bf16.gmra.mrb[0].mxu0 %v440
      %v582 = vpop.f32.mrb[0].mxu0
      %v583 = vadd.f32 0.0, %v582
      %v584 = vpop.f32.mrb[0].mxu0
      %v585 = vpop.f32.mrb[0].mxu0
      %v586 = vadd.f32 0.0, %v585
      %v587 = vpop.f32.mrb[0].mxu0
      %588 = vmatprep.mubr.bf16.mxu0 0
      %589 = vmatmul.mubr.bf16.gmra.mrb[0].mxu0 %v441
      %v590 = vpop.f32.mrb[0].mxu0
      %v591 = vadd.f32 0.0, %v590
      %v592 = vpop.f32.mrb[0].mxu0
      %v593 = vpop.f32.mrb[0].mxu0
      %v594 = vadd.f32 0.0, %v593
      %v595 = vpop.f32.mrb[0].mxu0
      %596 = vmatprep.mubr.bf16.mxu0 0
      %597 = vmatmul.mubr.bf16.gmra.mrb[0].mxu0 %v442
      %v598 = vpop.f32.mrb[0].mxu0
      %v599 = vadd.f32 0.0, %v598
      %v600 = vpop.f32.mrb[0].mxu0
      %v601 = vpop.f32.mrb[0].mxu0
      %v602 = vadd.f32 0.0, %v601
      %v603 = vpop.f32.mrb[0].mxu0
      %604 = vmatprep.mubr.bf16.mxu0 0
      %605 = vmatmul.mubr.bf16.gmra.mrb[0].mxu0 %v443
      %v606 = vpop.f32.mrb[0].mxu0
      %v607 = vadd.f32 0.0, %v606
      %v608 = vpop.f32.mrb[0].mxu0
      %v609 = vpop.f32.mrb[0].mxu0
      %v610 = vadd.f32 0.0, %v609
      %v611 = vpop.f32.mrb[0].mxu0
      %612 = vmatprep.mubr.bf16.mxu0 0
      %613 = vmatmul.mubr.bf16.gmra.mrb[0].mxu0 %v444
      %v614 = vpop.f32.mrb[0].mxu0
      %v615 = vadd.f32 0.0, %v614
      %v616 = vpop.f32.mrb[0].mxu0
      %v617 = vpop.f32.mrb[0].mxu0
      %v618 = vadd.f32 0.0, %v617
      %v619 = vpop.f32.mrb[0].mxu0
      %620 = vmatprep.mubr.bf16.mxu0 0
      %621 = vmatmul.mubr.bf16.gmra.mrb[0].mxu0 %v445
      %v622 = vpop.f32.mrb[0].mxu0
      %v623 = vadd.f32 0.0, %v622
      %v624 = vpop.f32.mrb[0].mxu0
      %v625 = vpop.f32.mrb[0].mxu0
      %v626 = vadd.f32 0.0, %v625
      %v627 = vpop.f32.mrb[0].mxu0
      %628 = vmatprep.mubr.bf16.mxu0 0
      %629 = vmatmul.mubr.bf16.gmra.mrb[0].mxu0 %v446
      %v630 = vpop.f32.mrb[0].mxu0
      %v631 = vadd.f32 0.0, %v630
      %v632 = vpop.f32.mrb[0].mxu0
      %v633 = vpop.f32.mrb[0].mxu0
      %v634 = vadd.f32 0.0, %v633
      %v635 = vpop.f32.mrb[0].mxu0
      %636 = vmatprep.mubr.bf16.mxu0 0
      %637 = vmatmul.mubr.bf16.gmra.mrb[0].mxu0 %v447
      %v638 = vpop.f32.mrb[0].mxu0
      %v639 = vadd.f32 0.0, %v638
      %v640 = vpop.f32.mrb[0].mxu0
      %v641 = vpop.f32.mrb[0].mxu0
      %v642 = vadd.f32 0.0, %v641
      %v643 = vpop.f32.mrb[0].mxu0
      %644 = vmatprep.mubr.bf16.mxu0 0
      %645 = vmatmul.mubr.bf16.gmra.mrb[0].mxu0 %v448
      %v646 = vpop.f32.mrb[0].mxu0
      %v647 = vadd.f32 0.0, %v646
      %v648 = vpop.f32.mrb[0].mxu0
      %v649 = vpop.f32.mrb[0].mxu0
      %v650 = vadd.f32 0.0, %v649
      %v651 = vpop.f32.mrb[0].mxu0
      %652 = vmatprep.mubr.bf16.mxu0 0
      %653 = vmatmul.mubr.bf16.gmra.mrb[0].mxu0 %v449
      %v654 = vpop.f32.mrb[0].mxu0
      %v655 = vadd.f32 0.0, %v654
      %v656 = vpop.f32.mrb[0].mxu0
      %v657 = vpop.f32.mrb[0].mxu0
      %v658 = vadd.f32 0.0, %v657
      %v659 = vpop.f32.mrb[0].mxu0
      %660 = vmatprep.mubr.bf16.mxu0 0
      %661 = vmatmul.mubr.bf16.gmra.mrb[0].mxu0 %v450
      %v662 = vpop.f32.mrb[0].mxu0
      %v663 = vadd.f32 0.0, %v662
      %v664 = vpop.f32.mrb[0].mxu0
      %v665 = vpop.f32.mrb[0].mxu0
      %v666 = vadd.f32 0.0, %v665
      %v667 = vpop.f32.mrb[0].mxu0
      %668 = vmatprep.mubr.bf16.mxu0 0
      %669 = vmatmul.mubr.bf16.gmra.mrb[0].mxu0 %v451
      %v670 = vpop.f32.mrb[0].mxu0
      %v671 = vadd.f32 0.0, %v670
      %v672 = vpop.f32.mrb[0].mxu0
      %v673 = vpop.f32.mrb[0].mxu0
      %v674 = vadd.f32 0.0, %v673
      %v675 = vpop.f32.mrb[0].mxu0
      %676 = vdwg.mxu0
      %v677 = vadd.f32 %v292, %v551
      %v678 = vadd.f32 %v293, %v554
      %v679 = vadd.f32 %v294, %v559
      %v680 = vadd.f32 %v295, %v562
      %v681 = vadd.f32 %v296, %v567
      %v682 = vadd.f32 %v297, %v570
      %v683 = vadd.f32 %v298, %v575
      %v684 = vadd.f32 %v299, %v578
      %v685 = vadd.f32 %v300, %v583
      %v686 = vadd.f32 %v301, %v586
      %v687 = vadd.f32 %v302, %v591
      %v688 = vadd.f32 %v303, %v594
      %v689 = vadd.f32 %v304, %v599
      %v690 = vadd.f32 %v305, %v602
      %v691 = vadd.f32 %v306, %v607
      %v692 = vadd.f32 %v307, %v610
      %v693 = vadd.f32 %v308, %v615
      %v694 = vadd.f32 %v309, %v618
      %v695 = vadd.f32 %v310, %v623
      %v696 = vadd.f32 %v311, %v626
      %v697 = vadd.f32 %v312, %v631
      %v698 = vadd.f32 %v313, %v634
      %v699 = vadd.f32 %v314, %v639
      %v700 = vadd.f32 %v315, %v642
      %v701 = vadd.f32 %v316, %v647
      %v702 = vadd.f32 %v317, %v650
      %v703 = vadd.f32 %v318, %v655
      %v704 = vadd.f32 %v319, %v658
      %v705 = vadd.f32 %v320, %v663
      %v706 = vadd.f32 %v321, %v666
      %v707 = vadd.f32 %v322, %v671
      %v708 = vadd.f32 %v323, %v674
      %709 = vst [vmem:[#allocation2] sm:$0xff] %v677
      %710 = vst [vmem:[#allocation2 + $0x8] sm:$0xff] %v678
      %711 = vst [vmem:[#allocation2 + $0x10] sm:$0xff] %v679
      %712 = vst [vmem:[#allocation2 + $0x18] sm:$0xff] %v680
      %713 = vst [vmem:[#allocation2 + $0x20] sm:$0xff] %v681
      %714 = vst [vmem:[#allocation2 + $0x28] sm:$0xff] %v682
      %715 = vst [vmem:[#allocation2 + $0x30] sm:$0xff] %v683
      %716 = vst [vmem:[#allocation2 + $0x38] sm:$0xff] %v684
      %717 = vst [vmem:[#allocation2 + $0x40] sm:$0xff] %v685
      %718 = vst [vmem:[#allocation2 + $0x48] sm:$0xff] %v686
      %719 = vst [vmem:[#allocation2 + $0x50] sm:$0xff] %v687
      %720 = vst [vmem:[#allocation2 + $0x58] sm:$0xff] %v688
      %721 = vst [vmem:[#allocation2 + $0x60] sm:$0xff] %v689
      %722 = vst [vmem:[#allocation2 + $0x68] sm:$0xff] %v690
      %723 = vst [vmem:[#allocation2 + $0x70] sm:$0xff] %v691
      %724 = vst [vmem:[#allocation2 + $0x78] sm:$0xff] %v692
      %725 = vst [vmem:[#allocation2 + $0x80] sm:$0xff] %v693
      %726 = vst [vmem:[#allocation2 + $0x88] sm:$0xff] %v694
      %727 = vst [vmem:[#allocation2 + $0x90] sm:$0xff] %v695
      %728 = vst [vmem:[#allocation2 + $0x98] sm:$0xff] %v696
      %729 = vst [vmem:[#allocation2 + $0xa0] sm:$0xff] %v697
      %730 = vst [vmem:[#allocation2 + $0xa8] sm:$0xff] %v698
      %731 = vst [vmem:[#allocation2 + $0xb0] sm:$0xff] %v699
      %732 = vst [vmem:[#allocation2 + $0xb8] sm:$0xff] %v700
      %733 = vst [vmem:[#allocation2 + $0xc0] sm:$0xff] %v701
      %734 = vst [vmem:[#allocation2 + $0xc8] sm:$0xff] %v702
      %735 = vst [vmem:[#allocation2 + $0xd0] sm:$0xff] %v703
      %736 = vst [vmem:[#allocation2 + $0xd8] sm:$0xff] %v704
      %737 = vst [vmem:[#allocation2 + $0xe0] sm:$0xff] %v705
      %738 = vst [vmem:[#allocation2 + $0xe8] sm:$0xff] %v706
      %739 = vst [vmem:[#allocation2 + $0xf0] sm:$0xff] %v707
      %740 = vst [vmem:[#allocation2 + $0xf8] sm:$0xff] %v708
      %p741 = scmp.eq.s32.totalorder %s21, 8
      %p742 = pnand %p741, %p255
      %p743 = pneg %p742
      // Predicated region
      $region33: #{forward.210} parent=27 // pred_check
        _
      $region34: #{forward.210} parent=27 // pred_check_branch
        %745 = sbr.rel (%p742) target = $region36
      $region35: #{forward.210} parent=27 // pred_region
        %v746 = vld [vmem:[#allocation2] sm:$0xff]
        %v747 = vld [vmem:[#allocation2 + $0x8] sm:$0xff]
        %v748 = vld [vmem:[#allocation2 + $0x10] sm:$0xff]
        %v749 = vld [vmem:[#allocation2 + $0x18] sm:$0xff]
        %v750 = vld [vmem:[#allocation2 + $0x20] sm:$0xff]
        %v751 = vld [vmem:[#allocation2 + $0x28] sm:$0xff]
        %v752 = vld [vmem:[#allocation2 + $0x30] sm:$0xff]
        %v753 = vld [vmem:[#allocation2 + $0x38] sm:$0xff]
        %v754 = vld [vmem:[#allocation2 + $0x40] sm:$0xff]
        %v755 = vld [vmem:[#allocation2 + $0x48] sm:$0xff]
        %v756 = vld [vmem:[#allocation2 + $0x50] sm:$0xff]
        %v757 = vld [vmem:[#allocation2 + $0x58] sm:$0xff]
        %v758 = vld [vmem:[#allocation2 + $0x60] sm:$0xff]
        %v759 = vld [vmem:[#allocation2 + $0x68] sm:$0xff]
        %v760 = vld [vmem:[#allocation2 + $0x70] sm:$0xff]
        %v761 = vld [vmem:[#allocation2 + $0x78] sm:$0xff]
        %v762 = vld [vmem:[#allocation2 + $0x80] sm:$0xff]
        %v763 = vld [vmem:[#allocation2 + $0x88] sm:$0xff]
        %v764 = vld [vmem:[#allocation2 + $0x90] sm:$0xff]
        %v765 = vld [vmem:[#allocation2 + $0x98] sm:$0xff]
        %v766 = vld [vmem:[#allocation2 + $0xa0] sm:$0xff]
        %v767 = vld [vmem:[#allocation2 + $0xa8] sm:$0xff]
        %v768 = vld [vmem:[#allocation2 + $0xb0] sm:$0xff]
        %v769 = vld [vmem:[#allocation2 + $0xb8] sm:$0xff]
        %v770 = vld [vmem:[#allocation2 + $0xc0] sm:$0xff]
        %v771 = vld [vmem:[#allocation2 + $0xc8] sm:$0xff]
        %v772 = vld [vmem:[#allocation2 + $0xd0] sm:$0xff]
        %v773 = vld [vmem:[#allocation2 + $0xd8] sm:$0xff]
        %v774 = vld [vmem:[#allocation2 + $0xe0] sm:$0xff]
        %v775 = vld [vmem:[#allocation2 + $0xe8] sm:$0xff]
        %v776 = vld [vmem:[#allocation2 + $0xf0] sm:$0xff]
        %v777 = vld [vmem:[#allocation2 + $0xf8] sm:$0xff]
        %778 = vst [vmem:[%s251] sm:$0xff] %v746
        %779 = vst [vmem:[%s251 + $0x8] sm:$0xff] %v747
        %780 = vst [vmem:[%s251 + $0x10] sm:$0xff] %v748
        %781 = vst [vmem:[%s251 + $0x18] sm:$0xff] %v749
        %782 = vst [vmem:[%s251 + $0x20] sm:$0xff] %v750
        %783 = vst [vmem:[%s251 + $0x28] sm:$0xff] %v751
        %784 = vst [vmem:[%s251 + $0x30] sm:$0xff] %v752
        %785 = vst [vmem:[%s251 + $0x38] sm:$0xff] %v753
        %786 = vst [vmem:[%s251 + $0x40] sm:$0xff] %v754
        %787 = vst [vmem:[%s251 + $0x48] sm:$0xff] %v755
        %788 = vst [vmem:[%s251 + $0x50] sm:$0xff] %v756
        %789 = vst [vmem:[%s251 + $0x58] sm:$0xff] %v757
        %790 = vst [vmem:[%s251 + $0x60] sm:$0xff] %v758
        %791 = vst [vmem:[%s251 + $0x68] sm:$0xff] %v759
        %792 = vst [vmem:[%s251 + $0x70] sm:$0xff] %v760
        %793 = vst [vmem:[%s251 + $0x78] sm:$0xff] %v761
        %794 = vst [vmem:[%s251 + $0x80] sm:$0xff] %v762
        %795 = vst [vmem:[%s251 + $0x88] sm:$0xff] %v763
        %796 = vst [vmem:[%s251 + $0x90] sm:$0xff] %v764
        %797 = vst [vmem:[%s251 + $0x98] sm:$0xff] %v765
        %798 = vst [vmem:[%s251 + $0xa0] sm:$0xff] %v766
        %799 = vst [vmem:[%s251 + $0xa8] sm:$0xff] %v767
        %800 = vst [vmem:[%s251 + $0xb0] sm:$0xff] %v768
        %801 = vst [vmem:[%s251 + $0xb8] sm:$0xff] %v769
        %802 = vst [vmem:[%s251 + $0xc0] sm:$0xff] %v770
        %803 = vst [vmem:[%s251 + $0xc8] sm:$0xff] %v771
        %804 = vst [vmem:[%s251 + $0xd0] sm:$0xff] %v772
        %805 = vst [vmem:[%s251 + $0xd8] sm:$0xff] %v773
        %806 = vst [vmem:[%s251 + $0xe0] sm:$0xff] %v774
        %807 = vst [vmem:[%s251 + $0xe8] sm:$0xff] %v775
        %808 = vst [vmem:[%s251 + $0xf0] sm:$0xff] %v776
        %809 = vst [vmem:[%s251 + $0xf8] sm:$0xff] %v777
      $region36: #{forward.210} parent=27 // pred_fallthru
        _
      %s810 = smul.u32 32, %s19
      %p811 = scmp.lt.s32.totalorder %s810, 63
      %s812 = scalar_select %p811, %s810, 63
      %p813 = scmp.lt.s32.totalorder %s20, 0
      %s814 = scalar_select %p813, %s20, 0
      %s815 = sadd.s32 %s814, %s812
      %s816 = smul.addr %s815, 8
      %s817 = scalar_lea.vmem %s2, %s816
      // Predicated region
      $region37: #{forward.210} parent=27 // pred_check
        %p818 = pneg %p119
      $region38: #{forward.210} parent=27 // pred_check_branch
        %820 = sbr.rel (%p818) target = $region40
      $region39: #{forward.210} parent=27 // pred_region
        %s821 = smul.u32 32, %s19
      $region40: #{forward.210} parent=27 // pred_fallthru
        _
    $region28: #{forward.210} parent=5 // pred_fallthru
      _
    %p822 = scmp.le.s32.totalorder 2, %s8
    // Predicated region
    $region41: #{forward.210} parent=5 // pred_check
      %p823 = pneg %p822
    $region42: #{forward.210} parent=5 // pred_check_branch
      %825 = sbr.rel (%p823) target = $region44
    $region43: #{forward.210} parent=5 // pred_region
      %s826 = ssub.s32 %s8, 2
      // Predicated region
      $region45: #{forward.210} parent=43 // pred_check
        %p827 = pneg %p125
      $region46: #{forward.210} parent=43 // pred_check_branch
        %829 = sbr.rel (%p827) target = $region48
      $region47: #{forward.210} parent=43 // pred_region
        %s830 = smul.u32 32, %s23
        %p831 = scmp.lt.s32.totalorder %s830, 63
        %s832 = scalar_select %p831, %s830, 63
        %p833 = scmp.lt.s32.totalorder %s24, 0
        %s834 = scalar_select %p833, %s24, 0
        %s835 = sadd.s32 %s834, %s832
        %s836 = smul.addr %s835, 8
        %s837 = scalar_lea.vmem %s2, %s836
      $region48: #{forward.210} parent=43 // pred_fallthru
        _
    $region44: #{forward.210} parent=5 // pred_fallthru
      _
  $region6: #{forward.210} parent=0 // loop_footer
    %s12 = sadd.s32 1, %s8
  $region7: #{forward.210} parent=0 // loop_footer_branch
    %7 = sbr.rel target = $region3
  $region8: #{forward.210} parent=0 // loop_exit
    _

// kernel: forward.211
$region0: #{forward.211}
  #allocation0 [shape = 'u32[]', space=smem, size = 0x4, offset = 0x4, fixed_abs, tag = 'smem constant byte address 0x4 - core index']
  #allocation1 [shape = 'u32[144,128]{1,0:T(1,128)}', space=vmem, size = 0x12000, scoped, tag = 'internal scratch']
  %s0 = inlined_call_operand.vmem [shape: f32[512,128], index: 0, kind: input, shape index: {}]
  %s1 = inlined_call_operand.vmem [shape: f32[1,128], index: 1, kind: input, shape index: {}]
  %s2 = inlined_call_operand.vmem [shape: f32[1,128], index: 2, kind: input, shape index: {}]
  %s3 = inlined_call_operand.vmem [shape: f32[512,128], index: 3, kind: output, shape index: {}]
  %s4 = sld [smem:[#allocation0]]
  $region22: #{forward.211} parent=0
    _
  %s6 = ssub.s32 1, %s4
  %s7 = scalar_select 0, %s6, %s4
  // Predicated region
  $region2: #{forward.211} parent=0 // pred_check
    _
  $region3: #{forward.211} parent=0 // pred_check_branch
    %9 = sbr.rel (0) target = $region5
  $region4: #{forward.211} parent=0 // pred_region
    _
  $region5: #{forward.211} parent=0 // pred_fallthru
    _
  // Predicated region
  $region6: #{forward.211} parent=0 // pred_check
    _
  $region7: #{forward.211} parent=0 // pred_check_branch
    %11 = sbr.rel (0) target = $region9
  $region8: #{forward.211} parent=0 // pred_region
    _
  $region9: #{forward.211} parent=0 // pred_fallthru
    _
  // Predicated region
  $region10: #{forward.211} parent=0 // pred_check
    _
  $region11: #{forward.211} parent=0 // pred_check_branch
    %13 = sbr.rel (0) target = $region13
  $region12: #{forward.211} parent=0 // pred_region
    _
  $region13: #{forward.211} parent=0 // pred_fallthru
    _
  %v14 = vld [vmem:[%s0] sm:$0xff]
  %v15 = vld [vmem:[%s0 + $0x8] sm:$0xff]
  %v16 = vld [vmem:[%s0 + $0x10] sm:$0xff]
  %v17 = vld [vmem:[%s0 + $0x18] sm:$0xff]
  %v18 = vld [vmem:[%s0 + $0x20] sm:$0xff]
  %v19 = vld [vmem:[%s0 + $0x28] sm:$0xff]
  %v20 = vld [vmem:[%s0 + $0x30] sm:$0xff]
  %v21 = vld [vmem:[%s0 + $0x38] sm:$0xff]
  %v22 = vld [vmem:[%s0 + $0x40] sm:$0xff]
  %v23 = vld [vmem:[%s0 + $0x48] sm:$0xff]
  %v24 = vld [vmem:[%s0 + $0x50] sm:$0xff]
  %v25 = vld [vmem:[%s0 + $0x58] sm:$0xff]
  %v26 = vld [vmem:[%s0 + $0x60] sm:$0xff]
  %v27 = vld [vmem:[%s0 + $0x68] sm:$0xff]
  %v28 = vld [vmem:[%s0 + $0x70] sm:$0xff]
  %v29 = vld [vmem:[%s0 + $0x78] sm:$0xff]
  %v30 = vld [vmem:[%s0 + $0x80] sm:$0xff]
  %v31 = vld [vmem:[%s0 + $0x88] sm:$0xff]
  %v32 = vld [vmem:[%s0 + $0x90] sm:$0xff]
  %v33 = vld [vmem:[%s0 + $0x98] sm:$0xff]
  %v34 = vld [vmem:[%s0 + $0xa0] sm:$0xff]
  %v35 = vld [vmem:[%s0 + $0xa8] sm:$0xff]
  %v36 = vld [vmem:[%s0 + $0xb0] sm:$0xff]
  %v37 = vld [vmem:[%s0 + $0xb8] sm:$0xff]
  %v38 = vld [vmem:[%s0 + $0xc0] sm:$0xff]
  %v39 = vld [vmem:[%s0 + $0xc8] sm:$0xff]
  %v40 = vld [vmem:[%s0 + $0xd0] sm:$0xff]
  %v41 = vld [vmem:[%s0 + $0xd8] sm:$0xff]
  %v42 = vld [vmem:[%s0 + $0xe0] sm:$0xff]
  %v43 = vld [vmem:[%s0 + $0xe8] sm:$0xff]
  %v44 = vld [vmem:[%s0 + $0xf0] sm:$0xff]
  %v45 = vld [vmem:[%s0 + $0xf8] sm:$0xff]
  %v46 = vld [vmem:[%s0 + $0x100] sm:$0xff]
  %v47 = vld [vmem:[%s0 + $0x108] sm:$0xff]
  %v48 = vld [vmem:[%s0 + $0x110] sm:$0xff]
  %v49 = vld [vmem:[%s0 + $0x118] sm:$0xff]
  %v50 = vld [vmem:[%s0 + $0x120] sm:$0xff]
  %v51 = vld [vmem:[%s0 + $0x128] sm:$0xff]
  %v52 = vld [vmem:[%s0 + $0x130] sm:$0xff]
  %v53 = vld [vmem:[%s0 + $0x138] sm:$0xff]
  %v54 = vld [vmem:[%s0 + $0x140] sm:$0xff]
  %v55 = vld [vmem:[%s0 + $0x148] sm:$0xff]
  %v56 = vld [vmem:[%s0 + $0x150] sm:$0xff]
  %v57 = vld [vmem:[%s0 + $0x158] sm:$0xff]
  %v58 = vld [vmem:[%s0 + $0x160] sm:$0xff]
  %v59 = vld [vmem:[%s0 + $0x168] sm:$0xff]
  %v60 = vld [vmem:[%s0 + $0x170] sm:$0xff]
  %v61 = vld [vmem:[%s0 + $0x178] sm:$0xff]
  %v62 = vld [vmem:[%s0 + $0x180] sm:$0xff]
  %v63 = vld [vmem:[%s0 + $0x188] sm:$0xff]
  %v64 = vld [vmem:[%s0 + $0x190] sm:$0xff]
  %v65 = vld [vmem:[%s0 + $0x198] sm:$0xff]
  %v66 = vld [vmem:[%s0 + $0x1a0] sm:$0xff]
  %v67 = vld [vmem:[%s0 + $0x1a8] sm:$0xff]
  %v68 = vld [vmem:[%s0 + $0x1b0] sm:$0xff]
  %v69 = vld [vmem:[%s0 + $0x1b8] sm:$0xff]
  %v70 = vld [vmem:[%s0 + $0x1c0] sm:$0xff]
  %v71 = vld [vmem:[%s0 + $0x1c8] sm:$0xff]
  %v72 = vld [vmem:[%s0 + $0x1d0] sm:$0xff]
  %v73 = vld [vmem:[%s0 + $0x1d8] sm:$0xff]
  %v74 = vld [vmem:[%s0 + $0x1e0] sm:$0xff]
  %v75 = vld [vmem:[%s0 + $0x1e8] sm:$0xff]
  %v76 = vld [vmem:[%s0 + $0x1f0] sm:$0xff]
  %v77 = vld [vmem:[%s0 + $0x1f8] sm:$0xff]
  %v78 = vld [vmem:[%s1] sm:$0x1]
  %v80 = vlaneseq
  %v81 = vshrl.u32 %v80, 7
  %v82 = vsub.s32 0, %v81
  %v83 = vrot.slane %v78, %v82
  %v85 = vmul.f32 %v14, %v83
  %v86 = vmul.f32 %v15, %v83
  %v87 = vmul.f32 %v16, %v83
  %v88 = vmul.f32 %v17, %v83
  %v89 = vmul.f32 %v18, %v83
  %v90 = vmul.f32 %v19, %v83
  %v91 = vmul.f32 %v20, %v83
  %v92 = vmul.f32 %v21, %v83
  %v93 = vmul.f32 %v22, %v83
  %v94 = vmul.f32 %v23, %v83
  %v95 = vmul.f32 %v24, %v83
  %v96 = vmul.f32 %v25, %v83
  %v97 = vmul.f32 %v26, %v83
  %v98 = vmul.f32 %v27, %v83
  %v99 = vmul.f32 %v28, %v83
  %v100 = vmul.f32 %v29, %v83
  %v101 = vmul.f32 %v30, %v83
  %v102 = vmul.f32 %v31, %v83
  %v103 = vmul.f32 %v32, %v83
  %v104 = vmul.f32 %v33, %v83
  %v105 = vmul.f32 %v34, %v83
  %v106 = vmul.f32 %v35, %v83
  %v107 = vmul.f32 %v36, %v83
  %v108 = vmul.f32 %v37, %v83
  %v109 = vmul.f32 %v38, %v83
  %v110 = vmul.f32 %v39, %v83
  %v111 = vmul.f32 %v40, %v83
  %v112 = vmul.f32 %v41, %v83
  %v113 = vmul.f32 %v42, %v83
  %v114 = vmul.f32 %v43, %v83
  %v115 = vmul.f32 %v44, %v83
  %v116 = vmul.f32 %v45, %v83
  %v117 = vmul.f32 %v46, %v83
  %v118 = vmul.f32 %v47, %v83
  %v119 = vmul.f32 %v48, %v83
  %v120 = vmul.f32 %v49, %v83
  %v121 = vmul.f32 %v50, %v83
  %v122 = vmul.f32 %v51, %v83
  %v123 = vmul.f32 %v52, %v83
  %v124 = vmul.f32 %v53, %v83
  %v125 = vmul.f32 %v54, %v83
  %v126 = vmul.f32 %v55, %v83
  %v127 = vmul.f32 %v56, %v83
  %v128 = vmul.f32 %v57, %v83
  %v129 = vmul.f32 %v58, %v83
  %v130 = vmul.f32 %v59, %v83
  %v131 = vmul.f32 %v60, %v83
  %v132 = vmul.f32 %v61, %v83
  %v133 = vmul.f32 %v62, %v83
  %v134 = vmul.f32 %v63, %v83
  %v135 = vmul.f32 %v64, %v83
  %v136 = vmul.f32 %v65, %v83
  %v137 = vmul.f32 %v66, %v83
  %v138 = vmul.f32 %v67, %v83
  %v139 = vmul.f32 %v68, %v83
  %v140 = vmul.f32 %v69, %v83
  %v141 = vmul.f32 %v70, %v83
  %v142 = vmul.f32 %v71, %v83
  %v143 = vmul.f32 %v72, %v83
  %v144 = vmul.f32 %v73, %v83
  %v145 = vmul.f32 %v74, %v83
  %v146 = vmul.f32 %v75, %v83
  %v147 = vmul.f32 %v76, %v83
  %v148 = vmul.f32 %v77, %v83
  %v149 = vld [vmem:[%s2] sm:$0x1]
  %v151 = vlaneseq
  %v152 = vshrl.u32 %v151, 7
  %v153 = vsub.s32 0, %v152
  %v154 = vrot.slane %v149, %v153
  %v156 = vadd.f32 %v85, %v154
  %v157 = vadd.f32 %v86, %v154
  %v158 = vadd.f32 %v87, %v154
  %v159 = vadd.f32 %v88, %v154
  %v160 = vadd.f32 %v89, %v154
  %v161 = vadd.f32 %v90, %v154
  %v162 = vadd.f32 %v91, %v154
  %v163 = vadd.f32 %v92, %v154
  %v164 = vadd.f32 %v93, %v154
  %v165 = vadd.f32 %v94, %v154
  %v166 = vadd.f32 %v95, %v154
  %v167 = vadd.f32 %v96, %v154
  %v168 = vadd.f32 %v97, %v154
  %v169 = vadd.f32 %v98, %v154
  %v170 = vadd.f32 %v99, %v154
  %v171 = vadd.f32 %v100, %v154
  %v172 = vadd.f32 %v101, %v154
  %v173 = vadd.f32 %v102, %v154
  %v174 = vadd.f32 %v103, %v154
  %v175 = vadd.f32 %v104, %v154
  %v176 = vadd.f32 %v105, %v154
  %v177 = vadd.f32 %v106, %v154
  %v178 = vadd.f32 %v107, %v154
  %v179 = vadd.f32 %v108, %v154
  %v180 = vadd.f32 %v109, %v154
  %v181 = vadd.f32 %v110, %v154
  %v182 = vadd.f32 %v111, %v154
  %v183 = vadd.f32 %v112, %v154
  %v184 = vadd.f32 %v113, %v154
  %v185 = vadd.f32 %v114, %v154
  %v186 = vadd.f32 %v115, %v154
  %v187 = vadd.f32 %v116, %v154
  %v188 = vadd.f32 %v117, %v154
  %v189 = vadd.f32 %v118, %v154
  %v190 = vadd.f32 %v119, %v154
  %v191 = vadd.f32 %v120, %v154
  %v192 = vadd.f32 %v121, %v154
  %v193 = vadd.f32 %v122, %v154
  %v194 = vadd.f32 %v123, %v154
  %v195 = vadd.f32 %v124, %v154
  %v196 = vadd.f32 %v125, %v154
  %v197 = vadd.f32 %v126, %v154
  %v198 = vadd.f32 %v127, %v154
  %v199 = vadd.f32 %v128, %v154
  %v200 = vadd.f32 %v129, %v154
  %v201 = vadd.f32 %v130, %v154
  %v202 = vadd.f32 %v131, %v154
  %v203 = vadd.f32 %v132, %v154
  %v204 = vadd.f32 %v133, %v154
  %v205 = vadd.f32 %v134, %v154
  %v206 = vadd.f32 %v135, %v154
  %v207 = vadd.f32 %v136, %v154
  %v208 = vadd.f32 %v137, %v154
  %v209 = vadd.f32 %v138, %v154
  %v210 = vadd.f32 %v139, %v154
  %v211 = vadd.f32 %v140, %v154
  %v212 = vadd.f32 %v141, %v154
  %v213 = vadd.f32 %v142, %v154
  %v214 = vadd.f32 %v143, %v154
  %v215 = vadd.f32 %v144, %v154
  %v216 = vadd.f32 %v145, %v154
  %v217 = vadd.f32 %v146, %v154
  %v218 = vadd.f32 %v147, %v154
  %v219 = vadd.f32 %v148, %v154
  %v220 = vmax.f32 %v156, 0.0
  %v221 = vmax.f32 %v157, 0.0
  %v222 = vmax.f32 %v158, 0.0
  %v223 = vmax.f32 %v159, 0.0
  %v224 = vmax.f32 %v160, 0.0
  %v225 = vmax.f32 %v161, 0.0
  %v226 = vmax.f32 %v162, 0.0
  %v227 = vmax.f32 %v163, 0.0
  %v228 = vmax.f32 %v164, 0.0
  %v229 = vmax.f32 %v165, 0.0
  %v230 = vmax.f32 %v166, 0.0
  %v231 = vmax.f32 %v167, 0.0
  %v232 = vmax.f32 %v168, 0.0
  %v233 = vmax.f32 %v169, 0.0
  %v234 = vmax.f32 %v170, 0.0
  %v235 = vmax.f32 %v171, 0.0
  %v236 = vmax.f32 %v172, 0.0
  %v237 = vmax.f32 %v173, 0.0
  %v238 = vmax.f32 %v174, 0.0
  %v239 = vmax.f32 %v175, 0.0
  %v240 = vmax.f32 %v176, 0.0
  %v241 = vmax.f32 %v177, 0.0
  %v242 = vmax.f32 %v178, 0.0
  %v243 = vmax.f32 %v179, 0.0
  %v244 = vmax.f32 %v180, 0.0
  %v245 = vmax.f32 %v181, 0.0
  %v246 = vmax.f32 %v182, 0.0
  %v247 = vmax.f32 %v183, 0.0
  %v248 = vmax.f32 %v184, 0.0
  %v249 = vmax.f32 %v185, 0.0
  %v250 = vmax.f32 %v186, 0.0
  %v251 = vmax.f32 %v187, 0.0
  %v252 = vmax.f32 %v188, 0.0
  %v253 = vmax.f32 %v189, 0.0
  %v254 = vmax.f32 %v190, 0.0
  %v255 = vmax.f32 %v191, 0.0
  %v256 = vmax.f32 %v192, 0.0
  %v257 = vmax.f32 %v193, 0.0
  %v258 = vmax.f32 %v194, 0.0
  %v259 = vmax.f32 %v195, 0.0
  %v260 = vmax.f32 %v196, 0.0
  %v261 = vmax.f32 %v197, 0.0
  %v262 = vmax.f32 %v198, 0.0
  %v263 = vmax.f32 %v199, 0.0
  %v264 = vmax.f32 %v200, 0.0
  %v265 = vmax.f32 %v201, 0.0
  %v266 = vmax.f32 %v202, 0.0
  %v267 = vmax.f32 %v203, 0.0
  %v268 = vmax.f32 %v204, 0.0
  %v269 = vmax.f32 %v205, 0.0
  %v270 = vmax.f32 %v206, 0.0
  %v271 = vmax.f32 %v207, 0.0
  %v272 = vmax.f32 %v208, 0.0
  %v273 = vmax.f32 %v209, 0.0
  %v274 = vmax.f32 %v210, 0.0
  %v275 = vmax.f32 %v211, 0.0
  %v276 = vmax.f32 %v212, 0.0
  %v277 = vmax.f32 %v213, 0.0
  %v278 = vmax.f32 %v214, 0.0
  %v279 = vmax.f32 %v215, 0.0
  %v280 = vmax.f32 %v216, 0.0
  %v281 = vmax.f32 %v217, 0.0
  %v282 = vmax.f32 %v218, 0.0
  %v283 = vmax.f32 %v219, 0.0
  %284 = vst [vmem:[%s3] sm:$0xff] %v220
  %285 = vst [vmem:[%s3 + $0x8] sm:$0xff] %v221
  %286 = vst [vmem:[%s3 + $0x10] sm:$0xff] %v222
  %287 = vst [vmem:[%s3 + $0x18] sm:$0xff] %v223
  %288 = vst [vmem:[%s3 + $0x20] sm:$0xff] %v224
  %289 = vst [vmem:[%s3 + $0x28] sm:$0xff] %v225
  %290 = vst [vmem:[%s3 + $0x30] sm:$0xff] %v226
  %291 = vst [vmem:[%s3 + $0x38] sm:$0xff] %v227
  %292 = vst [vmem:[%s3 + $0x40] sm:$0xff] %v228
  %293 = vst [vmem:[%s3 + $0x48] sm:$0xff] %v229
  %294 = vst [vmem:[%s3 + $0x50] sm:$0xff] %v230
  %295 = vst [vmem:[%s3 + $0x58] sm:$0xff] %v231
  %296 = vst [vmem:[%s3 + $0x60] sm:$0xff] %v232
  %297 = vst [vmem:[%s3 + $0x68] sm:$0xff] %v233
  %298 = vst [vmem:[%s3 + $0x70] sm:$0xff] %v234
  %299 = vst [vmem:[%s3 + $0x78] sm:$0xff] %v235
  %300 = vst [vmem:[%s3 + $0x80] sm:$0xff] %v236
  %301 = vst [vmem:[%s3 + $0x88] sm:$0xff] %v237
  %302 = vst [vmem:[%s3 + $0x90] sm:$0xff] %v238
  %303 = vst [vmem:[%s3 + $0x98] sm:$0xff] %v239
  %304 = vst [vmem:[%s3 + $0xa0] sm:$0xff] %v240
  %305 = vst [vmem:[%s3 + $0xa8] sm:$0xff] %v241
  %306 = vst [vmem:[%s3 + $0xb0] sm:$0xff] %v242
  %307 = vst [vmem:[%s3 + $0xb8] sm:$0xff] %v243
  %308 = vst [vmem:[%s3 + $0xc0] sm:$0xff] %v244
  %309 = vst [vmem:[%s3 + $0xc8] sm:$0xff] %v245
  %310 = vst [vmem:[%s3 + $0xd0] sm:$0xff] %v246
  %311 = vst [vmem:[%s3 + $0xd8] sm:$0xff] %v247
  %312 = vst [vmem:[%s3 + $0xe0] sm:$0xff] %v248
  %313 = vst [vmem:[%s3 + $0xe8] sm:$0xff] %v249
  %314 = vst [vmem:[%s3 + $0xf0] sm:$0xff] %v250
  %315 = vst [vmem:[%s3 + $0xf8] sm:$0xff] %v251
  %316 = vst [vmem:[%s3 + $0x100] sm:$0xff] %v252
  %317 = vst [vmem:[%s3 + $0x108] sm:$0xff] %v253
  %318 = vst [vmem:[%s3 + $0x110] sm:$0xff] %v254
  %319 = vst [vmem:[%s3 + $0x118] sm:$0xff] %v255
  %320 = vst [vmem:[%s3 + $0x120] sm:$0xff] %v256
  %321 = vst [vmem:[%s3 + $0x128] sm:$0xff] %v257
  %322 = vst [vmem:[%s3 + $0x130] sm:$0xff] %v258
  %323 = vst [vmem:[%s3 + $0x138] sm:$0xff] %v259
  %324 = vst [vmem:[%s3 + $0x140] sm:$0xff] %v260
  %325 = vst [vmem:[%s3 + $0x148] sm:$0xff] %v261
  %326 = vst [vmem:[%s3 + $0x150] sm:$0xff] %v262
  %327 = vst [vmem:[%s3 + $0x158] sm:$0xff] %v263
  %328 = vst [vmem:[%s3 + $0x160] sm:$0xff] %v264
  %329 = vst [vmem:[%s3 + $0x168] sm:$0xff] %v265
  %330 = vst [vmem:[%s3 + $0x170] sm:$0xff] %v266
  %331 = vst [vmem:[%s3 + $0x178] sm:$0xff] %v267
  %332 = vst [vmem:[%s3 + $0x180] sm:$0xff] %v268
  %333 = vst [vmem:[%s3 + $0x188] sm:$0xff] %v269
  %334 = vst [vmem:[%s3 + $0x190] sm:$0xff] %v270
  %335 = vst [vmem:[%s3 + $0x198] sm:$0xff] %v271
  %336 = vst [vmem:[%s3 + $0x1a0] sm:$0xff] %v272
  %337 = vst [vmem:[%s3 + $0x1a8] sm:$0xff] %v273
  %338 = vst [vmem:[%s3 + $0x1b0] sm:$0xff] %v274
  %339 = vst [vmem:[%s3 + $0x1b8] sm:$0xff] %v275
  %340 = vst [vmem:[%s3 + $0x1c0] sm:$0xff] %v276
  %341 = vst [vmem:[%s3 + $0x1c8] sm:$0xff] %v277
  %342 = vst [vmem:[%s3 + $0x1d0] sm:$0xff] %v278
  %343 = vst [vmem:[%s3 + $0x1d8] sm:$0xff] %v279
  %344 = vst [vmem:[%s3 + $0x1e0] sm:$0xff] %v280
  %345 = vst [vmem:[%s3 + $0x1e8] sm:$0xff] %v281
  %346 = vst [vmem:[%s3 + $0x1f0] sm:$0xff] %v282
  %347 = vst [vmem:[%s3 + $0x1f8] sm:$0xff] %v283
  // Predicated region
  $region14: #{forward.211} parent=0 // pred_check
    _
  $region15: #{forward.211} parent=0 // pred_check_branch
    %349 = sbr.rel (0) target = $region17
  $region16: #{forward.211} parent=0 // pred_region
    _
  $region17: #{forward.211} parent=0 // pred_fallthru
    _
  // Predicated region
  $region18: #{forward.211} parent=0 // pred_check
    _
  $region19: #{forward.211} parent=0 // pred_check_branch
    %351 = sbr.rel (0) target = $region21
  $region20: #{forward.211} parent=0 // pred_region
    _
  $region21: #{forward.211} parent=0 // pred_fallthru
    _

// kernel: forward.212
$region0: #{forward.212}
  #allocation0 [shape = 'u32[]', space=smem, size = 0x4, offset = 0x4, fixed_abs, tag = 'smem constant byte address 0x4 - core index']
  #allocation1 [shape = 'u32[144,128]{1,0:T(1,128)}', space=vmem, size = 0x12000, scoped, tag = 'internal scratch']
  #allocation2 [shape = 'f32[128,128]{1,0:T(8,128)}', space=vmem, size = 0x10000, scoped, tag = 'scratch operand']
  %s0 = inlined_call_operand.vmem [shape: bf16[9,128,128], index: 0, kind: input, shape index: {}]
  %s1 = inlined_call_operand.vmem [shape: bf16[9,128,128], index: 1, kind: input, shape index: {}]
  %s2 = inlined_call_operand.vmem [shape: f32[128,128], index: 2, kind: output, shape index: {}]
  %s3 = sld [smem:[#allocation0]]
  $region49: #{forward.212} parent=0
    _
  %s5 = ssub.s32 1, %s3
  %s6 = scalar_select 0, %s5, %s3
  loop: start=0, step=1, limit=11
  $region2: #{forward.212} parent=0 // loop_pre_header
    _
  $region3: #{forward.212} parent=0 // loop_header
    %s8 = sphi 0, %s12
    %p9 = scmp.ge.s32.totalorder %s8, 11
    %s15 = sphi 0, %s41
    %s16 = sphi 0, %s37
    %s17 = sphi 0, %s33
    %s18 = sphi 0, %s29
    %s19 = sphi 0, %s15
    %s20 = sphi 0, %s16
    %s21 = sphi 0, %s17
    %s22 = sphi 0, %s18
    %s23 = sphi 0, %s19
    %s24 = sphi 0, %s20
    %s25 = sphi 0, %s21
    %s26 = sphi 0, %s22
    %s48 = sphi 0, %s50
    %s51 = sphi 0, %s48
    %s52 = sphi 0, %s51
    %s68 = sphi 0, %s52
    %s78 = sphi 0, %s80
    %s81 = sphi 0, %s78
    %s82 = sphi 0, %s81
    %s98 = sphi 0, %s82
    %s106 = sphi 0, %s108
    %s109 = sphi 0, %s106
    %s110 = sphi 0, %s109
    %s126 = sphi 0, %s110
  $region4: #{forward.212} parent=0 // loop_header_branch
    %11 = sbr.rel (%p9) target = $region8
  $region5: #{forward.212} parent=0 // loop_body
    %s13 = ssub.s32 %s8, 1
    %s14 = ssub.s32 %s8, 2
    %s27 = sadd.s32 1, %s18
    %p28 = scmp.ge.s32.totalorder %s27, 1
    %s29 = scalar_select %p28, 0, %s27
    %s30 = sadd.s32 1, %s17
    %s31 = scalar_select %p28, %s30, %s17
    %p32 = scmp.ge.s32.totalorder %s31, 9
    %s33 = scalar_select %p32, 0, %s31
    %s34 = sadd.s32 1, %s16
    %s35 = scalar_select %p32, %s34, %s16
    %p36 = scmp.ge.s32.totalorder %s35, 1
    %s37 = scalar_select %p36, 0, %s35
    %s38 = sadd.s32 1, %s15
    %s39 = scalar_select %p36, %s38, %s15
    %p40 = scmp.ge.s32.totalorder %s39, 1
    %s41 = scalar_select %p40, 0, %s39
    %s42 = ssub.s32 %s17, %s33
    %s43 = ssub.s32 %s15, %s41
    %s44 = sor.u32 %s42, %s43
    %s45 = ssub.s32 %s18, %s29
    %s46 = sor.u32 %s44, %s45
    %p47 = scmp.eq.s32.totalorder %s46, 0
    %s49 = sadd.s32 %s48, 1
    %s50 = scalar_select %p47, %s48, %s49
    %p53 = pneg %p47
    %p54 = scmp.eq.s32.totalorder %s8, 8
    %p55 = por %p53, %p54
    %p56 = scmp.ne.s32.totalorder %s48, %s51
    %p57 = scmp.eq.s32.totalorder %s8, 0
    %p58 = por %p56, %p57
    %p59 = scmp.ne.s32.totalorder %s48, %s51
    %p60 = scmp.eq.s32.totalorder %s13, 8
    %p61 = por %p59, %p60
    %p62 = scmp.ne.s32.totalorder %s51, %s52
    %p63 = scmp.eq.s32.totalorder %s13, 0
    %p64 = por %p62, %p63
    %p65 = scmp.ne.s32.totalorder %s51, %s52
    %p66 = scmp.eq.s32.totalorder %s14, 8
    %p67 = por %p65, %p66
    %p69 = scmp.ne.s32.totalorder %s52, %s68
    %p70 = scmp.eq.s32.totalorder %s14, 0
    %p71 = por %p69, %p70
    %s72 = ssub.s32 %s17, %s33
    %s73 = ssub.s32 %s18, %s29
    %s74 = sor.u32 %s72, %s73
    %s75 = ssub.s32 %s16, %s37
    %s76 = sor.u32 %s74, %s75
    %p77 = scmp.eq.s32.totalorder %s76, 0
    %s79 = sadd.s32 %s78, 1
    %s80 = scalar_select %p77, %s78, %s79
    %p83 = pneg %p77
    %p84 = scmp.eq.s32.totalorder %s8, 8
    %p85 = por %p83, %p84
    %p86 = scmp.ne.s32.totalorder %s78, %s81
    %p87 = scmp.eq.s32.totalorder %s8, 0
    %p88 = por %p86, %p87
    %p89 = scmp.ne.s32.totalorder %s78, %s81
    %p90 = scmp.eq.s32.totalorder %s13, 8
    %p91 = por %p89, %p90
    %p92 = scmp.ne.s32.totalorder %s81, %s82
    %p93 = scmp.eq.s32.totalorder %s13, 0
    %p94 = por %p92, %p93
    %p95 = scmp.ne.s32.totalorder %s81, %s82
    %p96 = scmp.eq.s32.totalorder %s14, 8
    %p97 = por %p95, %p96
    %p99 = scmp.ne.s32.totalorder %s82, %s98
    %p100 = scmp.eq.s32.totalorder %s14, 0
    %p101 = por %p99, %p100
    %s102 = ssub.s32 %s15, %s41
    %s103 = ssub.s32 %s16, %s37
    %s104 = sor.u32 %s102, %s103
    %p105 = scmp.eq.s32.totalorder %s104, 0
    %s107 = sadd.s32 %s106, 1
    %s108 = scalar_select %p105, %s106, %s107
    %p111 = pneg %p105
    %p112 = scmp.eq.s32.totalorder %s8, 8
    %p113 = por %p111, %p112
    %p114 = scmp.ne.s32.totalorder %s106, %s109
    %p115 = scmp.eq.s32.totalorder %s8, 0
    %p116 = por %p114, %p115
    %p117 = scmp.ne.s32.totalorder %s106, %s109
    %p118 = scmp.eq.s32.totalorder %s13, 8
    %p119 = por %p117, %p118
    %p120 = scmp.ne.s32.totalorder %s109, %s110
    %p121 = scmp.eq.s32.totalorder %s13, 0
    %p122 = por %p120, %p121
    %p123 = scmp.ne.s32.totalorder %s109, %s110
    %p124 = scmp.eq.s32.totalorder %s14, 8
    %p125 = por %p123, %p124
    %p127 = scmp.ne.s32.totalorder %s110, %s126
    %p128 = scmp.eq.s32.totalorder %s14, 0
    %p129 = por %p127, %p128
    %p130 = scmp.le.s32.totalorder 1, %s8
    %p131 = scmp.lt.s32.totalorder %s8, 10
    %p132 = pnand %p130, %p131
    %p133 = pneg %p132
    // Predicated region
    $region9: #{forward.212} parent=5 // pred_check
      _
    $region10: #{forward.212} parent=5 // pred_check_branch
      %135 = sbr.rel (%p132) target = $region12
    $region11: #{forward.212} parent=5 // pred_region
      %s136 = ssub.s32 %s8, 1
    $region12: #{forward.212} parent=5 // pred_fallthru
      _
    %p137 = scmp.lt.s32.totalorder %s8, 9
    // Predicated region
    $region13: #{forward.212} parent=5 // pred_check
      %p138 = pneg %p137
    $region14: #{forward.212} parent=5 // pred_check_branch
      %140 = sbr.rel (%p138) target = $region16
    $region15: #{forward.212} parent=5 // pred_region
      // Predicated region
      $region17: #{forward.212} parent=15 // pred_check
        %p141 = pneg %p58
      $region18: #{forward.212} parent=15 // pred_check_branch
        %143 = sbr.rel (%p141) target = $region20
      $region19: #{forward.212} parent=15 // pred_region
        %s144 = smul.u32 16, %s15
        %p145 = scmp.lt.s32.totalorder %s17, 8
        %s146 = scalar_select %p145, %s17, 8
        %p147 = scmp.lt.s32.totalorder %s144, 15
        %s148 = scalar_select %p147, %s144, 15
        %p149 = scmp.lt.s32.totalorder %s18, 0
        %s150 = scalar_select %p149, %s18, 0
        %s151 = sadd.s32 %s150, %s148
        %s152 = smul.addr %s146, 16
        %s153 = sadd.s32 %s151, %s152
        %s154 = smul.addr %s153, 4
        %s155 = scalar_lea.vmem %s0, %s154
        %s156 = smul.u32 16, %s15
      $region20: #{forward.212} parent=15 // pred_fallthru
        _
      // Predicated region
      $region21: #{forward.212} parent=15 // pred_check
        %p157 = pneg %p88
      $region22: #{forward.212} parent=15 // pred_check_branch
        %159 = sbr.rel (%p157) target = $region24
      $region23: #{forward.212} parent=15 // pred_region
        %s160 = smul.u32 16, %s18
        %p161 = scmp.lt.s32.totalorder %s17, 8
        %s162 = scalar_select %p161, %s17, 8
        %p163 = scmp.lt.s32.totalorder %s160, 15
        %s164 = scalar_select %p163, %s160, 15
        %p165 = scmp.lt.s32.totalorder %s16, 0
        %s166 = scalar_select %p165, %s16, 0
        %s167 = sadd.s32 %s166, %s164
        %s168 = smul.addr %s162, 16
        %s169 = sadd.s32 %s167, %s168
        %s170 = smul.addr %s169, 4
        %s171 = scalar_lea.vmem %s1, %s170
        %s172 = smul.u32 16, %s18
      $region24: #{forward.212} parent=15 // pred_fallthru
        _
    $region16: #{forward.212} parent=5 // pred_fallthru
      _
    %p173 = scmp.le.s32.totalorder 1, %s8
    %p174 = scmp.lt.s32.totalorder %s8, 10
    %p175 = pnand %p173, %p174
    %p176 = pneg %p175
    // Predicated region
    $region25: #{forward.212} parent=5 // pred_check
      _
    $region26: #{forward.212} parent=5 // pred_check_branch
      %178 = sbr.rel (%p175) target = $region28
    $region27: #{forward.212} parent=5 // pred_region
      %s179 = ssub.s32 %s8, 1
      %s180 = smul.u32 16, %s19
      %p181 = scmp.lt.s32.totalorder %s21, 8
      %s182 = scalar_select %p181, %s21, 8
      %p183 = scmp.lt.s32.totalorder %s180, 15
      %s184 = scalar_select %p183, %s180, 15
      %p185 = scmp.lt.s32.totalorder %s22, 0
      %s186 = scalar_select %p185, %s22, 0
      %s187 = sadd.s32 %s186, %s184
      %s188 = smul.addr %s182, 16
      %s189 = sadd.s32 %s187, %s188
      %s190 = smul.addr %s189, 4
      %s191 = scalar_lea.vmem %s0, %s190
      %p192 = pneg %p64
      %p193 = pneg %p61
      %s194 = smul.u32 16, %s22
      %p195 = scmp.lt.s32.totalorder %s21, 8
      %s196 = scalar_select %p195, %s21, 8
      %p197 = scmp.lt.s32.totalorder %s194, 15
      %s198 = scalar_select %p197, %s194, 15
      %p199 = scmp.lt.s32.totalorder %s20, 0
      %s200 = scalar_select %p199, %s20, 0
      %s201 = sadd.s32 %s200, %s198
      %s202 = smul.addr %s196, 16
      %s203 = sadd.s32 %s201, %s202
      %s204 = smul.addr %s203, 4
      %s205 = scalar_lea.vmem %s1, %s204
      %p206 = pneg %p94
      %p207 = pneg %p91
      %p208 = pneg %p122
      %p209 = pneg %p119
      %s210 = smul.u32 16, %s19
      %p211 = scmp.lt.s32.totalorder %s210, 15
      %s212 = scalar_select %p211, %s210, 15
      %p213 = scmp.lt.s32.totalorder %s20, 0
      %s214 = scalar_select %p213, %s20, 0
      %s215 = sadd.s32 %s214, %s212
      %s216 = smul.addr %s215, 8
      %s217 = scalar_lea.vmem %s2, %s216
      %s218 = smul.u32 16, %s19
      %p219 = scmp.lt.s32.totalorder %s21, 8
      %s220 = scalar_select %p219, %s21, 8
      %p221 = scmp.lt.s32.totalorder %s218, 15
      %s222 = scalar_select %p221, %s218, 15
      %p223 = scmp.lt.s32.totalorder %s22, 0
      %s224 = scalar_select %p223, %s22, 0
      %s225 = sadd.s32 %s224, %s222
      %s226 = smul.addr %s220, 16
      %s227 = sadd.s32 %s225, %s226
      %s228 = smul.addr %s227, 4
      %s229 = scalar_lea.vmem %s0, %s228
      %s230 = smul.u32 16, %s19
      %s231 = smul.u32 16, %s22
      %p232 = scmp.lt.s32.totalorder %s21, 8
      %s233 = scalar_select %p232, %s21, 8
      %p234 = scmp.lt.s32.totalorder %s231, 15
      %s235 = scalar_select %p234, %s231, 15
      %p236 = scmp.lt.s32.totalorder %s20, 0
      %s237 = scalar_select %p236, %s20, 0
      %s238 = sadd.s32 %s237, %s235
      %s239 = smul.addr %s233, 16
      %s240 = sadd.s32 %s238, %s239
      %s241 = smul.addr %s240, 4
      %s242 = scalar_lea.vmem %s1, %s241
      %s243 = smul.u32 16, %s22
      %s244 = smul.u32 16, %s19
      %p245 = scmp.lt.s32.totalorder %s244, 15
      %s246 = scalar_select %p245, %s244, 15
      %p247 = scmp.lt.s32.totalorder %s20, 0
      %s248 = scalar_select %p247, %s20, 0
      %s249 = sadd.s32 %s248, %s246
      %s250 = smul.addr %s249, 8
      %s251 = scalar_lea.vmem %s2, %s250
      %s252 = smul.u32 16, %s19
      %p254 = scmp.eq.s32.totalorder %s21, 0
      %p255 = scmp.eq.s32.totalorder %s22, 0
      %p256 = pnand %p254, %p255
      %p257 = pneg %p256
      // Predicated region
      $region29: #{forward.212} parent=27 // pred_check
        _
      $region30: #{forward.212} parent=27 // pred_check_branch
        %259 = sbr.rel (%p256) target = $region32
      $region31: #{forward.212} parent=27 // pred_region
        %260 = vst [vmem:[#allocation2] sm:$0xff] 0.0
        %261 = vst [vmem:[#allocation2 + $0x8] sm:$0xff] 0.0
        %262 = vst [vmem:[#allocation2 + $0x10] sm:$0xff] 0.0
        %263 = vst [vmem:[#allocation2 + $0x18] sm:$0xff] 0.0
        %264 = vst [vmem:[#allocation2 + $0x20] sm:$0xff] 0.0
        %265 = vst [vmem:[#allocation2 + $0x28] sm:$0xff] 0.0
        %266 = vst [vmem:[#allocation2 + $0x30] sm:$0xff] 0.0
        %267 = vst [vmem:[#allocation2 + $0x38] sm:$0xff] 0.0
        %268 = vst [vmem:[#allocation2 + $0x40] sm:$0xff] 0.0
        %269 = vst [vmem:[#allocation2 + $0x48] sm:$0xff] 0.0
        %270 = vst [vmem:[#allocation2 + $0x50] sm:$0xff] 0.0
        %271 = vst [vmem:[#allocation2 + $0x58] sm:$0xff] 0.0
        %272 = vst [vmem:[#allocation2 + $0x60] sm:$0xff] 0.0
        %273 = vst [vmem:[#allocation2 + $0x68] sm:$0xff] 0.0
        %274 = vst [vmem:[#allocation2 + $0x70] sm:$0xff] 0.0
        %275 = vst [vmem:[#allocation2 + $0x78] sm:$0xff] 0.0
      $region32: #{forward.212} parent=27 // pred_fallthru
        _
      %v276 = vld [vmem:[#allocation2] sm:$0xff]
      %v277 = vld [vmem:[#allocation2 + $0x8] sm:$0xff]
      %v278 = vld [vmem:[#allocation2 + $0x10] sm:$0xff]
      %v279 = vld [vmem:[#allocation2 + $0x18] sm:$0xff]
      %v280 = vld [vmem:[#allocation2 + $0x20] sm:$0xff]
      %v281 = vld [vmem:[#allocation2 + $0x28] sm:$0xff]
      %v282 = vld [vmem:[#allocation2 + $0x30] sm:$0xff]
      %v283 = vld [vmem:[#allocation2 + $0x38] sm:$0xff]
      %v284 = vld [vmem:[#allocation2 + $0x40] sm:$0xff]
      %v285 = vld [vmem:[#allocation2 + $0x48] sm:$0xff]
      %v286 = vld [vmem:[#allocation2 + $0x50] sm:$0xff]
      %v287 = vld [vmem:[#allocation2 + $0x58] sm:$0xff]
      %v288 = vld [vmem:[#allocation2 + $0x60] sm:$0xff]
      %v289 = vld [vmem:[#allocation2 + $0x68] sm:$0xff]
      %v290 = vld [vmem:[#allocation2 + $0x70] sm:$0xff]
      %v291 = vld [vmem:[#allocation2 + $0x78] sm:$0xff]
      %v292 = vld [vmem:[%s229] sm:$0xf]
      %v293 = vld [vmem:[%s229 + $0x4] sm:$0xf]
      %v294 = vld [vmem:[%s229 + $0x8] sm:$0xf]
      %v295 = vld [vmem:[%s229 + $0xc] sm:$0xf]
      %v296 = vld [vmem:[%s229 + $0x10] sm:$0xf]
      %v297 = vld [vmem:[%s229 + $0x14] sm:$0xf]
      %v298 = vld [vmem:[%s229 + $0x18] sm:$0xf]
      %v299 = vld [vmem:[%s229 + $0x1c] sm:$0xf]
      %v300 = vld [vmem:[%s229 + $0x20] sm:$0xf]
      %v301 = vld [vmem:[%s229 + $0x24] sm:$0xf]
      %v302 = vld [vmem:[%s229 + $0x28] sm:$0xf]
      %v303 = vld [vmem:[%s229 + $0x2c] sm:$0xf]
      %v304 = vld [vmem:[%s229 + $0x30] sm:$0xf]
      %v305 = vld [vmem:[%s229 + $0x34] sm:$0xf]
      %v306 = vld [vmem:[%s229 + $0x38] sm:$0xf]
      %v307 = vld [vmem:[%s229 + $0x3c] sm:$0xf]
      %v308 = vld [vmem:[%s242] sm:$0xf]
      %v309 = vld [vmem:[%s242 + $0x4] sm:$0xf]
      %v310 = vld [vmem:[%s242 + $0x8] sm:$0xf]
      %v311 = vld [vmem:[%s242 + $0xc] sm:$0xf]
      %v312 = vld [vmem:[%s242 + $0x10] sm:$0xf]
      %v313 = vld [vmem:[%s242 + $0x14] sm:$0xf]
      %v314 = vld [vmem:[%s242 + $0x18] sm:$0xf]
      %v315 = vld [vmem:[%s242 + $0x1c] sm:$0xf]
      %v316 = vld [vmem:[%s242 + $0x20] sm:$0xf]
      %v317 = vld [vmem:[%s242 + $0x24] sm:$0xf]
      %v318 = vld [vmem:[%s242 + $0x28] sm:$0xf]
      %v319 = vld [vmem:[%s242 + $0x2c] sm:$0xf]
      %v320 = vld [vmem:[%s242 + $0x30] sm:$0xf]
      %v321 = vld [vmem:[%s242 + $0x34] sm:$0xf]
      %v322 = vld [vmem:[%s242 + $0x38] sm:$0xf]
      %v323 = vld [vmem:[%s242 + $0x3c] sm:$0xf]
      %v340 = vunpack.c.l.b16 %v292
      %v341 = vunpack.c.l.b16 %v293
      %v342 = vunpack.c.l.b16 %v294
      %v343 = vunpack.c.l.b16 %v295
      %v344 = vunpack.c.l.b16 %v296
      %v345 = vunpack.c.l.b16 %v297
      %v346 = vunpack.c.l.b16 %v298
      %v347 = vunpack.c.l.b16 %v299
      %v348 = vunpack.c.l.b16 %v300
      %v349 = vunpack.c.l.b16 %v301
      %v350 = vunpack.c.l.b16 %v302
      %v351 = vunpack.c.l.b16 %v303
      %v352 = vunpack.c.l.b16 %v304
      %v353 = vunpack.c.l.b16 %v305
      %v354 = vunpack.c.l.b16 %v306
      %v355 = vunpack.c.l.b16 %v307
      %v356 = vpack.c.b16 %v341, %v340
      %v357 = vpack.c.b16 %v343, %v342
      %v358 = vpack.c.b16 %v345, %v344
      %v359 = vpack.c.b16 %v347, %v346
      %v360 = vpack.c.b16 %v349, %v348
      %v361 = vpack.c.b16 %v351, %v350
      %v362 = vpack.c.b16 %v353, %v352
      %v363 = vpack.c.b16 %v355, %v354
      %v388 = vunpack.c.l.b16 %v308
      %v389 = vunpack.c.l.b16 %v309
      %v390 = vunpack.c.l.b16 %v310
      %v391 = vunpack.c.l.b16 %v311
      %v392 = vunpack.c.l.b16 %v312
      %v393 = vunpack.c.l.b16 %v313
      %v394 = vunpack.c.l.b16 %v314
      %v395 = vunpack.c.l.b16 %v315
      %v396 = vunpack.c.l.b16 %v316
      %v397 = vunpack.c.l.b16 %v317
      %v398 = vunpack.c.l.b16 %v318
      %v399 = vunpack.c.l.b16 %v319
      %v400 = vunpack.c.l.b16 %v320
      %v401 = vunpack.c.l.b16 %v321
      %v402 = vunpack.c.l.b16 %v322
      %v403 = vunpack.c.l.b16 %v323
      %v404 = vpack.c.b16 %v389, %v388
      %v405 = vpack.c.b16 %v391, %v390
      %v406 = vpack.c.b16 %v393, %v392
      %v407 = vpack.c.b16 %v395, %v394
      %v408 = vpack.c.b16 %v397, %v396
      %v409 = vpack.c.b16 %v399, %v398
      %v410 = vpack.c.b16 %v401, %v400
      %v411 = vpack.c.b16 %v403, %v402
      %420 = vmatprep.subr.bf16.mxu0 0
      %421 = vmatpush1.bf16.msra.mxu0 %v404
      %422 = vmatprep.subr.bf16.mxu0 0
      %423 = vmatpush1.bf16.msra.mxu0 %v405
      %424 = vmatprep.subr.bf16.mxu0 0
      %425 = vmatpush1.bf16.msra.mxu0 %v406
      %426 = vmatprep.subr.bf16.mxu0 0
      %427 = vmatpush1.bf16.msra.mxu0 %v407
      %428 = vmatprep.subr.bf16.mxu0 0
      %429 = vmatpush1.bf16.msra.mxu0 %v408
      %430 = vmatprep.subr.bf16.mxu0 0
      %431 = vmatpush1.bf16.msra.mxu0 %v409
      %432 = vmatprep.subr.bf16.mxu0 0
      %433 = vmatpush1.bf16.msra.mxu0 %v410
      %434 = vmatprep.subr.bf16.mxu0 0
      %435 = vmatpush1.bf16.msra.mxu0 %v411
      %436 = vmatprep.subr.bf16.mxu0 0
      %437 = vmatpush1.bf16.msra.mxu0 0
      %438 = vmatprep.subr.bf16.mxu0 0
      %439 = vmatpush1.bf16.msra.mxu0 0
      %440 = vmatprep.subr.bf16.mxu0 0
      %441 = vmatpush1.bf16.msra.mxu0 0
      %442 = vmatprep.subr.bf16.mxu0 0
      %443 = vmatpush1.bf16.msra.mxu0 0
      %444 = vmatprep.subr.bf16.mxu0 0
      %445 = vmatpush1.bf16.msra.mxu0 0
      %446 = vmatprep.subr.bf16.mxu0 0
      %447 = vmatpush1.bf16.msra.mxu0 0
      %448 = vmatprep.subr.bf16.mxu0 0
      %449 = vmatpush1.bf16.msra.mxu0 0
      %450 = vmatprep.subr.bf16.mxu0 0
      %451 = vmatpush1.bf16.msra.mxu0 0
      %452 = vmatprep.mubr.bf16.mxu0 0
      %453 = vmatmul.mubr.bf16.gmra.mrb[0].mxu0 %v356
      %v454 = vpop.f32.mrb[0].mxu0
      %v455 = vadd.f32 0.0, %v454
      %v456 = vpop.f32.mrb[0].mxu0
      %v457 = vpop.f32.mrb[0].mxu0
      %v458 = vadd.f32 0.0, %v457
      %v459 = vpop.f32.mrb[0].mxu0
      %460 = vmatprep.mubr.bf16.mxu0 0
      %461 = vmatmul.mubr.bf16.gmra.mrb[0].mxu0 %v357
      %v462 = vpop.f32.mrb[0].mxu0
      %v463 = vadd.f32 0.0, %v462
      %v464 = vpop.f32.mrb[0].mxu0
      %v465 = vpop.f32.mrb[0].mxu0
      %v466 = vadd.f32 0.0, %v465
      %v467 = vpop.f32.mrb[0].mxu0
      %468 = vmatprep.mubr.bf16.mxu0 0
      %469 = vmatmul.mubr.bf16.gmra.mrb[0].mxu0 %v358
      %v470 = vpop.f32.mrb[0].mxu0
      %v471 = vadd.f32 0.0, %v470
      %v472 = vpop.f32.mrb[0].mxu0
      %v473 = vpop.f32.mrb[0].mxu0
      %v474 = vadd.f32 0.0, %v473
      %v475 = vpop.f32.mrb[0].mxu0
      %476 = vmatprep.mubr.bf16.mxu0 0
      %477 = vmatmul.mubr.bf16.gmra.mrb[0].mxu0 %v359
      %v478 = vpop.f32.mrb[0].mxu0
      %v479 = vadd.f32 0.0, %v478
      %v480 = vpop.f32.mrb[0].mxu0
      %v481 = vpop.f32.mrb[0].mxu0
      %v482 = vadd.f32 0.0, %v481
      %v483 = vpop.f32.mrb[0].mxu0
      %484 = vmatprep.mubr.bf16.mxu0 0
      %485 = vmatmul.mubr.bf16.gmra.mrb[0].mxu0 %v360
      %v486 = vpop.f32.mrb[0].mxu0
      %v487 = vadd.f32 0.0, %v486
      %v488 = vpop.f32.mrb[0].mxu0
      %v489 = vpop.f32.mrb[0].mxu0
      %v490 = vadd.f32 0.0, %v489
      %v491 = vpop.f32.mrb[0].mxu0
      %492 = vmatprep.mubr.bf16.mxu0 0
      %493 = vmatmul.mubr.bf16.gmra.mrb[0].mxu0 %v361
      %v494 = vpop.f32.mrb[0].mxu0
      %v495 = vadd.f32 0.0, %v494
      %v496 = vpop.f32.mrb[0].mxu0
      %v497 = vpop.f32.mrb[0].mxu0
      %v498 = vadd.f32 0.0, %v497
      %v499 = vpop.f32.mrb[0].mxu0
      %500 = vmatprep.mubr.bf16.mxu0 0
      %501 = vmatmul.mubr.bf16.gmra.mrb[0].mxu0 %v362
      %v502 = vpop.f32.mrb[0].mxu0
      %v503 = vadd.f32 0.0, %v502
      %v504 = vpop.f32.mrb[0].mxu0
      %v505 = vpop.f32.mrb[0].mxu0
      %v506 = vadd.f32 0.0, %v505
      %v507 = vpop.f32.mrb[0].mxu0
      %508 = vmatprep.mubr.bf16.mxu0 0
      %509 = vmatmul.mubr.bf16.gmra.mrb[0].mxu0 %v363
      %v510 = vpop.f32.mrb[0].mxu0
      %v511 = vadd.f32 0.0, %v510
      %v512 = vpop.f32.mrb[0].mxu0
      %v513 = vpop.f32.mrb[0].mxu0
      %v514 = vadd.f32 0.0, %v513
      %v515 = vpop.f32.mrb[0].mxu0
      %516 = vdwg.mxu0
      %v517 = vadd.f32 %v276, %v455
      %v518 = vadd.f32 %v277, %v458
      %v519 = vadd.f32 %v278, %v463
      %v520 = vadd.f32 %v279, %v466
      %v521 = vadd.f32 %v280, %v471
      %v522 = vadd.f32 %v281, %v474
      %v523 = vadd.f32 %v282, %v479
      %v524 = vadd.f32 %v283, %v482
      %v525 = vadd.f32 %v284, %v487
      %v526 = vadd.f32 %v285, %v490
      %v527 = vadd.f32 %v286, %v495
      %v528 = vadd.f32 %v287, %v498
      %v529 = vadd.f32 %v288, %v503
      %v530 = vadd.f32 %v289, %v506
      %v531 = vadd.f32 %v290, %v511
      %v532 = vadd.f32 %v291, %v514
      %533 = vst [vmem:[#allocation2] sm:$0xff] %v517
      %534 = vst [vmem:[#allocation2 + $0x8] sm:$0xff] %v518
      %535 = vst [vmem:[#allocation2 + $0x10] sm:$0xff] %v519
      %536 = vst [vmem:[#allocation2 + $0x18] sm:$0xff] %v520
      %537 = vst [vmem:[#allocation2 + $0x20] sm:$0xff] %v521
      %538 = vst [vmem:[#allocation2 + $0x28] sm:$0xff] %v522
      %539 = vst [vmem:[#allocation2 + $0x30] sm:$0xff] %v523
      %540 = vst [vmem:[#allocation2 + $0x38] sm:$0xff] %v524
      %541 = vst [vmem:[#allocation2 + $0x40] sm:$0xff] %v525
      %542 = vst [vmem:[#allocation2 + $0x48] sm:$0xff] %v526
      %543 = vst [vmem:[#allocation2 + $0x50] sm:$0xff] %v527
      %544 = vst [vmem:[#allocation2 + $0x58] sm:$0xff] %v528
      %545 = vst [vmem:[#allocation2 + $0x60] sm:$0xff] %v529
      %546 = vst [vmem:[#allocation2 + $0x68] sm:$0xff] %v530
      %547 = vst [vmem:[#allocation2 + $0x70] sm:$0xff] %v531
      %548 = vst [vmem:[#allocation2 + $0x78] sm:$0xff] %v532
      %p549 = scmp.eq.s32.totalorder %s21, 8
      %p550 = pnand %p549, %p255
      %p551 = pneg %p550
      // Predicated region
      $region33: #{forward.212} parent=27 // pred_check
        _
      $region34: #{forward.212} parent=27 // pred_check_branch
        %553 = sbr.rel (%p550) target = $region36
      $region35: #{forward.212} parent=27 // pred_region
        %v554 = vld [vmem:[#allocation2] sm:$0xff]
        %v555 = vld [vmem:[#allocation2 + $0x8] sm:$0xff]
        %v556 = vld [vmem:[#allocation2 + $0x10] sm:$0xff]
        %v557 = vld [vmem:[#allocation2 + $0x18] sm:$0xff]
        %v558 = vld [vmem:[#allocation2 + $0x20] sm:$0xff]
        %v559 = vld [vmem:[#allocation2 + $0x28] sm:$0xff]
        %v560 = vld [vmem:[#allocation2 + $0x30] sm:$0xff]
        %v561 = vld [vmem:[#allocation2 + $0x38] sm:$0xff]
        %v562 = vld [vmem:[#allocation2 + $0x40] sm:$0xff]
        %v563 = vld [vmem:[#allocation2 + $0x48] sm:$0xff]
        %v564 = vld [vmem:[#allocation2 + $0x50] sm:$0xff]
        %v565 = vld [vmem:[#allocation2 + $0x58] sm:$0xff]
        %v566 = vld [vmem:[#allocation2 + $0x60] sm:$0xff]
        %v567 = vld [vmem:[#allocation2 + $0x68] sm:$0xff]
        %v568 = vld [vmem:[#allocation2 + $0x70] sm:$0xff]
        %v569 = vld [vmem:[#allocation2 + $0x78] sm:$0xff]
        %570 = vst [vmem:[%s251] sm:$0xff] %v554
        %571 = vst [vmem:[%s251 + $0x8] sm:$0xff] %v555
        %572 = vst [vmem:[%s251 + $0x10] sm:$0xff] %v556
        %573 = vst [vmem:[%s251 + $0x18] sm:$0xff] %v557
        %574 = vst [vmem:[%s251 + $0x20] sm:$0xff] %v558
        %575 = vst [vmem:[%s251 + $0x28] sm:$0xff] %v559
        %576 = vst [vmem:[%s251 + $0x30] sm:$0xff] %v560
        %577 = vst [vmem:[%s251 + $0x38] sm:$0xff] %v561
        %578 = vst [vmem:[%s251 + $0x40] sm:$0xff] %v562
        %579 = vst [vmem:[%s251 + $0x48] sm:$0xff] %v563
        %580 = vst [vmem:[%s251 + $0x50] sm:$0xff] %v564
        %581 = vst [vmem:[%s251 + $0x58] sm:$0xff] %v565
        %582 = vst [vmem:[%s251 + $0x60] sm:$0xff] %v566
        %583 = vst [vmem:[%s251 + $0x68] sm:$0xff] %v567
        %584 = vst [vmem:[%s251 + $0x70] sm:$0xff] %v568
        %585 = vst [vmem:[%s251 + $0x78] sm:$0xff] %v569
      $region36: #{forward.212} parent=27 // pred_fallthru
        _
      %s586 = smul.u32 16, %s19
      %p587 = scmp.lt.s32.totalorder %s586, 15
      %s588 = scalar_select %p587, %s586, 15
      %p589 = scmp.lt.s32.totalorder %s20, 0
      %s590 = scalar_select %p589, %s20, 0
      %s591 = sadd.s32 %s590, %s588
      %s592 = smul.addr %s591, 8
      %s593 = scalar_lea.vmem %s2, %s592
      // Predicated region
      $region37: #{forward.212} parent=27 // pred_check
        %p594 = pneg %p119
      $region38: #{forward.212} parent=27 // pred_check_branch
        %596 = sbr.rel (%p594) target = $region40
      $region39: #{forward.212} parent=27 // pred_region
        %s597 = smul.u32 16, %s19
      $region40: #{forward.212} parent=27 // pred_fallthru
        _
      // Predicated region
      $region41: #{forward.212} parent=27 // pred_check
        %p598 = pneg %p119
      $region42: #{forward.212} parent=27 // pred_check_branch
        %600 = sbr.rel (%p598) target = $region44
      $region43: #{forward.212} parent=27 // pred_region
        %s601 = smul.u32 16, %s19
        %p602 = scmp.lt.s32.totalorder %s601, 15
        %s603 = scalar_select %p602, %s601, 15
        %p604 = scmp.lt.s32.totalorder %s20, 0
        %s605 = scalar_select %p604, %s20, 0
        %s606 = sadd.s32 %s605, %s603
        %s607 = smul.addr %s606, 8
        %s608 = scalar_lea.vmem %s2, %s607
      $region44: #{forward.212} parent=27 // pred_fallthru
        _
    $region28: #{forward.212} parent=5 // pred_fallthru
      _
    %p609 = scmp.le.s32.totalorder 2, %s8
    // Predicated region
    $region45: #{forward.212} parent=5 // pred_check
      %p610 = pneg %p609
    $region46: #{forward.212} parent=5 // pred_check_branch
      %612 = sbr.rel (%p610) target = $region48
    $region47: #{forward.212} parent=5 // pred_region
      %s613 = ssub.s32 %s8, 2
    $region48: #{forward.212} parent=5 // pred_fallthru
      _
  $region6: #{forward.212} parent=0 // loop_footer
    %s12 = sadd.s32 1, %s8
  $region7: #{forward.212} parent=0 // loop_footer_branch
    %7 = sbr.rel target = $region3
  $region8: #{forward.212} parent=0 // loop_exit
    _

// kernel: forward.213
$region0: #{forward.213}
  #allocation0 [shape = 'u32[]', space=smem, size = 0x4, offset = 0x4, fixed_abs, tag = 'smem constant byte address 0x4 - core index']
  #allocation1 [shape = 'u32[144,128]{1,0:T(1,128)}', space=vmem, size = 0x12000, scoped, tag = 'internal scratch']
  %s0 = inlined_call_operand.vmem [shape: f32[128,128], index: 0, kind: input, shape index: {}]
  %s1 = inlined_call_operand.vmem [shape: f32[1,128], index: 1, kind: input, shape index: {}]
  %s2 = inlined_call_operand.vmem [shape: f32[1,128], index: 2, kind: input, shape index: {}]
  %s3 = inlined_call_operand.vmem [shape: f32[128,128], index: 3, kind: output, shape index: {}]
  %s4 = sld [smem:[#allocation0]]
  $region22: #{forward.213} parent=0
    _
  %s6 = ssub.s32 1, %s4
  %s7 = scalar_select 0, %s6, %s4
  // Predicated region
  $region2: #{forward.213} parent=0 // pred_check
    _
  $region3: #{forward.213} parent=0 // pred_check_branch
    %9 = sbr.rel (0) target = $region5
  $region4: #{forward.213} parent=0 // pred_region
    _
  $region5: #{forward.213} parent=0 // pred_fallthru
    _
  // Predicated region
  $region6: #{forward.213} parent=0 // pred_check
    _
  $region7: #{forward.213} parent=0 // pred_check_branch
    %11 = sbr.rel (0) target = $region9
  $region8: #{forward.213} parent=0 // pred_region
    _
  $region9: #{forward.213} parent=0 // pred_fallthru
    _
  // Predicated region
  $region10: #{forward.213} parent=0 // pred_check
    _
  $region11: #{forward.213} parent=0 // pred_check_branch
    %13 = sbr.rel (0) target = $region13
  $region12: #{forward.213} parent=0 // pred_region
    _
  $region13: #{forward.213} parent=0 // pred_fallthru
    _
  %v14 = vld [vmem:[%s0] sm:$0xff]
  %v15 = vld [vmem:[%s0 + $0x8] sm:$0xff]
  %v16 = vld [vmem:[%s0 + $0x10] sm:$0xff]
  %v17 = vld [vmem:[%s0 + $0x18] sm:$0xff]
  %v18 = vld [vmem:[%s0 + $0x20] sm:$0xff]
  %v19 = vld [vmem:[%s0 + $0x28] sm:$0xff]
  %v20 = vld [vmem:[%s0 + $0x30] sm:$0xff]
  %v21 = vld [vmem:[%s0 + $0x38] sm:$0xff]
  %v22 = vld [vmem:[%s0 + $0x40] sm:$0xff]
  %v23 = vld [vmem:[%s0 + $0x48] sm:$0xff]
  %v24 = vld [vmem:[%s0 + $0x50] sm:$0xff]
  %v25 = vld [vmem:[%s0 + $0x58] sm:$0xff]
  %v26 = vld [vmem:[%s0 + $0x60] sm:$0xff]
  %v27 = vld [vmem:[%s0 + $0x68] sm:$0xff]
  %v28 = vld [vmem:[%s0 + $0x70] sm:$0xff]
  %v29 = vld [vmem:[%s0 + $0x78] sm:$0xff]
  %v30 = vld [vmem:[%s1] sm:$0x1]
  %v32 = vlaneseq
  %v33 = vshrl.u32 %v32, 7
  %v34 = vsub.s32 0, %v33
  %v35 = vrot.slane %v30, %v34
  %v37 = vmul.f32 %v14, %v35
  %v38 = vmul.f32 %v15, %v35
  %v39 = vmul.f32 %v16, %v35
  %v40 = vmul.f32 %v17, %v35
  %v41 = vmul.f32 %v18, %v35
  %v42 = vmul.f32 %v19, %v35
  %v43 = vmul.f32 %v20, %v35
  %v44 = vmul.f32 %v21, %v35
  %v45 = vmul.f32 %v22, %v35
  %v46 = vmul.f32 %v23, %v35
  %v47 = vmul.f32 %v24, %v35
  %v48 = vmul.f32 %v25, %v35
  %v49 = vmul.f32 %v26, %v35
  %v50 = vmul.f32 %v27, %v35
  %v51 = vmul.f32 %v28, %v35
  %v52 = vmul.f32 %v29, %v35
  %v53 = vld [vmem:[%s2] sm:$0x1]
  %v55 = vlaneseq
  %v56 = vshrl.u32 %v55, 7
  %v57 = vsub.s32 0, %v56
  %v58 = vrot.slane %v53, %v57
  %v60 = vadd.f32 %v37, %v58
  %v61 = vadd.f32 %v38, %v58
  %v62 = vadd.f32 %v39, %v58
  %v63 = vadd.f32 %v40, %v58
  %v64 = vadd.f32 %v41, %v58
  %v65 = vadd.f32 %v42, %v58
  %v66 = vadd.f32 %v43, %v58
  %v67 = vadd.f32 %v44, %v58
  %v68 = vadd.f32 %v45, %v58
  %v69 = vadd.f32 %v46, %v58
  %v70 = vadd.f32 %v47, %v58
  %v71 = vadd.f32 %v48, %v58
  %v72 = vadd.f32 %v49, %v58
  %v73 = vadd.f32 %v50, %v58
  %v74 = vadd.f32 %v51, %v58
  %v75 = vadd.f32 %v52, %v58
  %76 = vst [vmem:[%s3] sm:$0xff] %v60
  %77 = vst [vmem:[%s3 + $0x8] sm:$0xff] %v61
  %78 = vst [vmem:[%s3 + $0x10] sm:$0xff] %v62
  %79 = vst [vmem:[%s3 + $0x18] sm:$0xff] %v63
  %80 = vst [vmem:[%s3 + $0x20] sm:$0xff] %v64
  %81 = vst [vmem:[%s3 + $0x28] sm:$0xff] %v65
  %82 = vst [vmem:[%s3 + $0x30] sm:$0xff] %v66
  %83 = vst [vmem:[%s3 + $0x38] sm:$0xff] %v67
  %84 = vst [vmem:[%s3 + $0x40] sm:$0xff] %v68
  %85 = vst [vmem:[%s3 + $0x48] sm:$0xff] %v69
  %86 = vst [vmem:[%s3 + $0x50] sm:$0xff] %v70
  %87 = vst [vmem:[%s3 + $0x58] sm:$0xff] %v71
  %88 = vst [vmem:[%s3 + $0x60] sm:$0xff] %v72
  %89 = vst [vmem:[%s3 + $0x68] sm:$0xff] %v73
  %90 = vst [vmem:[%s3 + $0x70] sm:$0xff] %v74
  %91 = vst [vmem:[%s3 + $0x78] sm:$0xff] %v75
  // Predicated region
  $region14: #{forward.213} parent=0 // pred_check
    _
  $region15: #{forward.213} parent=0 // pred_check_branch
    %93 = sbr.rel (0) target = $region17
  $region16: #{forward.213} parent=0 // pred_region
    _
  $region17: #{forward.213} parent=0 // pred_fallthru
    _
  // Predicated region
  $region18: #{forward.213} parent=0 // pred_check
    _
  $region19: #{forward.213} parent=0 // pred_check_branch
    %95 = sbr.rel (0) target = $region21
  $region20: #{forward.213} parent=0 // pred_region
    _
  $region21: #{forward.213} parent=0 // pred_fallthru
    _

// kernel: forward.217
$region0: #{forward.217}
  #allocation0 [shape = 'u32[]', space=smem, size = 0x4, offset = 0x4, fixed_abs, tag = 'smem constant byte address 0x4 - core index']
  #allocation1 [shape = 'u32[144,128]{1,0:T(1,128)}', space=vmem, size = 0x12000, scoped, tag = 'internal scratch']
  #allocation2 [shape = 'f32[32,128]{1,0:T(8,128)}', space=vmem, size = 0x4000, scoped, tag = 'scratch operand']
  %s0 = inlined_call_operand.vmem [shape: bf16[1,32,128], index: 0, kind: input, shape index: {}]
  %s1 = inlined_call_operand.vmem [shape: bf16[1,128,128], index: 1, kind: input, shape index: {}]
  %s2 = inlined_call_operand.vmem [shape: f32[32,128], index: 2, kind: output, shape index: {}]
  %s3 = sld [smem:[#allocation0]]
  $region26: #{forward.217} parent=0
    _
  %s5 = ssub.s32 1, %s3
  %s6 = scalar_select 0, %s5, %s3
  // Predicated region
  $region2: #{forward.217} parent=0 // pred_check
    _
  $region3: #{forward.217} parent=0 // pred_check_branch
    %8 = sbr.rel (0) target = $region5
  $region4: #{forward.217} parent=0 // pred_region
    _
  $region5: #{forward.217} parent=0 // pred_fallthru
    _
  // Predicated region
  $region6: #{forward.217} parent=0 // pred_check
    _
  $region7: #{forward.217} parent=0 // pred_check_branch
    %10 = sbr.rel (0) target = $region9
  $region8: #{forward.217} parent=0 // pred_region
    _
  $region9: #{forward.217} parent=0 // pred_fallthru
    _
  %p12 = scmp.eq.s32.totalorder 0, 0
  %p13 = scmp.eq.s32.totalorder 0, 0
  %p14 = pnand %p12, %p13
  %p15 = pneg %p14
  // Predicated region
  $region10: #{forward.217} parent=0 // pred_check
    _
  $region11: #{forward.217} parent=0 // pred_check_branch
    %17 = sbr.rel (%p14) target = $region13
  $region12: #{forward.217} parent=0 // pred_region
    %18 = vst [vmem:[#allocation2] sm:$0xff] 0.0
    %19 = vst [vmem:[#allocation2 + $0x8] sm:$0xff] 0.0
    %20 = vst [vmem:[#allocation2 + $0x10] sm:$0xff] 0.0
    %21 = vst [vmem:[#allocation2 + $0x18] sm:$0xff] 0.0
  $region13: #{forward.217} parent=0 // pred_fallthru
    _
  %v22 = vld [vmem:[#allocation2] sm:$0xff]
  %v23 = vld [vmem:[#allocation2 + $0x8] sm:$0xff]
  %v24 = vld [vmem:[#allocation2 + $0x10] sm:$0xff]
  %v25 = vld [vmem:[#allocation2 + $0x18] sm:$0xff]
  %v26 = vld [vmem:[%s0] sm:$0xf]
  %v27 = vld [vmem:[%s0 + $0x4] sm:$0xf]
  %v28 = vld [vmem:[%s0 + $0x8] sm:$0xf]
  %v29 = vld [vmem:[%s0 + $0xc] sm:$0xf]
  %v30 = vld [vmem:[%s1] sm:$0xf]
  %v31 = vld [vmem:[%s1 + $0x4] sm:$0xf]
  %v32 = vld [vmem:[%s1 + $0x8] sm:$0xf]
  %v33 = vld [vmem:[%s1 + $0xc] sm:$0xf]
  %v34 = vld [vmem:[%s1 + $0x10] sm:$0xf]
  %v35 = vld [vmem:[%s1 + $0x14] sm:$0xf]
  %v36 = vld [vmem:[%s1 + $0x18] sm:$0xf]
  %v37 = vld [vmem:[%s1 + $0x1c] sm:$0xf]
  %v38 = vld [vmem:[%s1 + $0x20] sm:$0xf]
  %v39 = vld [vmem:[%s1 + $0x24] sm:$0xf]
  %v40 = vld [vmem:[%s1 + $0x28] sm:$0xf]
  %v41 = vld [vmem:[%s1 + $0x2c] sm:$0xf]
  %v42 = vld [vmem:[%s1 + $0x30] sm:$0xf]
  %v43 = vld [vmem:[%s1 + $0x34] sm:$0xf]
  %v44 = vld [vmem:[%s1 + $0x38] sm:$0xf]
  %v45 = vld [vmem:[%s1 + $0x3c] sm:$0xf]
  %v50 = vunpack.c.l.b16 %v26
  %v51 = vunpack.c.l.b16 %v27
  %v52 = vunpack.c.l.b16 %v28
  %v53 = vunpack.c.l.b16 %v29
  %v54 = vpack.c.b16 %v51, %v50
  %v55 = vpack.c.b16 %v53, %v52
  %v74 = vunpack.c.l.b16 %v30
  %v75 = vunpack.c.l.b16 %v31
  %v76 = vunpack.c.l.b16 %v32
  %v77 = vunpack.c.l.b16 %v33
  %v78 = vunpack.c.l.b16 %v34
  %v79 = vunpack.c.l.b16 %v35
  %v80 = vunpack.c.l.b16 %v36
  %v81 = vunpack.c.l.b16 %v37
  %v82 = vunpack.c.l.b16 %v38
  %v83 = vunpack.c.l.b16 %v39
  %v84 = vunpack.c.l.b16 %v40
  %v85 = vunpack.c.l.b16 %v41
  %v86 = vunpack.c.l.b16 %v42
  %v87 = vunpack.c.l.b16 %v43
  %v88 = vunpack.c.l.b16 %v44
  %v89 = vunpack.c.l.b16 %v45
  %v90 = vpack.c.b16 %v75, %v74
  %v91 = vpack.c.b16 %v77, %v76
  %v92 = vpack.c.b16 %v79, %v78
  %v93 = vpack.c.b16 %v81, %v80
  %v94 = vpack.c.b16 %v83, %v82
  %v95 = vpack.c.b16 %v85, %v84
  %v96 = vpack.c.b16 %v87, %v86
  %v97 = vpack.c.b16 %v89, %v88
  %106 = vmatprep.subr.bf16.mxu0 0
  %107 = vmatpush1.bf16.msra.mxu0 %v90
  %108 = vmatprep.subr.bf16.mxu0 0
  %109 = vmatpush1.bf16.msra.mxu0 %v91
  %110 = vmatprep.subr.bf16.mxu0 0
  %111 = vmatpush1.bf16.msra.mxu0 %v92
  %112 = vmatprep.subr.bf16.mxu0 0
  %113 = vmatpush1.bf16.msra.mxu0 %v93
  %114 = vmatprep.subr.bf16.mxu0 0
  %115 = vmatpush1.bf16.msra.mxu0 %v94
  %116 = vmatprep.subr.bf16.mxu0 0
  %117 = vmatpush1.bf16.msra.mxu0 %v95
  %118 = vmatprep.subr.bf16.mxu0 0
  %119 = vmatpush1.bf16.msra.mxu0 %v96
  %120 = vmatprep.subr.bf16.mxu0 0
  %121 = vmatpush1.bf16.msra.mxu0 %v97
  %122 = vmatprep.subr.bf16.mxu0 0
  %123 = vmatpush1.bf16.msra.mxu0 0
  %124 = vmatprep.subr.bf16.mxu0 0
  %125 = vmatpush1.bf16.msra.mxu0 0
  %126 = vmatprep.subr.bf16.mxu0 0
  %127 = vmatpush1.bf16.msra.mxu0 0
  %128 = vmatprep.subr.bf16.mxu0 0
  %129 = vmatpush1.bf16.msra.mxu0 0
  %130 = vmatprep.subr.bf16.mxu0 0
  %131 = vmatpush1.bf16.msra.mxu0 0
  %132 = vmatprep.subr.bf16.mxu0 0
  %133 = vmatpush1.bf16.msra.mxu0 0
  %134 = vmatprep.subr.bf16.mxu0 0
  %135 = vmatpush1.bf16.msra.mxu0 0
  %136 = vmatprep.subr.bf16.mxu0 0
  %137 = vmatpush1.bf16.msra.mxu0 0
  %138 = vmatprep.mubr.bf16.mxu0 0
  %139 = vmatmul.mubr.bf16.gmra.mrb[0].mxu0 %v54
  %v140 = vpop.f32.mrb[0].mxu0
  %v141 = vadd.f32 0.0, %v140
  %v142 = vpop.f32.mrb[0].mxu0
  %v143 = vpop.f32.mrb[0].mxu0
  %v144 = vadd.f32 0.0, %v143
  %v145 = vpop.f32.mrb[0].mxu0
  %146 = vmatprep.mubr.bf16.mxu0 0
  %147 = vmatmul.mubr.bf16.gmra.mrb[0].mxu0 %v55
  %v148 = vpop.f32.mrb[0].mxu0
  %v149 = vadd.f32 0.0, %v148
  %v150 = vpop.f32.mrb[0].mxu0
  %v151 = vpop.f32.mrb[0].mxu0
  %v152 = vadd.f32 0.0, %v151
  %v153 = vpop.f32.mrb[0].mxu0
  %154 = vdwg.mxu0
  %v155 = vadd.f32 %v22, %v141
  %v156 = vadd.f32 %v23, %v144
  %v157 = vadd.f32 %v24, %v149
  %v158 = vadd.f32 %v25, %v152
  %159 = vst [vmem:[#allocation2] sm:$0xff] %v155
  %160 = vst [vmem:[#allocation2 + $0x8] sm:$0xff] %v156
  %161 = vst [vmem:[#allocation2 + $0x10] sm:$0xff] %v157
  %162 = vst [vmem:[#allocation2 + $0x18] sm:$0xff] %v158
  // Predicated region
  $region14: #{forward.217} parent=0 // pred_check
    _
  $region15: #{forward.217} parent=0 // pred_check_branch
    %164 = sbr.rel (%p14) target = $region17
  $region16: #{forward.217} parent=0 // pred_region
    %v165 = vld [vmem:[#allocation2] sm:$0xff]
    %v166 = vld [vmem:[#allocation2 + $0x8] sm:$0xff]
    %v167 = vld [vmem:[#allocation2 + $0x10] sm:$0xff]
    %v168 = vld [vmem:[#allocation2 + $0x18] sm:$0xff]
    %169 = vst [vmem:[%s2] sm:$0xff] %v165
    %170 = vst [vmem:[%s2 + $0x8] sm:$0xff] %v166
    %171 = vst [vmem:[%s2 + $0x10] sm:$0xff] %v167
    %172 = vst [vmem:[%s2 + $0x18] sm:$0xff] %v168
  $region17: #{forward.217} parent=0 // pred_fallthru
    _
  // Predicated region
  $region18: #{forward.217} parent=0 // pred_check
    _
  $region19: #{forward.217} parent=0 // pred_check_branch
    %174 = sbr.rel (0) target = $region21
  $region20: #{forward.217} parent=0 // pred_region
    _
  $region21: #{forward.217} parent=0 // pred_fallthru
    _
  // Predicated region
  $region22: #{forward.217} parent=0 // pred_check
    _
  $region23: #{forward.217} parent=0 // pred_check_branch
    %176 = sbr.rel (0) target = $region25
  $region24: #{forward.217} parent=0 // pred_region
    _
  $region25: #{forward.217} parent=0 // pred_fallthru
    _

// kernel: forward.218
$region0: #{forward.218}
  #allocation0 [shape = 'u32[]', space=smem, size = 0x4, offset = 0x4, fixed_abs, tag = 'smem constant byte address 0x4 - core index']
  #allocation1 [shape = 'u32[144,128]{1,0:T(1,128)}', space=vmem, size = 0x12000, scoped, tag = 'internal scratch']
  %s0 = inlined_call_operand.vmem [shape: f32[32,128], index: 0, kind: input, shape index: {}]
  %s1 = inlined_call_operand.vmem [shape: f32[1,128], index: 1, kind: input, shape index: {}]
  %s2 = inlined_call_operand.vmem [shape: f32[1,128], index: 2, kind: input, shape index: {}]
  %s3 = inlined_call_operand.vmem [shape: f32[32,128], index: 3, kind: output, shape index: {}]
  %s4 = sld [smem:[#allocation0]]
  $region22: #{forward.218} parent=0
    _
  %s6 = ssub.s32 1, %s4
  %s7 = scalar_select 0, %s6, %s4
  // Predicated region
  $region2: #{forward.218} parent=0 // pred_check
    _
  $region3: #{forward.218} parent=0 // pred_check_branch
    %9 = sbr.rel (0) target = $region5
  $region4: #{forward.218} parent=0 // pred_region
    _
  $region5: #{forward.218} parent=0 // pred_fallthru
    _
  // Predicated region
  $region6: #{forward.218} parent=0 // pred_check
    _
  $region7: #{forward.218} parent=0 // pred_check_branch
    %11 = sbr.rel (0) target = $region9
  $region8: #{forward.218} parent=0 // pred_region
    _
  $region9: #{forward.218} parent=0 // pred_fallthru
    _
  // Predicated region
  $region10: #{forward.218} parent=0 // pred_check
    _
  $region11: #{forward.218} parent=0 // pred_check_branch
    %13 = sbr.rel (0) target = $region13
  $region12: #{forward.218} parent=0 // pred_region
    _
  $region13: #{forward.218} parent=0 // pred_fallthru
    _
  %v14 = vld [vmem:[%s0] sm:$0xff]
  %v15 = vld [vmem:[%s0 + $0x8] sm:$0xff]
  %v16 = vld [vmem:[%s0 + $0x10] sm:$0xff]
  %v17 = vld [vmem:[%s0 + $0x18] sm:$0xff]
  %v18 = vld [vmem:[%s1] sm:$0x1]
  %v20 = vlaneseq
  %v21 = vshrl.u32 %v20, 7
  %v22 = vsub.s32 0, %v21
  %v23 = vrot.slane %v18, %v22
  %v25 = vmul.f32 %v14, %v23
  %v26 = vmul.f32 %v15, %v23
  %v27 = vmul.f32 %v16, %v23
  %v28 = vmul.f32 %v17, %v23
  %v29 = vld [vmem:[%s2] sm:$0x1]
  %v31 = vlaneseq
  %v32 = vshrl.u32 %v31, 7
  %v33 = vsub.s32 0, %v32
  %v34 = vrot.slane %v29, %v33
  %v36 = vadd.f32 %v25, %v34
  %v37 = vadd.f32 %v26, %v34
  %v38 = vadd.f32 %v27, %v34
  %v39 = vadd.f32 %v28, %v34
  %40 = vst [vmem:[%s3] sm:$0xff] %v36
  %41 = vst [vmem:[%s3 + $0x8] sm:$0xff] %v37
  %42 = vst [vmem:[%s3 + $0x10] sm:$0xff] %v38
  %43 = vst [vmem:[%s3 + $0x18] sm:$0xff] %v39
  // Predicated region
  $region14: #{forward.218} parent=0 // pred_check
    _
  $region15: #{forward.218} parent=0 // pred_check_branch
    %45 = sbr.rel (0) target = $region17
  $region16: #{forward.218} parent=0 // pred_region
    _
  $region17: #{forward.218} parent=0 // pred_fallthru
    _
  // Predicated region
  $region18: #{forward.218} parent=0 // pred_check
    _
  $region19: #{forward.218} parent=0 // pred_check_branch
    %47 = sbr.rel (0) target = $region21
  $region20: #{forward.218} parent=0 // pred_region
    _
  $region21: #{forward.218} parent=0 // pred_fallthru
    _

// kernel: forward.243
$region0: #{forward.243}
  #allocation0 [shape = 'u32[]', space=smem, size = 0x4, offset = 0x4, fixed_abs, tag = 'smem constant byte address 0x4 - core index']
  #allocation1 [shape = 'u32[144,128]{1,0:T(1,128)}', space=vmem, size = 0x12000, scoped, tag = 'internal scratch']
  %s0 = inlined_call_operand.vmem [shape: f32[9,32,128], index: 0, kind: input, shape index: {}]
  %s1 = inlined_call_operand.vmem [shape: f32[9,1,128], index: 1, kind: input, shape index: {}]
  %s2 = inlined_call_operand.vmem [shape: f32[32,128], index: 2, kind: output, shape index: {}]
  %s3 = sld [smem:[#allocation0]]
  $region18: #{forward.243} parent=0
    _
  %s5 = ssub.s32 1, %s3
  %s6 = scalar_select 0, %s5, %s3
  // Predicated region
  $region2: #{forward.243} parent=0 // pred_check
    _
  $region3: #{forward.243} parent=0 // pred_check_branch
    %8 = sbr.rel (0) target = $region5
  $region4: #{forward.243} parent=0 // pred_region
    _
  $region5: #{forward.243} parent=0 // pred_fallthru
    _
  // Predicated region
  $region6: #{forward.243} parent=0 // pred_check
    _
  $region7: #{forward.243} parent=0 // pred_check_branch
    %10 = sbr.rel (0) target = $region9
  $region8: #{forward.243} parent=0 // pred_region
    _
  $region9: #{forward.243} parent=0 // pred_fallthru
    _
  %v11 = vld [vmem:[%s0] sm:$0xff]
  %v12 = vld [vmem:[%s0 + $0x8] sm:$0xff]
  %v13 = vld [vmem:[%s0 + $0x10] sm:$0xff]
  %v14 = vld [vmem:[%s0 + $0x18] sm:$0xff]
  %v15 = vld [vmem:[%s1] sm:$0x1]
  %v17 = vlaneseq
  %v18 = vshrl.u32 %v17, 7
  %v19 = vsub.s32 0, %v18
  %v20 = vrot.slane %v15, %v19
  %v22 = vmul.f32 %v11, %v20
  %v23 = vmul.f32 %v12, %v20
  %v24 = vmul.f32 %v13, %v20
  %v25 = vmul.f32 %v14, %v20
  %s26 = scalar_lea.vmem %s0, 32
  %v27 = vld [vmem:[%s26] sm:$0xff]
  %v28 = vld [vmem:[%s26 + $0x8] sm:$0xff]
  %v29 = vld [vmem:[%s26 + $0x10] sm:$0xff]
  %v30 = vld [vmem:[%s26 + $0x18] sm:$0xff]
  %s31 = scalar_lea.vmem %s1, 1
  %v32 = vld [vmem:[%s31] sm:$0x1]
  %v34 = vlaneseq
  %v35 = vshrl.u32 %v34, 7
  %v36 = vsub.s32 0, %v35
  %v37 = vrot.slane %v32, %v36
  %v39 = vmul.f32 %v27, %v37
  %v40 = vmul.f32 %v28, %v37
  %v41 = vmul.f32 %v29, %v37
  %v42 = vmul.f32 %v30, %v37
  %v43 = vadd.f32 %v22, %v39
  %v44 = vadd.f32 %v23, %v40
  %v45 = vadd.f32 %v24, %v41
  %v46 = vadd.f32 %v25, %v42
  %s47 = scalar_lea.vmem %s0, 64
  %v48 = vld [vmem:[%s47] sm:$0xff]
  %v49 = vld [vmem:[%s47 + $0x8] sm:$0xff]
  %v50 = vld [vmem:[%s47 + $0x10] sm:$0xff]
  %v51 = vld [vmem:[%s47 + $0x18] sm:$0xff]
  %s52 = scalar_lea.vmem %s1, 2
  %v53 = vld [vmem:[%s52] sm:$0x1]
  %v55 = vlaneseq
  %v56 = vshrl.u32 %v55, 7
  %v57 = vsub.s32 0, %v56
  %v58 = vrot.slane %v53, %v57
  %v60 = vmul.f32 %v48, %v58
  %v61 = vmul.f32 %v49, %v58
  %v62 = vmul.f32 %v50, %v58
  %v63 = vmul.f32 %v51, %v58
  %v64 = vadd.f32 %v43, %v60
  %v65 = vadd.f32 %v44, %v61
  %v66 = vadd.f32 %v45, %v62
  %v67 = vadd.f32 %v46, %v63
  %s68 = scalar_lea.vmem %s0, 96
  %v69 = vld [vmem:[%s68] sm:$0xff]
  %v70 = vld [vmem:[%s68 + $0x8] sm:$0xff]
  %v71 = vld [vmem:[%s68 + $0x10] sm:$0xff]
  %v72 = vld [vmem:[%s68 + $0x18] sm:$0xff]
  %s73 = scalar_lea.vmem %s1, 3
  %v74 = vld [vmem:[%s73] sm:$0x1]
  %v76 = vlaneseq
  %v77 = vshrl.u32 %v76, 7
  %v78 = vsub.s32 0, %v77
  %v79 = vrot.slane %v74, %v78
  %v81 = vmul.f32 %v69, %v79
  %v82 = vmul.f32 %v70, %v79
  %v83 = vmul.f32 %v71, %v79
  %v84 = vmul.f32 %v72, %v79
  %v85 = vadd.f32 %v64, %v81
  %v86 = vadd.f32 %v65, %v82
  %v87 = vadd.f32 %v66, %v83
  %v88 = vadd.f32 %v67, %v84
  %s89 = scalar_lea.vmem %s0, 128
  %v90 = vld [vmem:[%s89] sm:$0xff]
  %v91 = vld [vmem:[%s89 + $0x8] sm:$0xff]
  %v92 = vld [vmem:[%s89 + $0x10] sm:$0xff]
  %v93 = vld [vmem:[%s89 + $0x18] sm:$0xff]
  %s94 = scalar_lea.vmem %s1, 4
  %v95 = vld [vmem:[%s94] sm:$0x1]
  %v97 = vlaneseq
  %v98 = vshrl.u32 %v97, 7
  %v99 = vsub.s32 0, %v98
  %v100 = vrot.slane %v95, %v99
  %v102 = vmul.f32 %v90, %v100
  %v103 = vmul.f32 %v91, %v100
  %v104 = vmul.f32 %v92, %v100
  %v105 = vmul.f32 %v93, %v100
  %v106 = vadd.f32 %v85, %v102
  %v107 = vadd.f32 %v86, %v103
  %v108 = vadd.f32 %v87, %v104
  %v109 = vadd.f32 %v88, %v105
  %s110 = scalar_lea.vmem %s0, 160
  %v111 = vld [vmem:[%s110] sm:$0xff]
  %v112 = vld [vmem:[%s110 + $0x8] sm:$0xff]
  %v113 = vld [vmem:[%s110 + $0x10] sm:$0xff]
  %v114 = vld [vmem:[%s110 + $0x18] sm:$0xff]
  %s115 = scalar_lea.vmem %s1, 5
  %v116 = vld [vmem:[%s115] sm:$0x1]
  %v118 = vlaneseq
  %v119 = vshrl.u32 %v118, 7
  %v120 = vsub.s32 0, %v119
  %v121 = vrot.slane %v116, %v120
  %v123 = vmul.f32 %v111, %v121
  %v124 = vmul.f32 %v112, %v121
  %v125 = vmul.f32 %v113, %v121
  %v126 = vmul.f32 %v114, %v121
  %v127 = vadd.f32 %v106, %v123
  %v128 = vadd.f32 %v107, %v124
  %v129 = vadd.f32 %v108, %v125
  %v130 = vadd.f32 %v109, %v126
  %s131 = scalar_lea.vmem %s0, 192
  %v132 = vld [vmem:[%s131] sm:$0xff]
  %v133 = vld [vmem:[%s131 + $0x8] sm:$0xff]
  %v134 = vld [vmem:[%s131 + $0x10] sm:$0xff]
  %v135 = vld [vmem:[%s131 + $0x18] sm:$0xff]
  %s136 = scalar_lea.vmem %s1, 6
  %v137 = vld [vmem:[%s136] sm:$0x1]
  %v139 = vlaneseq
  %v140 = vshrl.u32 %v139, 7
  %v141 = vsub.s32 0, %v140
  %v142 = vrot.slane %v137, %v141
  %v144 = vmul.f32 %v132, %v142
  %v145 = vmul.f32 %v133, %v142
  %v146 = vmul.f32 %v134, %v142
  %v147 = vmul.f32 %v135, %v142
  %v148 = vadd.f32 %v127, %v144
  %v149 = vadd.f32 %v128, %v145
  %v150 = vadd.f32 %v129, %v146
  %v151 = vadd.f32 %v130, %v147
  %s152 = scalar_lea.vmem %s0, 224
  %v153 = vld [vmem:[%s152] sm:$0xff]
  %v154 = vld [vmem:[%s152 + $0x8] sm:$0xff]
  %v155 = vld [vmem:[%s152 + $0x10] sm:$0xff]
  %v156 = vld [vmem:[%s152 + $0x18] sm:$0xff]
  %s157 = scalar_lea.vmem %s1, 7
  %v158 = vld [vmem:[%s157] sm:$0x1]
  %v160 = vlaneseq
  %v161 = vshrl.u32 %v160, 7
  %v162 = vsub.s32 0, %v161
  %v163 = vrot.slane %v158, %v162
  %v165 = vmul.f32 %v153, %v163
  %v166 = vmul.f32 %v154, %v163
  %v167 = vmul.f32 %v155, %v163
  %v168 = vmul.f32 %v156, %v163
  %v169 = vadd.f32 %v148, %v165
  %v170 = vadd.f32 %v149, %v166
  %v171 = vadd.f32 %v150, %v167
  %v172 = vadd.f32 %v151, %v168
  %s173 = scalar_lea.vmem %s0, 256
  %v174 = vld [vmem:[%s173] sm:$0xff]
  %v175 = vld [vmem:[%s173 + $0x8] sm:$0xff]
  %v176 = vld [vmem:[%s173 + $0x10] sm:$0xff]
  %v177 = vld [vmem:[%s173 + $0x18] sm:$0xff]
  %s178 = scalar_lea.vmem %s1, 8
  %v179 = vld [vmem:[%s178] sm:$0x1]
  %v181 = vlaneseq
  %v182 = vshrl.u32 %v181, 7
  %v183 = vsub.s32 0, %v182
  %v184 = vrot.slane %v179, %v183
  %v186 = vmul.f32 %v174, %v184
  %v187 = vmul.f32 %v175, %v184
  %v188 = vmul.f32 %v176, %v184
  %v189 = vmul.f32 %v177, %v184
  %v190 = vadd.f32 %v169, %v186
  %v191 = vadd.f32 %v170, %v187
  %v192 = vadd.f32 %v171, %v188
  %v193 = vadd.f32 %v172, %v189
  %194 = vst [vmem:[%s2] sm:$0xff] %v190
  %195 = vst [vmem:[%s2 + $0x8] sm:$0xff] %v191
  %196 = vst [vmem:[%s2 + $0x10] sm:$0xff] %v192
  %197 = vst [vmem:[%s2 + $0x18] sm:$0xff] %v193
  // Predicated region
  $region10: #{forward.243} parent=0 // pred_check
    _
  $region11: #{forward.243} parent=0 // pred_check_branch
    %199 = sbr.rel (0) target = $region13
  $region12: #{forward.243} parent=0 // pred_region
    _
  $region13: #{forward.243} parent=0 // pred_fallthru
    _
  // Predicated region
  $region14: #{forward.243} parent=0 // pred_check
    _
  $region15: #{forward.243} parent=0 // pred_check_branch
    %201 = sbr.rel (0) target = $region17
  $region16: #{forward.243} parent=0 // pred_region
    _
  $region17: #{forward.243} parent=0 // pred_fallthru
    _

// kernel: forward.245
$region0: #{forward.245}
  #allocation0 [shape = 'u32[]', space=smem, size = 0x4, offset = 0x4, fixed_abs, tag = 'smem constant byte address 0x4 - core index']
  #allocation1 [shape = 'u32[144,128]{1,0:T(1,128)}', space=vmem, size = 0x12000, scoped, tag = 'internal scratch']
  %s0 = inlined_call_operand.vmem [shape: f32[32,128], index: 0, kind: input, shape index: {}]
  %s1 = inlined_call_operand.vmem [shape: f32[1,128], index: 1, kind: input, shape index: {}]
  %s2 = inlined_call_operand.vmem [shape: f32[1,128], index: 2, kind: input, shape index: {}]
  %s3 = inlined_call_operand.vmem [shape: f32[32,128], index: 3, kind: output, shape index: {}]
  %s4 = sld [smem:[#allocation0]]
  $region22: #{forward.245} parent=0
    _
  %s6 = ssub.s32 1, %s4
  %s7 = scalar_select 0, %s6, %s4
  // Predicated region
  $region2: #{forward.245} parent=0 // pred_check
    _
  $region3: #{forward.245} parent=0 // pred_check_branch
    %9 = sbr.rel (0) target = $region5
  $region4: #{forward.245} parent=0 // pred_region
    _
  $region5: #{forward.245} parent=0 // pred_fallthru
    _
  // Predicated region
  $region6: #{forward.245} parent=0 // pred_check
    _
  $region7: #{forward.245} parent=0 // pred_check_branch
    %11 = sbr.rel (0) target = $region9
  $region8: #{forward.245} parent=0 // pred_region
    _
  $region9: #{forward.245} parent=0 // pred_fallthru
    _
  // Predicated region
  $region10: #{forward.245} parent=0 // pred_check
    _
  $region11: #{forward.245} parent=0 // pred_check_branch
    %13 = sbr.rel (0) target = $region13
  $region12: #{forward.245} parent=0 // pred_region
    _
  $region13: #{forward.245} parent=0 // pred_fallthru
    _
  %v14 = vld [vmem:[%s0] sm:$0xff]
  %v15 = vld [vmem:[%s0 + $0x8] sm:$0xff]
  %v16 = vld [vmem:[%s0 + $0x10] sm:$0xff]
  %v17 = vld [vmem:[%s0 + $0x18] sm:$0xff]
  %v18 = vld [vmem:[%s1] sm:$0x1]
  %v20 = vlaneseq
  %v21 = vshrl.u32 %v20, 7
  %v22 = vsub.s32 0, %v21
  %v23 = vrot.slane %v18, %v22
  %v25 = vmul.f32 %v14, %v23
  %v26 = vmul.f32 %v15, %v23
  %v27 = vmul.f32 %v16, %v23
  %v28 = vmul.f32 %v17, %v23
  %v29 = vld [vmem:[%s2] sm:$0x1]
  %v31 = vlaneseq
  %v32 = vshrl.u32 %v31, 7
  %v33 = vsub.s32 0, %v32
  %v34 = vrot.slane %v29, %v33
  %v36 = vadd.f32 %v25, %v34
  %v37 = vadd.f32 %v26, %v34
  %v38 = vadd.f32 %v27, %v34
  %v39 = vadd.f32 %v28, %v34
  %v40 = vmax.f32 %v36, 0.0
  %v41 = vmax.f32 %v37, 0.0
  %v42 = vmax.f32 %v38, 0.0
  %v43 = vmax.f32 %v39, 0.0
  %44 = vst [vmem:[%s3] sm:$0xff] %v40
  %45 = vst [vmem:[%s3 + $0x8] sm:$0xff] %v41
  %46 = vst [vmem:[%s3 + $0x10] sm:$0xff] %v42
  %47 = vst [vmem:[%s3 + $0x18] sm:$0xff] %v43
  // Predicated region
  $region14: #{forward.245} parent=0 // pred_check
    _
  $region15: #{forward.245} parent=0 // pred_check_branch
    %49 = sbr.rel (0) target = $region17
  $region16: #{forward.245} parent=0 // pred_region
    _
  $region17: #{forward.245} parent=0 // pred_fallthru
    _
  // Predicated region
  $region18: #{forward.245} parent=0 // pred_check
    _
  $region19: #{forward.245} parent=0 // pred_check_branch
    %51 = sbr.rel (0) target = $region21
  $region20: #{forward.245} parent=0 // pred_region
    _
  $region21: #{forward.245} parent=0 // pred_fallthru
    _

// kernel: forward.222
$region0: #{forward.222}
  #allocation0 [shape = 'u32[]', space=smem, size = 0x4, offset = 0x4, fixed_abs, tag = 'smem constant byte address 0x4 - core index']
  #allocation1 [shape = 'u32[144,128]{1,0:T(1,128)}', space=vmem, size = 0x12000, scoped, tag = 'internal scratch']
  %s0 = inlined_call_operand.vmem [shape: f32[9,32,128], index: 0, kind: input, shape index: {}]
  %s1 = inlined_call_operand.vmem [shape: f32[32,128], index: 1, kind: output, shape index: {}]
  %s2 = sld [smem:[#allocation0]]
  $region14: #{forward.222} parent=0
    _
  %s4 = ssub.s32 1, %s2
  %s5 = scalar_select 0, %s4, %s2
  // Predicated region
  $region2: #{forward.222} parent=0 // pred_check
    _
  $region3: #{forward.222} parent=0 // pred_check_branch
    %7 = sbr.rel (0) target = $region5
  $region4: #{forward.222} parent=0 // pred_region
    _
  $region5: #{forward.222} parent=0 // pred_fallthru
    _
  %v8 = vld [vmem:[%s0] sm:$0xff]
  %v9 = vld [vmem:[%s0 + $0x8] sm:$0xff]
  %v10 = vld [vmem:[%s0 + $0x10] sm:$0xff]
  %v11 = vld [vmem:[%s0 + $0x18] sm:$0xff]
  %s12 = scalar_lea.vmem %s0, 32
  %v13 = vld [vmem:[%s12] sm:$0xff]
  %v14 = vld [vmem:[%s12 + $0x8] sm:$0xff]
  %v15 = vld [vmem:[%s12 + $0x10] sm:$0xff]
  %v16 = vld [vmem:[%s12 + $0x18] sm:$0xff]
  %v17 = vadd.f32 %v8, %v13
  %v18 = vadd.f32 %v9, %v14
  %v19 = vadd.f32 %v10, %v15
  %v20 = vadd.f32 %v11, %v16
  %s21 = scalar_lea.vmem %s0, 64
  %v22 = vld [vmem:[%s21] sm:$0xff]
  %v23 = vld [vmem:[%s21 + $0x8] sm:$0xff]
  %v24 = vld [vmem:[%s21 + $0x10] sm:$0xff]
  %v25 = vld [vmem:[%s21 + $0x18] sm:$0xff]
  %v26 = vadd.f32 %v17, %v22
  %v27 = vadd.f32 %v18, %v23
  %v28 = vadd.f32 %v19, %v24
  %v29 = vadd.f32 %v20, %v25
  %s30 = scalar_lea.vmem %s0, 96
  %v31 = vld [vmem:[%s30] sm:$0xff]
  %v32 = vld [vmem:[%s30 + $0x8] sm:$0xff]
  %v33 = vld [vmem:[%s30 + $0x10] sm:$0xff]
  %v34 = vld [vmem:[%s30 + $0x18] sm:$0xff]
  %v35 = vadd.f32 %v26, %v31
  %v36 = vadd.f32 %v27, %v32
  %v37 = vadd.f32 %v28, %v33
  %v38 = vadd.f32 %v29, %v34
  %s39 = scalar_lea.vmem %s0, 128
  %v40 = vld [vmem:[%s39] sm:$0xff]
  %v41 = vld [vmem:[%s39 + $0x8] sm:$0xff]
  %v42 = vld [vmem:[%s39 + $0x10] sm:$0xff]
  %v43 = vld [vmem:[%s39 + $0x18] sm:$0xff]
  %v44 = vadd.f32 %v35, %v40
  %v45 = vadd.f32 %v36, %v41
  %v46 = vadd.f32 %v37, %v42
  %v47 = vadd.f32 %v38, %v43
  %s48 = scalar_lea.vmem %s0, 160
  %v49 = vld [vmem:[%s48] sm:$0xff]
  %v50 = vld [vmem:[%s48 + $0x8] sm:$0xff]
  %v51 = vld [vmem:[%s48 + $0x10] sm:$0xff]
  %v52 = vld [vmem:[%s48 + $0x18] sm:$0xff]
  %v53 = vadd.f32 %v44, %v49
  %v54 = vadd.f32 %v45, %v50
  %v55 = vadd.f32 %v46, %v51
  %v56 = vadd.f32 %v47, %v52
  %s57 = scalar_lea.vmem %s0, 192
  %v58 = vld [vmem:[%s57] sm:$0xff]
  %v59 = vld [vmem:[%s57 + $0x8] sm:$0xff]
  %v60 = vld [vmem:[%s57 + $0x10] sm:$0xff]
  %v61 = vld [vmem:[%s57 + $0x18] sm:$0xff]
  %v62 = vadd.f32 %v53, %v58
  %v63 = vadd.f32 %v54, %v59
  %v64 = vadd.f32 %v55, %v60
  %v65 = vadd.f32 %v56, %v61
  %s66 = scalar_lea.vmem %s0, 224
  %v67 = vld [vmem:[%s66] sm:$0xff]
  %v68 = vld [vmem:[%s66 + $0x8] sm:$0xff]
  %v69 = vld [vmem:[%s66 + $0x10] sm:$0xff]
  %v70 = vld [vmem:[%s66 + $0x18] sm:$0xff]
  %v71 = vadd.f32 %v62, %v67
  %v72 = vadd.f32 %v63, %v68
  %v73 = vadd.f32 %v64, %v69
  %v74 = vadd.f32 %v65, %v70
  %s75 = scalar_lea.vmem %s0, 256
  %v76 = vld [vmem:[%s75] sm:$0xff]
  %v77 = vld [vmem:[%s75 + $0x8] sm:$0xff]
  %v78 = vld [vmem:[%s75 + $0x10] sm:$0xff]
  %v79 = vld [vmem:[%s75 + $0x18] sm:$0xff]
  %v80 = vadd.f32 %v71, %v76
  %v81 = vadd.f32 %v72, %v77
  %v82 = vadd.f32 %v73, %v78
  %v83 = vadd.f32 %v74, %v79
  %84 = vst [vmem:[%s1] sm:$0xff] %v80
  %85 = vst [vmem:[%s1 + $0x8] sm:$0xff] %v81
  %86 = vst [vmem:[%s1 + $0x10] sm:$0xff] %v82
  %87 = vst [vmem:[%s1 + $0x18] sm:$0xff] %v83
  // Predicated region
  $region6: #{forward.222} parent=0 // pred_check
    _
  $region7: #{forward.222} parent=0 // pred_check_branch
    %89 = sbr.rel (0) target = $region9
  $region8: #{forward.222} parent=0 // pred_region
    _
  $region9: #{forward.222} parent=0 // pred_fallthru
    _
  // Predicated region
  $region10: #{forward.222} parent=0 // pred_check
    _
  $region11: #{forward.222} parent=0 // pred_check_branch
    %91 = sbr.rel (0) target = $region13
  $region12: #{forward.222} parent=0 // pred_region
    _
  $region13: #{forward.222} parent=0 // pred_fallthru
    _

// kernel: forward.221
$region0: #{forward.221}
  #allocation0 [shape = 'u32[]', space=smem, size = 0x4, offset = 0x4, fixed_abs, tag = 'smem constant byte address 0x4 - core index']
  #allocation1 [shape = 'u32[144,128]{1,0:T(1,128)}', space=vmem, size = 0x12000, scoped, tag = 'internal scratch']
  %s0 = inlined_call_operand.vmem [shape: f32[9,32,128], index: 0, kind: input, shape index: {}]
  %s1 = inlined_call_operand.vmem [shape: f32[32,128], index: 1, kind: output, shape index: {}]
  %s2 = sld [smem:[#allocation0]]
  $region14: #{forward.221} parent=0
    _
  %s4 = ssub.s32 1, %s2
  %s5 = scalar_select 0, %s4, %s2
  // Predicated region
  $region2: #{forward.221} parent=0 // pred_check
    _
  $region3: #{forward.221} parent=0 // pred_check_branch
    %7 = sbr.rel (0) target = $region5
  $region4: #{forward.221} parent=0 // pred_region
    _
  $region5: #{forward.221} parent=0 // pred_fallthru
    _
  %v8 = vld [vmem:[%s0] sm:$0xff]
  %v9 = vld [vmem:[%s0 + $0x8] sm:$0xff]
  %v10 = vld [vmem:[%s0 + $0x10] sm:$0xff]
  %v11 = vld [vmem:[%s0 + $0x18] sm:$0xff]
  %s12 = scalar_lea.vmem %s0, 32
  %v13 = vld [vmem:[%s12] sm:$0xff]
  %v14 = vld [vmem:[%s12 + $0x8] sm:$0xff]
  %v15 = vld [vmem:[%s12 + $0x10] sm:$0xff]
  %v16 = vld [vmem:[%s12 + $0x18] sm:$0xff]
  %v17 = vmax.f32 %v8, %v13
  %v18 = vmax.f32 %v9, %v14
  %v19 = vmax.f32 %v10, %v15
  %v20 = vmax.f32 %v11, %v16
  %s21 = scalar_lea.vmem %s0, 64
  %v22 = vld [vmem:[%s21] sm:$0xff]
  %v23 = vld [vmem:[%s21 + $0x8] sm:$0xff]
  %v24 = vld [vmem:[%s21 + $0x10] sm:$0xff]
  %v25 = vld [vmem:[%s21 + $0x18] sm:$0xff]
  %v26 = vmax.f32 %v17, %v22
  %v27 = vmax.f32 %v18, %v23
  %v28 = vmax.f32 %v19, %v24
  %v29 = vmax.f32 %v20, %v25
  %s30 = scalar_lea.vmem %s0, 96
  %v31 = vld [vmem:[%s30] sm:$0xff]
  %v32 = vld [vmem:[%s30 + $0x8] sm:$0xff]
  %v33 = vld [vmem:[%s30 + $0x10] sm:$0xff]
  %v34 = vld [vmem:[%s30 + $0x18] sm:$0xff]
  %v35 = vmax.f32 %v26, %v31
  %v36 = vmax.f32 %v27, %v32
  %v37 = vmax.f32 %v28, %v33
  %v38 = vmax.f32 %v29, %v34
  %s39 = scalar_lea.vmem %s0, 128
  %v40 = vld [vmem:[%s39] sm:$0xff]
  %v41 = vld [vmem:[%s39 + $0x8] sm:$0xff]
  %v42 = vld [vmem:[%s39 + $0x10] sm:$0xff]
  %v43 = vld [vmem:[%s39 + $0x18] sm:$0xff]
  %v44 = vmax.f32 %v35, %v40
  %v45 = vmax.f32 %v36, %v41
  %v46 = vmax.f32 %v37, %v42
  %v47 = vmax.f32 %v38, %v43
  %s48 = scalar_lea.vmem %s0, 160
  %v49 = vld [vmem:[%s48] sm:$0xff]
  %v50 = vld [vmem:[%s48 + $0x8] sm:$0xff]
  %v51 = vld [vmem:[%s48 + $0x10] sm:$0xff]
  %v52 = vld [vmem:[%s48 + $0x18] sm:$0xff]
  %v53 = vmax.f32 %v44, %v49
  %v54 = vmax.f32 %v45, %v50
  %v55 = vmax.f32 %v46, %v51
  %v56 = vmax.f32 %v47, %v52
  %s57 = scalar_lea.vmem %s0, 192
  %v58 = vld [vmem:[%s57] sm:$0xff]
  %v59 = vld [vmem:[%s57 + $0x8] sm:$0xff]
  %v60 = vld [vmem:[%s57 + $0x10] sm:$0xff]
  %v61 = vld [vmem:[%s57 + $0x18] sm:$0xff]
  %v62 = vmax.f32 %v53, %v58
  %v63 = vmax.f32 %v54, %v59
  %v64 = vmax.f32 %v55, %v60
  %v65 = vmax.f32 %v56, %v61
  %s66 = scalar_lea.vmem %s0, 224
  %v67 = vld [vmem:[%s66] sm:$0xff]
  %v68 = vld [vmem:[%s66 + $0x8] sm:$0xff]
  %v69 = vld [vmem:[%s66 + $0x10] sm:$0xff]
  %v70 = vld [vmem:[%s66 + $0x18] sm:$0xff]
  %v71 = vmax.f32 %v62, %v67
  %v72 = vmax.f32 %v63, %v68
  %v73 = vmax.f32 %v64, %v69
  %v74 = vmax.f32 %v65, %v70
  %s75 = scalar_lea.vmem %s0, 256
  %v76 = vld [vmem:[%s75] sm:$0xff]
  %v77 = vld [vmem:[%s75 + $0x8] sm:$0xff]
  %v78 = vld [vmem:[%s75 + $0x10] sm:$0xff]
  %v79 = vld [vmem:[%s75 + $0x18] sm:$0xff]
  %v80 = vmax.f32 %v71, %v76
  %v81 = vmax.f32 %v72, %v77
  %v82 = vmax.f32 %v73, %v78
  %v83 = vmax.f32 %v74, %v79
  %84 = vst [vmem:[%s1] sm:$0xff] %v80
  %85 = vst [vmem:[%s1 + $0x8] sm:$0xff] %v81
  %86 = vst [vmem:[%s1 + $0x10] sm:$0xff] %v82
  %87 = vst [vmem:[%s1 + $0x18] sm:$0xff] %v83
  // Predicated region
  $region6: #{forward.221} parent=0 // pred_check
    _
  $region7: #{forward.221} parent=0 // pred_check_branch
    %89 = sbr.rel (0) target = $region9
  $region8: #{forward.221} parent=0 // pred_region
    _
  $region9: #{forward.221} parent=0 // pred_fallthru
    _
  // Predicated region
  $region10: #{forward.221} parent=0 // pred_check
    _
  $region11: #{forward.221} parent=0 // pred_check_branch
    %91 = sbr.rel (0) target = $region13
  $region12: #{forward.221} parent=0 // pred_region
    _
  $region13: #{forward.221} parent=0 // pred_fallthru
    _

// kernel: forward.214
$region0: #{forward.214}
  #allocation0 [shape = 'u32[]', space=smem, size = 0x4, offset = 0x4, fixed_abs, tag = 'smem constant byte address 0x4 - core index']
  #allocation1 [shape = 'u32[144,128]{1,0:T(1,128)}', space=vmem, size = 0x12000, scoped, tag = 'internal scratch']
  #allocation2 [shape = 'f32[32,128]{1,0:T(8,128)}', space=vmem, size = 0x4000, scoped, tag = 'scratch operand']
  %s0 = inlined_call_operand.vmem [shape: bf16[9,32,128], index: 0, kind: input, shape index: {}]
  %s1 = inlined_call_operand.vmem [shape: bf16[9,128,128], index: 1, kind: input, shape index: {}]
  %s2 = inlined_call_operand.vmem [shape: f32[32,128], index: 2, kind: output, shape index: {}]
  %s3 = sld [smem:[#allocation0]]
  $region49: #{forward.214} parent=0
    _
  %s5 = ssub.s32 1, %s3
  %s6 = scalar_select 0, %s5, %s3
  loop: start=0, step=1, limit=11
  $region2: #{forward.214} parent=0 // loop_pre_header
    _
  $region3: #{forward.214} parent=0 // loop_header
    %s8 = sphi 0, %s12
    %p9 = scmp.ge.s32.totalorder %s8, 11
    %s15 = sphi 0, %s41
    %s16 = sphi 0, %s37
    %s17 = sphi 0, %s33
    %s18 = sphi 0, %s29
    %s19 = sphi 0, %s15
    %s20 = sphi 0, %s16
    %s21 = sphi 0, %s17
    %s22 = sphi 0, %s18
    %s23 = sphi 0, %s19
    %s24 = sphi 0, %s20
    %s25 = sphi 0, %s21
    %s26 = sphi 0, %s22
    %s48 = sphi 0, %s50
    %s51 = sphi 0, %s48
    %s52 = sphi 0, %s51
    %s68 = sphi 0, %s52
    %s78 = sphi 0, %s80
    %s81 = sphi 0, %s78
    %s82 = sphi 0, %s81
    %s98 = sphi 0, %s82
    %s106 = sphi 0, %s108
    %s109 = sphi 0, %s106
    %s110 = sphi 0, %s109
    %s126 = sphi 0, %s110
  $region4: #{forward.214} parent=0 // loop_header_branch
    %11 = sbr.rel (%p9) target = $region8
  $region5: #{forward.214} parent=0 // loop_body
    %s13 = ssub.s32 %s8, 1
    %s14 = ssub.s32 %s8, 2
    %s27 = sadd.s32 1, %s18
    %p28 = scmp.ge.s32.totalorder %s27, 1
    %s29 = scalar_select %p28, 0, %s27
    %s30 = sadd.s32 1, %s17
    %s31 = scalar_select %p28, %s30, %s17
    %p32 = scmp.ge.s32.totalorder %s31, 9
    %s33 = scalar_select %p32, 0, %s31
    %s34 = sadd.s32 1, %s16
    %s35 = scalar_select %p32, %s34, %s16
    %p36 = scmp.ge.s32.totalorder %s35, 1
    %s37 = scalar_select %p36, 0, %s35
    %s38 = sadd.s32 1, %s15
    %s39 = scalar_select %p36, %s38, %s15
    %p40 = scmp.ge.s32.totalorder %s39, 1
    %s41 = scalar_select %p40, 0, %s39
    %s42 = ssub.s32 %s17, %s33
    %s43 = ssub.s32 %s15, %s41
    %s44 = sor.u32 %s42, %s43
    %s45 = ssub.s32 %s18, %s29
    %s46 = sor.u32 %s44, %s45
    %p47 = scmp.eq.s32.totalorder %s46, 0
    %s49 = sadd.s32 %s48, 1
    %s50 = scalar_select %p47, %s48, %s49
    %p53 = pneg %p47
    %p54 = scmp.eq.s32.totalorder %s8, 8
    %p55 = por %p53, %p54
    %p56 = scmp.ne.s32.totalorder %s48, %s51
    %p57 = scmp.eq.s32.totalorder %s8, 0
    %p58 = por %p56, %p57
    %p59 = scmp.ne.s32.totalorder %s48, %s51
    %p60 = scmp.eq.s32.totalorder %s13, 8
    %p61 = por %p59, %p60
    %p62 = scmp.ne.s32.totalorder %s51, %s52
    %p63 = scmp.eq.s32.totalorder %s13, 0
    %p64 = por %p62, %p63
    %p65 = scmp.ne.s32.totalorder %s51, %s52
    %p66 = scmp.eq.s32.totalorder %s14, 8
    %p67 = por %p65, %p66
    %p69 = scmp.ne.s32.totalorder %s52, %s68
    %p70 = scmp.eq.s32.totalorder %s14, 0
    %p71 = por %p69, %p70
    %s72 = ssub.s32 %s17, %s33
    %s73 = ssub.s32 %s18, %s29
    %s74 = sor.u32 %s72, %s73
    %s75 = ssub.s32 %s16, %s37
    %s76 = sor.u32 %s74, %s75
    %p77 = scmp.eq.s32.totalorder %s76, 0
    %s79 = sadd.s32 %s78, 1
    %s80 = scalar_select %p77, %s78, %s79
    %p83 = pneg %p77
    %p84 = scmp.eq.s32.totalorder %s8, 8
    %p85 = por %p83, %p84
    %p86 = scmp.ne.s32.totalorder %s78, %s81
    %p87 = scmp.eq.s32.totalorder %s8, 0
    %p88 = por %p86, %p87
    %p89 = scmp.ne.s32.totalorder %s78, %s81
    %p90 = scmp.eq.s32.totalorder %s13, 8
    %p91 = por %p89, %p90
    %p92 = scmp.ne.s32.totalorder %s81, %s82
    %p93 = scmp.eq.s32.totalorder %s13, 0
    %p94 = por %p92, %p93
    %p95 = scmp.ne.s32.totalorder %s81, %s82
    %p96 = scmp.eq.s32.totalorder %s14, 8
    %p97 = por %p95, %p96
    %p99 = scmp.ne.s32.totalorder %s82, %s98
    %p100 = scmp.eq.s32.totalorder %s14, 0
    %p101 = por %p99, %p100
    %s102 = ssub.s32 %s15, %s41
    %s103 = ssub.s32 %s16, %s37
    %s104 = sor.u32 %s102, %s103
    %p105 = scmp.eq.s32.totalorder %s104, 0
    %s107 = sadd.s32 %s106, 1
    %s108 = scalar_select %p105, %s106, %s107
    %p111 = pneg %p105
    %p112 = scmp.eq.s32.totalorder %s8, 8
    %p113 = por %p111, %p112
    %p114 = scmp.ne.s32.totalorder %s106, %s109
    %p115 = scmp.eq.s32.totalorder %s8, 0
    %p116 = por %p114, %p115
    %p117 = scmp.ne.s32.totalorder %s106, %s109
    %p118 = scmp.eq.s32.totalorder %s13, 8
    %p119 = por %p117, %p118
    %p120 = scmp.ne.s32.totalorder %s109, %s110
    %p121 = scmp.eq.s32.totalorder %s13, 0
    %p122 = por %p120, %p121
    %p123 = scmp.ne.s32.totalorder %s109, %s110
    %p124 = scmp.eq.s32.totalorder %s14, 8
    %p125 = por %p123, %p124
    %p127 = scmp.ne.s32.totalorder %s110, %s126
    %p128 = scmp.eq.s32.totalorder %s14, 0
    %p129 = por %p127, %p128
    %p130 = scmp.le.s32.totalorder 1, %s8
    %p131 = scmp.lt.s32.totalorder %s8, 10
    %p132 = pnand %p130, %p131
    %p133 = pneg %p132
    // Predicated region
    $region9: #{forward.214} parent=5 // pred_check
      _
    $region10: #{forward.214} parent=5 // pred_check_branch
      %135 = sbr.rel (%p132) target = $region12
    $region11: #{forward.214} parent=5 // pred_region
      %s136 = ssub.s32 %s8, 1
    $region12: #{forward.214} parent=5 // pred_fallthru
      _
    %p137 = scmp.lt.s32.totalorder %s8, 9
    // Predicated region
    $region13: #{forward.214} parent=5 // pred_check
      %p138 = pneg %p137
    $region14: #{forward.214} parent=5 // pred_check_branch
      %140 = sbr.rel (%p138) target = $region16
    $region15: #{forward.214} parent=5 // pred_region
      // Predicated region
      $region17: #{forward.214} parent=15 // pred_check
        %p141 = pneg %p58
      $region18: #{forward.214} parent=15 // pred_check_branch
        %143 = sbr.rel (%p141) target = $region20
      $region19: #{forward.214} parent=15 // pred_region
        %s144 = smul.u32 4, %s15
        %p145 = scmp.lt.s32.totalorder %s17, 8
        %s146 = scalar_select %p145, %s17, 8
        %p147 = scmp.lt.s32.totalorder %s144, 3
        %s148 = scalar_select %p147, %s144, 3
        %p149 = scmp.lt.s32.totalorder %s18, 0
        %s150 = scalar_select %p149, %s18, 0
        %s151 = sadd.s32 %s150, %s148
        %s152 = smul.addr %s146, 4
        %s153 = sadd.s32 %s151, %s152
        %s154 = smul.addr %s153, 4
        %s155 = scalar_lea.vmem %s0, %s154
        %s156 = smul.u32 4, %s15
      $region20: #{forward.214} parent=15 // pred_fallthru
        _
      // Predicated region
      $region21: #{forward.214} parent=15 // pred_check
        %p157 = pneg %p88
      $region22: #{forward.214} parent=15 // pred_check_branch
        %159 = sbr.rel (%p157) target = $region24
      $region23: #{forward.214} parent=15 // pred_region
        %s160 = smul.u32 16, %s18
        %p161 = scmp.lt.s32.totalorder %s17, 8
        %s162 = scalar_select %p161, %s17, 8
        %p163 = scmp.lt.s32.totalorder %s160, 15
        %s164 = scalar_select %p163, %s160, 15
        %p165 = scmp.lt.s32.totalorder %s16, 0
        %s166 = scalar_select %p165, %s16, 0
        %s167 = sadd.s32 %s166, %s164
        %s168 = smul.addr %s162, 16
        %s169 = sadd.s32 %s167, %s168
        %s170 = smul.addr %s169, 4
        %s171 = scalar_lea.vmem %s1, %s170
        %s172 = smul.u32 16, %s18
      $region24: #{forward.214} parent=15 // pred_fallthru
        _
    $region16: #{forward.214} parent=5 // pred_fallthru
      _
    %p173 = scmp.le.s32.totalorder 1, %s8
    %p174 = scmp.lt.s32.totalorder %s8, 10
    %p175 = pnand %p173, %p174
    %p176 = pneg %p175
    // Predicated region
    $region25: #{forward.214} parent=5 // pred_check
      _
    $region26: #{forward.214} parent=5 // pred_check_branch
      %178 = sbr.rel (%p175) target = $region28
    $region27: #{forward.214} parent=5 // pred_region
      %s179 = ssub.s32 %s8, 1
      %s180 = smul.u32 4, %s19
      %p181 = scmp.lt.s32.totalorder %s21, 8
      %s182 = scalar_select %p181, %s21, 8
      %p183 = scmp.lt.s32.totalorder %s180, 3
      %s184 = scalar_select %p183, %s180, 3
      %p185 = scmp.lt.s32.totalorder %s22, 0
      %s186 = scalar_select %p185, %s22, 0
      %s187 = sadd.s32 %s186, %s184
      %s188 = smul.addr %s182, 4
      %s189 = sadd.s32 %s187, %s188
      %s190 = smul.addr %s189, 4
      %s191 = scalar_lea.vmem %s0, %s190
      %p192 = pneg %p64
      %p193 = pneg %p61
      %s194 = smul.u32 16, %s22
      %p195 = scmp.lt.s32.totalorder %s21, 8
      %s196 = scalar_select %p195, %s21, 8
      %p197 = scmp.lt.s32.totalorder %s194, 15
      %s198 = scalar_select %p197, %s194, 15
      %p199 = scmp.lt.s32.totalorder %s20, 0
      %s200 = scalar_select %p199, %s20, 0
      %s201 = sadd.s32 %s200, %s198
      %s202 = smul.addr %s196, 16
      %s203 = sadd.s32 %s201, %s202
      %s204 = smul.addr %s203, 4
      %s205 = scalar_lea.vmem %s1, %s204
      %p206 = pneg %p94
      %p207 = pneg %p91
      %p208 = pneg %p122
      %p209 = pneg %p119
      %s210 = smul.u32 4, %s19
      %p211 = scmp.lt.s32.totalorder %s210, 3
      %s212 = scalar_select %p211, %s210, 3
      %p213 = scmp.lt.s32.totalorder %s20, 0
      %s214 = scalar_select %p213, %s20, 0
      %s215 = sadd.s32 %s214, %s212
      %s216 = smul.addr %s215, 8
      %s217 = scalar_lea.vmem %s2, %s216
      %s218 = smul.u32 4, %s19
      %p219 = scmp.lt.s32.totalorder %s21, 8
      %s220 = scalar_select %p219, %s21, 8
      %p221 = scmp.lt.s32.totalorder %s218, 3
      %s222 = scalar_select %p221, %s218, 3
      %p223 = scmp.lt.s32.totalorder %s22, 0
      %s224 = scalar_select %p223, %s22, 0
      %s225 = sadd.s32 %s224, %s222
      %s226 = smul.addr %s220, 4
      %s227 = sadd.s32 %s225, %s226
      %s228 = smul.addr %s227, 4
      %s229 = scalar_lea.vmem %s0, %s228
      %s230 = smul.u32 4, %s19
      %s231 = smul.u32 16, %s22
      %p232 = scmp.lt.s32.totalorder %s21, 8
      %s233 = scalar_select %p232, %s21, 8
      %p234 = scmp.lt.s32.totalorder %s231, 15
      %s235 = scalar_select %p234, %s231, 15
      %p236 = scmp.lt.s32.totalorder %s20, 0
      %s237 = scalar_select %p236, %s20, 0
      %s238 = sadd.s32 %s237, %s235
      %s239 = smul.addr %s233, 16
      %s240 = sadd.s32 %s238, %s239
      %s241 = smul.addr %s240, 4
      %s242 = scalar_lea.vmem %s1, %s241
      %s243 = smul.u32 16, %s22
      %s244 = smul.u32 4, %s19
      %p245 = scmp.lt.s32.totalorder %s244, 3
      %s246 = scalar_select %p245, %s244, 3
      %p247 = scmp.lt.s32.totalorder %s20, 0
      %s248 = scalar_select %p247, %s20, 0
      %s249 = sadd.s32 %s248, %s246
      %s250 = smul.addr %s249, 8
      %s251 = scalar_lea.vmem %s2, %s250
      %s252 = smul.u32 4, %s19
      %p254 = scmp.eq.s32.totalorder %s21, 0
      %p255 = scmp.eq.s32.totalorder %s22, 0
      %p256 = pnand %p254, %p255
      %p257 = pneg %p256
      // Predicated region
      $region29: #{forward.214} parent=27 // pred_check
        _
      $region30: #{forward.214} parent=27 // pred_check_branch
        %259 = sbr.rel (%p256) target = $region32
      $region31: #{forward.214} parent=27 // pred_region
        %260 = vst [vmem:[#allocation2] sm:$0xff] 0.0
        %261 = vst [vmem:[#allocation2 + $0x8] sm:$0xff] 0.0
        %262 = vst [vmem:[#allocation2 + $0x10] sm:$0xff] 0.0
        %263 = vst [vmem:[#allocation2 + $0x18] sm:$0xff] 0.0
      $region32: #{forward.214} parent=27 // pred_fallthru
        _
      %v264 = vld [vmem:[#allocation2] sm:$0xff]
      %v265 = vld [vmem:[#allocation2 + $0x8] sm:$0xff]
      %v266 = vld [vmem:[#allocation2 + $0x10] sm:$0xff]
      %v267 = vld [vmem:[#allocation2 + $0x18] sm:$0xff]
      %v268 = vld [vmem:[%s229] sm:$0xf]
      %v269 = vld [vmem:[%s229 + $0x4] sm:$0xf]
      %v270 = vld [vmem:[%s229 + $0x8] sm:$0xf]
      %v271 = vld [vmem:[%s229 + $0xc] sm:$0xf]
      %v272 = vld [vmem:[%s242] sm:$0xf]
      %v273 = vld [vmem:[%s242 + $0x4] sm:$0xf]
      %v274 = vld [vmem:[%s242 + $0x8] sm:$0xf]
      %v275 = vld [vmem:[%s242 + $0xc] sm:$0xf]
      %v276 = vld [vmem:[%s242 + $0x10] sm:$0xf]
      %v277 = vld [vmem:[%s242 + $0x14] sm:$0xf]
      %v278 = vld [vmem:[%s242 + $0x18] sm:$0xf]
      %v279 = vld [vmem:[%s242 + $0x1c] sm:$0xf]
      %v280 = vld [vmem:[%s242 + $0x20] sm:$0xf]
      %v281 = vld [vmem:[%s242 + $0x24] sm:$0xf]
      %v282 = vld [vmem:[%s242 + $0x28] sm:$0xf]
      %v283 = vld [vmem:[%s242 + $0x2c] sm:$0xf]
      %v284 = vld [vmem:[%s242 + $0x30] sm:$0xf]
      %v285 = vld [vmem:[%s242 + $0x34] sm:$0xf]
      %v286 = vld [vmem:[%s242 + $0x38] sm:$0xf]
      %v287 = vld [vmem:[%s242 + $0x3c] sm:$0xf]
      %v292 = vunpack.c.l.b16 %v268
      %v293 = vunpack.c.l.b16 %v269
      %v294 = vunpack.c.l.b16 %v270
      %v295 = vunpack.c.l.b16 %v271
      %v296 = vpack.c.b16 %v293, %v292
      %v297 = vpack.c.b16 %v295, %v294
      %v316 = vunpack.c.l.b16 %v272
      %v317 = vunpack.c.l.b16 %v273
      %v318 = vunpack.c.l.b16 %v274
      %v319 = vunpack.c.l.b16 %v275
      %v320 = vunpack.c.l.b16 %v276
      %v321 = vunpack.c.l.b16 %v277
      %v322 = vunpack.c.l.b16 %v278
      %v323 = vunpack.c.l.b16 %v279
      %v324 = vunpack.c.l.b16 %v280
      %v325 = vunpack.c.l.b16 %v281
      %v326 = vunpack.c.l.b16 %v282
      %v327 = vunpack.c.l.b16 %v283
      %v328 = vunpack.c.l.b16 %v284
      %v329 = vunpack.c.l.b16 %v285
      %v330 = vunpack.c.l.b16 %v286
      %v331 = vunpack.c.l.b16 %v287
      %v332 = vpack.c.b16 %v317, %v316
      %v333 = vpack.c.b16 %v319, %v318
      %v334 = vpack.c.b16 %v321, %v320
      %v335 = vpack.c.b16 %v323, %v322
      %v336 = vpack.c.b16 %v325, %v324
      %v337 = vpack.c.b16 %v327, %v326
      %v338 = vpack.c.b16 %v329, %v328
      %v339 = vpack.c.b16 %v331, %v330
      %348 = vmatprep.subr.bf16.mxu0 0
      %349 = vmatpush1.bf16.msra.mxu0 %v332
      %350 = vmatprep.subr.bf16.mxu0 0
      %351 = vmatpush1.bf16.msra.mxu0 %v333
      %352 = vmatprep.subr.bf16.mxu0 0
      %353 = vmatpush1.bf16.msra.mxu0 %v334
      %354 = vmatprep.subr.bf16.mxu0 0
      %355 = vmatpush1.bf16.msra.mxu0 %v335
      %356 = vmatprep.subr.bf16.mxu0 0
      %357 = vmatpush1.bf16.msra.mxu0 %v336
      %358 = vmatprep.subr.bf16.mxu0 0
      %359 = vmatpush1.bf16.msra.mxu0 %v337
      %360 = vmatprep.subr.bf16.mxu0 0
      %361 = vmatpush1.bf16.msra.mxu0 %v338
      %362 = vmatprep.subr.bf16.mxu0 0
      %363 = vmatpush1.bf16.msra.mxu0 %v339
      %364 = vmatprep.subr.bf16.mxu0 0
      %365 = vmatpush1.bf16.msra.mxu0 0
      %366 = vmatprep.subr.bf16.mxu0 0
      %367 = vmatpush1.bf16.msra.mxu0 0
      %368 = vmatprep.subr.bf16.mxu0 0
      %369 = vmatpush1.bf16.msra.mxu0 0
      %370 = vmatprep.subr.bf16.mxu0 0
      %371 = vmatpush1.bf16.msra.mxu0 0
      %372 = vmatprep.subr.bf16.mxu0 0
      %373 = vmatpush1.bf16.msra.mxu0 0
      %374 = vmatprep.subr.bf16.mxu0 0
      %375 = vmatpush1.bf16.msra.mxu0 0
      %376 = vmatprep.subr.bf16.mxu0 0
      %377 = vmatpush1.bf16.msra.mxu0 0
      %378 = vmatprep.subr.bf16.mxu0 0
      %379 = vmatpush1.bf16.msra.mxu0 0
      %380 = vmatprep.mubr.bf16.mxu0 0
      %381 = vmatmul.mubr.bf16.gmra.mrb[0].mxu0 %v296
      %v382 = vpop.f32.mrb[0].mxu0
      %v383 = vadd.f32 0.0, %v382
      %v384 = vpop.f32.mrb[0].mxu0
      %v385 = vpop.f32.mrb[0].mxu0
      %v386 = vadd.f32 0.0, %v385
      %v387 = vpop.f32.mrb[0].mxu0
      %388 = vmatprep.mubr.bf16.mxu0 0
      %389 = vmatmul.mubr.bf16.gmra.mrb[0].mxu0 %v297
      %v390 = vpop.f32.mrb[0].mxu0
      %v391 = vadd.f32 0.0, %v390
      %v392 = vpop.f32.mrb[0].mxu0
      %v393 = vpop.f32.mrb[0].mxu0
      %v394 = vadd.f32 0.0, %v393
      %v395 = vpop.f32.mrb[0].mxu0
      %396 = vdwg.mxu0
      %v397 = vadd.f32 %v264, %v383
      %v398 = vadd.f32 %v265, %v386
      %v399 = vadd.f32 %v266, %v391
      %v400 = vadd.f32 %v267, %v394
      %401 = vst [vmem:[#allocation2] sm:$0xff] %v397
      %402 = vst [vmem:[#allocation2 + $0x8] sm:$0xff] %v398
      %403 = vst [vmem:[#allocation2 + $0x10] sm:$0xff] %v399
      %404 = vst [vmem:[#allocation2 + $0x18] sm:$0xff] %v400
      %p405 = scmp.eq.s32.totalorder %s21, 8
      %p406 = pnand %p405, %p255
      %p407 = pneg %p406
      // Predicated region
      $region33: #{forward.214} parent=27 // pred_check
        _
      $region34: #{forward.214} parent=27 // pred_check_branch
        %409 = sbr.rel (%p406) target = $region36
      $region35: #{forward.214} parent=27 // pred_region
        %v410 = vld [vmem:[#allocation2] sm:$0xff]
        %v411 = vld [vmem:[#allocation2 + $0x8] sm:$0xff]
        %v412 = vld [vmem:[#allocation2 + $0x10] sm:$0xff]
        %v413 = vld [vmem:[#allocation2 + $0x18] sm:$0xff]
        %414 = vst [vmem:[%s251] sm:$0xff] %v410
        %415 = vst [vmem:[%s251 + $0x8] sm:$0xff] %v411
        %416 = vst [vmem:[%s251 + $0x10] sm:$0xff] %v412
        %417 = vst [vmem:[%s251 + $0x18] sm:$0xff] %v413
      $region36: #{forward.214} parent=27 // pred_fallthru
        _
      %s418 = smul.u32 4, %s19
      %p419 = scmp.lt.s32.totalorder %s418, 3
      %s420 = scalar_select %p419, %s418, 3
      %p421 = scmp.lt.s32.totalorder %s20, 0
      %s422 = scalar_select %p421, %s20, 0
      %s423 = sadd.s32 %s422, %s420
      %s424 = smul.addr %s423, 8
      %s425 = scalar_lea.vmem %s2, %s424
      // Predicated region
      $region37: #{forward.214} parent=27 // pred_check
        %p426 = pneg %p119
      $region38: #{forward.214} parent=27 // pred_check_branch
        %428 = sbr.rel (%p426) target = $region40
      $region39: #{forward.214} parent=27 // pred_region
        %s429 = smul.u32 4, %s19
      $region40: #{forward.214} parent=27 // pred_fallthru
        _
      // Predicated region
      $region41: #{forward.214} parent=27 // pred_check
        %p430 = pneg %p119
      $region42: #{forward.214} parent=27 // pred_check_branch
        %432 = sbr.rel (%p430) target = $region44
      $region43: #{forward.214} parent=27 // pred_region
        %s433 = smul.u32 4, %s19
        %p434 = scmp.lt.s32.totalorder %s433, 3
        %s435 = scalar_select %p434, %s433, 3
        %p436 = scmp.lt.s32.totalorder %s20, 0
        %s437 = scalar_select %p436, %s20, 0
        %s438 = sadd.s32 %s437, %s435
        %s439 = smul.addr %s438, 8
        %s440 = scalar_lea.vmem %s2, %s439
      $region44: #{forward.214} parent=27 // pred_fallthru
        _
    $region28: #{forward.214} parent=5 // pred_fallthru
      _
    %p441 = scmp.le.s32.totalorder 2, %s8
    // Predicated region
    $region45: #{forward.214} parent=5 // pred_check
      %p442 = pneg %p441
    $region46: #{forward.214} parent=5 // pred_check_branch
      %444 = sbr.rel (%p442) target = $region48
    $region47: #{forward.214} parent=5 // pred_region
      %s445 = ssub.s32 %s8, 2
    $region48: #{forward.214} parent=5 // pred_fallthru
      _
  $region6: #{forward.214} parent=0 // loop_footer
    %s12 = sadd.s32 1, %s8
  $region7: #{forward.214} parent=0 // loop_footer_branch
    %7 = sbr.rel target = $region3
  $region8: #{forward.214} parent=0 // loop_exit
    _

// kernel: forward.340
$region0: #{forward.340}
  #allocation0 [shape = 'u32[]', space=smem, size = 0x4, offset = 0x4, fixed_abs, tag = 'smem constant byte address 0x4 - core index']
  #allocation1 [shape = 'u32[144,128]{1,0:T(1,128)}', space=vmem, size = 0x12000, scoped, tag = 'internal scratch']
  #allocation2 [shape = 'f32[16,128]{1,0:T(8,128)}', space=vmem, size = 0x2000, scoped, tag = 'scratch operand']
  %s0 = inlined_call_operand.vmem [shape: bf16[1,16,128], index: 0, kind: input, shape index: {}]
  %s1 = inlined_call_operand.vmem [shape: bf16[1,128,128], index: 1, kind: input, shape index: {}]
  %s2 = inlined_call_operand.vmem [shape: f32[16,128], index: 2, kind: output, shape index: {}]
  %s3 = sld [smem:[#allocation0]]
  $region26: #{forward.340} parent=0
    _
  %s5 = ssub.s32 1, %s3
  %s6 = scalar_select 0, %s5, %s3
  // Predicated region
  $region2: #{forward.340} parent=0 // pred_check
    _
  $region3: #{forward.340} parent=0 // pred_check_branch
    %8 = sbr.rel (0) target = $region5
  $region4: #{forward.340} parent=0 // pred_region
    _
  $region5: #{forward.340} parent=0 // pred_fallthru
    _
  // Predicated region
  $region6: #{forward.340} parent=0 // pred_check
    _
  $region7: #{forward.340} parent=0 // pred_check_branch
    %10 = sbr.rel (0) target = $region9
  $region8: #{forward.340} parent=0 // pred_region
    _
  $region9: #{forward.340} parent=0 // pred_fallthru
    _
  %p12 = scmp.eq.s32.totalorder 0, 0
  %p13 = scmp.eq.s32.totalorder 0, 0
  %p14 = pnand %p12, %p13
  %p15 = pneg %p14
  // Predicated region
  $region10: #{forward.340} parent=0 // pred_check
    _
  $region11: #{forward.340} parent=0 // pred_check_branch
    %17 = sbr.rel (%p14) target = $region13
  $region12: #{forward.340} parent=0 // pred_region
    %18 = vst [vmem:[#allocation2] sm:$0xff] 0.0
    %19 = vst [vmem:[#allocation2 + $0x8] sm:$0xff] 0.0
  $region13: #{forward.340} parent=0 // pred_fallthru
    _
  %v20 = vld [vmem:[#allocation2] sm:$0xff]
  %v21 = vld [vmem:[#allocation2 + $0x8] sm:$0xff]
  %v22 = vld [vmem:[%s0] sm:$0xf]
  %v23 = vld [vmem:[%s0 + $0x4] sm:$0xf]
  %v24 = vld [vmem:[%s1] sm:$0xf]
  %v25 = vld [vmem:[%s1 + $0x4] sm:$0xf]
  %v26 = vld [vmem:[%s1 + $0x8] sm:$0xf]
  %v27 = vld [vmem:[%s1 + $0xc] sm:$0xf]
  %v28 = vld [vmem:[%s1 + $0x10] sm:$0xf]
  %v29 = vld [vmem:[%s1 + $0x14] sm:$0xf]
  %v30 = vld [vmem:[%s1 + $0x18] sm:$0xf]
  %v31 = vld [vmem:[%s1 + $0x1c] sm:$0xf]
  %v32 = vld [vmem:[%s1 + $0x20] sm:$0xf]
  %v33 = vld [vmem:[%s1 + $0x24] sm:$0xf]
  %v34 = vld [vmem:[%s1 + $0x28] sm:$0xf]
  %v35 = vld [vmem:[%s1 + $0x2c] sm:$0xf]
  %v36 = vld [vmem:[%s1 + $0x30] sm:$0xf]
  %v37 = vld [vmem:[%s1 + $0x34] sm:$0xf]
  %v38 = vld [vmem:[%s1 + $0x38] sm:$0xf]
  %v39 = vld [vmem:[%s1 + $0x3c] sm:$0xf]
  %v42 = vunpack.c.l.b16 %v22
  %v43 = vunpack.c.l.b16 %v23
  %v44 = vpack.c.b16 %v43, %v42
  %v62 = vunpack.c.l.b16 %v24
  %v63 = vunpack.c.l.b16 %v25
  %v64 = vunpack.c.l.b16 %v26
  %v65 = vunpack.c.l.b16 %v27
  %v66 = vunpack.c.l.b16 %v28
  %v67 = vunpack.c.l.b16 %v29
  %v68 = vunpack.c.l.b16 %v30
  %v69 = vunpack.c.l.b16 %v31
  %v70 = vunpack.c.l.b16 %v32
  %v71 = vunpack.c.l.b16 %v33
  %v72 = vunpack.c.l.b16 %v34
  %v73 = vunpack.c.l.b16 %v35
  %v74 = vunpack.c.l.b16 %v36
  %v75 = vunpack.c.l.b16 %v37
  %v76 = vunpack.c.l.b16 %v38
  %v77 = vunpack.c.l.b16 %v39
  %v78 = vpack.c.b16 %v63, %v62
  %v79 = vpack.c.b16 %v65, %v64
  %v80 = vpack.c.b16 %v67, %v66
  %v81 = vpack.c.b16 %v69, %v68
  %v82 = vpack.c.b16 %v71, %v70
  %v83 = vpack.c.b16 %v73, %v72
  %v84 = vpack.c.b16 %v75, %v74
  %v85 = vpack.c.b16 %v77, %v76
  %94 = vmatprep.subr.bf16.mxu0 0
  %95 = vmatpush1.bf16.msra.mxu0 %v78
  %96 = vmatprep.subr.bf16.mxu0 0
  %97 = vmatpush1.bf16.msra.mxu0 %v79
  %98 = vmatprep.subr.bf16.mxu0 0
  %99 = vmatpush1.bf16.msra.mxu0 %v80
  %100 = vmatprep.subr.bf16.mxu0 0
  %101 = vmatpush1.bf16.msra.mxu0 %v81
  %102 = vmatprep.subr.bf16.mxu0 0
  %103 = vmatpush1.bf16.msra.mxu0 %v82
  %104 = vmatprep.subr.bf16.mxu0 0
  %105 = vmatpush1.bf16.msra.mxu0 %v83
  %106 = vmatprep.subr.bf16.mxu0 0
  %107 = vmatpush1.bf16.msra.mxu0 %v84
  %108 = vmatprep.subr.bf16.mxu0 0
  %109 = vmatpush1.bf16.msra.mxu0 %v85
  %110 = vmatprep.subr.bf16.mxu0 0
  %111 = vmatpush1.bf16.msra.mxu0 0
  %112 = vmatprep.subr.bf16.mxu0 0
  %113 = vmatpush1.bf16.msra.mxu0 0
  %114 = vmatprep.subr.bf16.mxu0 0
  %115 = vmatpush1.bf16.msra.mxu0 0
  %116 = vmatprep.subr.bf16.mxu0 0
  %117 = vmatpush1.bf16.msra.mxu0 0
  %118 = vmatprep.subr.bf16.mxu0 0
  %119 = vmatpush1.bf16.msra.mxu0 0
  %120 = vmatprep.subr.bf16.mxu0 0
  %121 = vmatpush1.bf16.msra.mxu0 0
  %122 = vmatprep.subr.bf16.mxu0 0
  %123 = vmatpush1.bf16.msra.mxu0 0
  %124 = vmatprep.subr.bf16.mxu0 0
  %125 = vmatpush1.bf16.msra.mxu0 0
  %126 = vmatprep.mubr.bf16.mxu0 0
  %127 = vmatmul.mubr.bf16.gmra.mrb[0].mxu0 %v44
  %v128 = vpop.f32.mrb[0].mxu0
  %v129 = vadd.f32 0.0, %v128
  %v130 = vpop.f32.mrb[0].mxu0
  %v131 = vpop.f32.mrb[0].mxu0
  %v132 = vadd.f32 0.0, %v131
  %v133 = vpop.f32.mrb[0].mxu0
  %134 = vdwg.mxu0
  %v135 = vadd.f32 %v20, %v129
  %v136 = vadd.f32 %v21, %v132
  %137 = vst [vmem:[#allocation2] sm:$0xff] %v135
  %138 = vst [vmem:[#allocation2 + $0x8] sm:$0xff] %v136
  // Predicated region
  $region14: #{forward.340} parent=0 // pred_check
    _
  $region15: #{forward.340} parent=0 // pred_check_branch
    %140 = sbr.rel (%p14) target = $region17
  $region16: #{forward.340} parent=0 // pred_region
    %v141 = vld [vmem:[#allocation2] sm:$0xff]
    %v142 = vld [vmem:[#allocation2 + $0x8] sm:$0xff]
    %143 = vst [vmem:[%s2] sm:$0xff] %v141
    %144 = vst [vmem:[%s2 + $0x8] sm:$0xff] %v142
  $region17: #{forward.340} parent=0 // pred_fallthru
    _
  // Predicated region
  $region18: #{forward.340} parent=0 // pred_check
    _
  $region19: #{forward.340} parent=0 // pred_check_branch
    %146 = sbr.rel (0) target = $region21
  $region20: #{forward.340} parent=0 // pred_region
    _
  $region21: #{forward.340} parent=0 // pred_fallthru
    _
  // Predicated region
  $region22: #{forward.340} parent=0 // pred_check
    _
  $region23: #{forward.340} parent=0 // pred_check_branch
    %148 = sbr.rel (0) target = $region25
  $region24: #{forward.340} parent=0 // pred_region
    _
  $region25: #{forward.340} parent=0 // pred_fallthru
    _

// kernel: forward.341
$region0: #{forward.341}
  #allocation0 [shape = 'u32[]', space=smem, size = 0x4, offset = 0x4, fixed_abs, tag = 'smem constant byte address 0x4 - core index']
  #allocation1 [shape = 'u32[144,128]{1,0:T(1,128)}', space=vmem, size = 0x12000, scoped, tag = 'internal scratch']
  %s0 = inlined_call_operand.vmem [shape: f32[8,128], index: 0, kind: input, shape index: {}]
  %s1 = inlined_call_operand.vmem [shape: f32[1,128], index: 1, kind: input, shape index: {}]
  %s2 = inlined_call_operand.vmem [shape: f32[1,128], index: 2, kind: input, shape index: {}]
  %s3 = inlined_call_operand.vmem [shape: f32[8,128], index: 3, kind: output, shape index: {}]
  %s4 = sld [smem:[#allocation0]]
  $region22: #{forward.341} parent=0
    _
  %s6 = ssub.s32 1, %s4
  %s7 = scalar_select 0, %s6, %s4
  // Predicated region
  $region2: #{forward.341} parent=0 // pred_check
    _
  $region3: #{forward.341} parent=0 // pred_check_branch
    %9 = sbr.rel (0) target = $region5
  $region4: #{forward.341} parent=0 // pred_region
    _
  $region5: #{forward.341} parent=0 // pred_fallthru
    _
  // Predicated region
  $region6: #{forward.341} parent=0 // pred_check
    _
  $region7: #{forward.341} parent=0 // pred_check_branch
    %11 = sbr.rel (0) target = $region9
  $region8: #{forward.341} parent=0 // pred_region
    _
  $region9: #{forward.341} parent=0 // pred_fallthru
    _
  // Predicated region
  $region10: #{forward.341} parent=0 // pred_check
    _
  $region11: #{forward.341} parent=0 // pred_check_branch
    %13 = sbr.rel (0) target = $region13
  $region12: #{forward.341} parent=0 // pred_region
    _
  $region13: #{forward.341} parent=0 // pred_fallthru
    _
  %v14 = vld [vmem:[%s0] sm:$0xff]
  %v15 = vld [vmem:[%s1] sm:$0x1]
  %v17 = vlaneseq
  %v18 = vshrl.u32 %v17, 7
  %v19 = vsub.s32 0, %v18
  %v20 = vrot.slane %v15, %v19
  %v22 = vmul.f32 %v14, %v20
  %v23 = vld [vmem:[%s2] sm:$0x1]
  %v25 = vlaneseq
  %v26 = vshrl.u32 %v25, 7
  %v27 = vsub.s32 0, %v26
  %v28 = vrot.slane %v23, %v27
  %v30 = vadd.f32 %v22, %v28
  %31 = vst [vmem:[%s3] sm:$0xff] %v30
  // Predicated region
  $region14: #{forward.341} parent=0 // pred_check
    _
  $region15: #{forward.341} parent=0 // pred_check_branch
    %33 = sbr.rel (0) target = $region17
  $region16: #{forward.341} parent=0 // pred_region
    _
  $region17: #{forward.341} parent=0 // pred_fallthru
    _
  // Predicated region
  $region18: #{forward.341} parent=0 // pred_check
    _
  $region19: #{forward.341} parent=0 // pred_check_branch
    %35 = sbr.rel (0) target = $region21
  $region20: #{forward.341} parent=0 // pred_region
    _
  $region21: #{forward.341} parent=0 // pred_fallthru
    _

// kernel: forward.307
$region0: #{forward.307}
  #allocation0 [shape = 'u32[]', space=smem, size = 0x4, offset = 0x4, fixed_abs, tag = 'smem constant byte address 0x4 - core index']
  #allocation1 [shape = 'u32[144,128]{1,0:T(1,128)}', space=vmem, size = 0x12000, scoped, tag = 'internal scratch']
  %s0 = inlined_call_operand.vmem [shape: f32[9,8,128], index: 0, kind: input, shape index: {}]
  %s1 = inlined_call_operand.vmem [shape: f32[9,1,128], index: 1, kind: input, shape index: {}]
  %s2 = inlined_call_operand.vmem [shape: f32[8,128], index: 2, kind: output, shape index: {}]
  %s3 = sld [smem:[#allocation0]]
  $region18: #{forward.307} parent=0
    _
  %s5 = ssub.s32 1, %s3
  %s6 = scalar_select 0, %s5, %s3
  // Predicated region
  $region2: #{forward.307} parent=0 // pred_check
    _
  $region3: #{forward.307} parent=0 // pred_check_branch
    %8 = sbr.rel (0) target = $region5
  $region4: #{forward.307} parent=0 // pred_region
    _
  $region5: #{forward.307} parent=0 // pred_fallthru
    _
  // Predicated region
  $region6: #{forward.307} parent=0 // pred_check
    _
  $region7: #{forward.307} parent=0 // pred_check_branch
    %10 = sbr.rel (0) target = $region9
  $region8: #{forward.307} parent=0 // pred_region
    _
  $region9: #{forward.307} parent=0 // pred_fallthru
    _
  %v11 = vld [vmem:[%s0] sm:$0xff]
  %v12 = vld [vmem:[%s1] sm:$0x1]
  %v14 = vlaneseq
  %v15 = vshrl.u32 %v14, 7
  %v16 = vsub.s32 0, %v15
  %v17 = vrot.slane %v12, %v16
  %v19 = vmul.f32 %v11, %v17
  %s20 = scalar_lea.vmem %s0, 8
  %v21 = vld [vmem:[%s20] sm:$0xff]
  %s22 = scalar_lea.vmem %s1, 1
  %v23 = vld [vmem:[%s22] sm:$0x1]
  %v25 = vlaneseq
  %v26 = vshrl.u32 %v25, 7
  %v27 = vsub.s32 0, %v26
  %v28 = vrot.slane %v23, %v27
  %v30 = vmul.f32 %v21, %v28
  %v31 = vadd.f32 %v19, %v30
  %s32 = scalar_lea.vmem %s0, 16
  %v33 = vld [vmem:[%s32] sm:$0xff]
  %s34 = scalar_lea.vmem %s1, 2
  %v35 = vld [vmem:[%s34] sm:$0x1]
  %v37 = vlaneseq
  %v38 = vshrl.u32 %v37, 7
  %v39 = vsub.s32 0, %v38
  %v40 = vrot.slane %v35, %v39
  %v42 = vmul.f32 %v33, %v40
  %v43 = vadd.f32 %v31, %v42
  %s44 = scalar_lea.vmem %s0, 24
  %v45 = vld [vmem:[%s44] sm:$0xff]
  %s46 = scalar_lea.vmem %s1, 3
  %v47 = vld [vmem:[%s46] sm:$0x1]
  %v49 = vlaneseq
  %v50 = vshrl.u32 %v49, 7
  %v51 = vsub.s32 0, %v50
  %v52 = vrot.slane %v47, %v51
  %v54 = vmul.f32 %v45, %v52
  %v55 = vadd.f32 %v43, %v54
  %s56 = scalar_lea.vmem %s0, 32
  %v57 = vld [vmem:[%s56] sm:$0xff]
  %s58 = scalar_lea.vmem %s1, 4
  %v59 = vld [vmem:[%s58] sm:$0x1]
  %v61 = vlaneseq
  %v62 = vshrl.u32 %v61, 7
  %v63 = vsub.s32 0, %v62
  %v64 = vrot.slane %v59, %v63
  %v66 = vmul.f32 %v57, %v64
  %v67 = vadd.f32 %v55, %v66
  %s68 = scalar_lea.vmem %s0, 40
  %v69 = vld [vmem:[%s68] sm:$0xff]
  %s70 = scalar_lea.vmem %s1, 5
  %v71 = vld [vmem:[%s70] sm:$0x1]
  %v73 = vlaneseq
  %v74 = vshrl.u32 %v73, 7
  %v75 = vsub.s32 0, %v74
  %v76 = vrot.slane %v71, %v75
  %v78 = vmul.f32 %v69, %v76
  %v79 = vadd.f32 %v67, %v78
  %s80 = scalar_lea.vmem %s0, 48
  %v81 = vld [vmem:[%s80] sm:$0xff]
  %s82 = scalar_lea.vmem %s1, 6
  %v83 = vld [vmem:[%s82] sm:$0x1]
  %v85 = vlaneseq
  %v86 = vshrl.u32 %v85, 7
  %v87 = vsub.s32 0, %v86
  %v88 = vrot.slane %v83, %v87
  %v90 = vmul.f32 %v81, %v88
  %v91 = vadd.f32 %v79, %v90
  %s92 = scalar_lea.vmem %s0, 56
  %v93 = vld [vmem:[%s92] sm:$0xff]
  %s94 = scalar_lea.vmem %s1, 7
  %v95 = vld [vmem:[%s94] sm:$0x1]
  %v97 = vlaneseq
  %v98 = vshrl.u32 %v97, 7
  %v99 = vsub.s32 0, %v98
  %v100 = vrot.slane %v95, %v99
  %v102 = vmul.f32 %v93, %v100
  %v103 = vadd.f32 %v91, %v102
  %s104 = scalar_lea.vmem %s0, 64
  %v105 = vld [vmem:[%s104] sm:$0xff]
  %s106 = scalar_lea.vmem %s1, 8
  %v107 = vld [vmem:[%s106] sm:$0x1]
  %v109 = vlaneseq
  %v110 = vshrl.u32 %v109, 7
  %v111 = vsub.s32 0, %v110
  %v112 = vrot.slane %v107, %v111
  %v114 = vmul.f32 %v105, %v112
  %v115 = vadd.f32 %v103, %v114
  %116 = vst [vmem:[%s2] sm:$0xff] %v115
  // Predicated region
  $region10: #{forward.307} parent=0 // pred_check
    _
  $region11: #{forward.307} parent=0 // pred_check_branch
    %118 = sbr.rel (0) target = $region13
  $region12: #{forward.307} parent=0 // pred_region
    _
  $region13: #{forward.307} parent=0 // pred_fallthru
    _
  // Predicated region
  $region14: #{forward.307} parent=0 // pred_check
    _
  $region15: #{forward.307} parent=0 // pred_check_branch
    %120 = sbr.rel (0) target = $region17
  $region16: #{forward.307} parent=0 // pred_region
    _
  $region17: #{forward.307} parent=0 // pred_fallthru
    _

// kernel: forward.309
$region0: #{forward.309}
  #allocation0 [shape = 'u32[]', space=smem, size = 0x4, offset = 0x4, fixed_abs, tag = 'smem constant byte address 0x4 - core index']
  #allocation1 [shape = 'u32[144,128]{1,0:T(1,128)}', space=vmem, size = 0x12000, scoped, tag = 'internal scratch']
  %s0 = inlined_call_operand.vmem [shape: f32[8,128], index: 0, kind: input, shape index: {}]
  %s1 = inlined_call_operand.vmem [shape: f32[1,128], index: 1, kind: input, shape index: {}]
  %s2 = inlined_call_operand.vmem [shape: f32[1,128], index: 2, kind: input, shape index: {}]
  %s3 = inlined_call_operand.vmem [shape: f32[8,128], index: 3, kind: output, shape index: {}]
  %s4 = sld [smem:[#allocation0]]
  $region22: #{forward.309} parent=0
    _
  %s6 = ssub.s32 1, %s4
  %s7 = scalar_select 0, %s6, %s4
  // Predicated region
  $region2: #{forward.309} parent=0 // pred_check
    _
  $region3: #{forward.309} parent=0 // pred_check_branch
    %9 = sbr.rel (0) target = $region5
  $region4: #{forward.309} parent=0 // pred_region
    _
  $region5: #{forward.309} parent=0 // pred_fallthru
    _
  // Predicated region
  $region6: #{forward.309} parent=0 // pred_check
    _
  $region7: #{forward.309} parent=0 // pred_check_branch
    %11 = sbr.rel (0) target = $region9
  $region8: #{forward.309} parent=0 // pred_region
    _
  $region9: #{forward.309} parent=0 // pred_fallthru
    _
  // Predicated region
  $region10: #{forward.309} parent=0 // pred_check
    _
  $region11: #{forward.309} parent=0 // pred_check_branch
    %13 = sbr.rel (0) target = $region13
  $region12: #{forward.309} parent=0 // pred_region
    _
  $region13: #{forward.309} parent=0 // pred_fallthru
    _
  %v14 = vld [vmem:[%s0] sm:$0xff]
  %v15 = vld [vmem:[%s1] sm:$0x1]
  %v17 = vlaneseq
  %v18 = vshrl.u32 %v17, 7
  %v19 = vsub.s32 0, %v18
  %v20 = vrot.slane %v15, %v19
  %v22 = vmul.f32 %v14, %v20
  %v23 = vld [vmem:[%s2] sm:$0x1]
  %v25 = vlaneseq
  %v26 = vshrl.u32 %v25, 7
  %v27 = vsub.s32 0, %v26
  %v28 = vrot.slane %v23, %v27
  %v30 = vadd.f32 %v22, %v28
  %v31 = vmax.f32 %v30, 0.0
  %32 = vst [vmem:[%s3] sm:$0xff] %v31
  // Predicated region
  $region14: #{forward.309} parent=0 // pred_check
    _
  $region15: #{forward.309} parent=0 // pred_check_branch
    %34 = sbr.rel (0) target = $region17
  $region16: #{forward.309} parent=0 // pred_region
    _
  $region17: #{forward.309} parent=0 // pred_fallthru
    _
  // Predicated region
  $region18: #{forward.309} parent=0 // pred_check
    _
  $region19: #{forward.309} parent=0 // pred_check_branch
    %36 = sbr.rel (0) target = $region21
  $region20: #{forward.309} parent=0 // pred_region
    _
  $region21: #{forward.309} parent=0 // pred_fallthru
    _

// kernel: forward.280
$region0: #{forward.280}
  #allocation0 [shape = 'u32[]', space=smem, size = 0x4, offset = 0x4, fixed_abs, tag = 'smem constant byte address 0x4 - core index']
  #allocation1 [shape = 'u32[144,128]{1,0:T(1,128)}', space=vmem, size = 0x12000, scoped, tag = 'internal scratch']
  %s0 = inlined_call_operand.vmem [shape: f32[9,8,128], index: 0, kind: input, shape index: {}]
  %s1 = inlined_call_operand.vmem [shape: f32[8,128], index: 1, kind: output, shape index: {}]
  %s2 = sld [smem:[#allocation0]]
  $region14: #{forward.280} parent=0
    _
  %s4 = ssub.s32 1, %s2
  %s5 = scalar_select 0, %s4, %s2
  // Predicated region
  $region2: #{forward.280} parent=0 // pred_check
    _
  $region3: #{forward.280} parent=0 // pred_check_branch
    %7 = sbr.rel (0) target = $region5
  $region4: #{forward.280} parent=0 // pred_region
    _
  $region5: #{forward.280} parent=0 // pred_fallthru
    _
  %v8 = vld [vmem:[%s0] sm:$0xff]
  %s9 = scalar_lea.vmem %s0, 8
  %v10 = vld [vmem:[%s9] sm:$0xff]
  %v11 = vadd.f32 %v8, %v10
  %s12 = scalar_lea.vmem %s0, 16
  %v13 = vld [vmem:[%s12] sm:$0xff]
  %v14 = vadd.f32 %v11, %v13
  %s15 = scalar_lea.vmem %s0, 24
  %v16 = vld [vmem:[%s15] sm:$0xff]
  %v17 = vadd.f32 %v14, %v16
  %s18 = scalar_lea.vmem %s0, 32
  %v19 = vld [vmem:[%s18] sm:$0xff]
  %v20 = vadd.f32 %v17, %v19
  %s21 = scalar_lea.vmem %s0, 40
  %v22 = vld [vmem:[%s21] sm:$0xff]
  %v23 = vadd.f32 %v20, %v22
  %s24 = scalar_lea.vmem %s0, 48
  %v25 = vld [vmem:[%s24] sm:$0xff]
  %v26 = vadd.f32 %v23, %v25
  %s27 = scalar_lea.vmem %s0, 56
  %v28 = vld [vmem:[%s27] sm:$0xff]
  %v29 = vadd.f32 %v26, %v28
  %s30 = scalar_lea.vmem %s0, 64
  %v31 = vld [vmem:[%s30] sm:$0xff]
  %v32 = vadd.f32 %v29, %v31
  %33 = vst [vmem:[%s1] sm:$0xff] %v32
  // Predicated region
  $region6: #{forward.280} parent=0 // pred_check
    _
  $region7: #{forward.280} parent=0 // pred_check_branch
    %35 = sbr.rel (0) target = $region9
  $region8: #{forward.280} parent=0 // pred_region
    _
  $region9: #{forward.280} parent=0 // pred_fallthru
    _
  // Predicated region
  $region10: #{forward.280} parent=0 // pred_check
    _
  $region11: #{forward.280} parent=0 // pred_check_branch
    %37 = sbr.rel (0) target = $region13
  $region12: #{forward.280} parent=0 // pred_region
    _
  $region13: #{forward.280} parent=0 // pred_fallthru
    _

// kernel: forward.279
$region0: #{forward.279}
  #allocation0 [shape = 'u32[]', space=smem, size = 0x4, offset = 0x4, fixed_abs, tag = 'smem constant byte address 0x4 - core index']
  #allocation1 [shape = 'u32[144,128]{1,0:T(1,128)}', space=vmem, size = 0x12000, scoped, tag = 'internal scratch']
  %s0 = inlined_call_operand.vmem [shape: f32[9,8,128], index: 0, kind: input, shape index: {}]
  %s1 = inlined_call_operand.vmem [shape: f32[8,128], index: 1, kind: output, shape index: {}]
  %s2 = sld [smem:[#allocation0]]
  $region14: #{forward.279} parent=0
    _
  %s4 = ssub.s32 1, %s2
  %s5 = scalar_select 0, %s4, %s2
  // Predicated region
  $region2: #{forward.279} parent=0 // pred_check
    _
  $region3: #{forward.279} parent=0 // pred_check_branch
    %7 = sbr.rel (0) target = $region5
  $region4: #{forward.279} parent=0 // pred_region
    _
  $region5: #{forward.279} parent=0 // pred_fallthru
    _
  %v8 = vld [vmem:[%s0] sm:$0xff]
  %s9 = scalar_lea.vmem %s0, 8
  %v10 = vld [vmem:[%s9] sm:$0xff]
  %v11 = vmax.f32 %v8, %v10
  %s12 = scalar_lea.vmem %s0, 16
  %v13 = vld [vmem:[%s12] sm:$0xff]
  %v14 = vmax.f32 %v11, %v13
  %s15 = scalar_lea.vmem %s0, 24
  %v16 = vld [vmem:[%s15] sm:$0xff]
  %v17 = vmax.f32 %v14, %v16
  %s18 = scalar_lea.vmem %s0, 32
  %v19 = vld [vmem:[%s18] sm:$0xff]
  %v20 = vmax.f32 %v17, %v19
  %s21 = scalar_lea.vmem %s0, 40
  %v22 = vld [vmem:[%s21] sm:$0xff]
  %v23 = vmax.f32 %v20, %v22
  %s24 = scalar_lea.vmem %s0, 48
  %v25 = vld [vmem:[%s24] sm:$0xff]
  %v26 = vmax.f32 %v23, %v25
  %s27 = scalar_lea.vmem %s0, 56
  %v28 = vld [vmem:[%s27] sm:$0xff]
  %v29 = vmax.f32 %v26, %v28
  %s30 = scalar_lea.vmem %s0, 64
  %v31 = vld [vmem:[%s30] sm:$0xff]
  %v32 = vmax.f32 %v29, %v31
  %33 = vst [vmem:[%s1] sm:$0xff] %v32
  // Predicated region
  $region6: #{forward.279} parent=0 // pred_check
    _
  $region7: #{forward.279} parent=0 // pred_check_branch
    %35 = sbr.rel (0) target = $region9
  $region8: #{forward.279} parent=0 // pred_region
    _
  $region9: #{forward.279} parent=0 // pred_fallthru
    _
  // Predicated region
  $region10: #{forward.279} parent=0 // pred_check
    _
  $region11: #{forward.279} parent=0 // pred_check_branch
    %37 = sbr.rel (0) target = $region13
  $region12: #{forward.279} parent=0 // pred_region
    _
  $region13: #{forward.279} parent=0 // pred_fallthru
    _

</llo_original>
